<compile_context>
chip_gen: v5e
topology: v5e:2x2
jax: 0.10.0
libtpu: 0.0.40
codegen_flags: <defaults>
</compile_context>

<pallas_src>
import math
import numpy as np
import jax
import jax.numpy as jnp
from jax.experimental import pallas as pl
from jax.experimental.pallas import tpu as pltpu


def compute_cc_quadrature(nb_steps):
    """Clenshaw-Curtis weights & nodes, numerically identical to UMNN's compute_cc_weights."""
    lam = np.arange(0, nb_steps + 1, 1).reshape(-1, 1)
    lam = np.cos((lam @ lam.T) * math.pi / nb_steps)
    lam[:, 0] = .5
    lam[:, -1] = .5 * lam[:, -1]
    lam = lam * 2 / nb_steps
    W = np.arange(0, nb_steps + 1, 1).reshape(-1, 1)
    W[np.arange(1, nb_steps + 1, 2)] = 0
    W = 2 / (1 - W ** 2)
    W[0] = 1
    W[np.arange(1, nb_steps + 1, 2)] = 0
    cc_weights = (lam.T @ W).astype(np.float32)                                    # (S, 1)
    steps = np.cos(np.arange(0, nb_steps + 1, 1).reshape(-1, 1)
                   * math.pi / nb_steps).astype(np.float32)                        # (S, 1)
    return cc_weights, steps


def init_linear(key, fan_in, fan_out):
    """Deterministic PyTorch-style Linear init (uniform +- 1/sqrt(fan_in))."""
    k_w, k_b = jax.random.split(key)
    bound = 1.0 / math.sqrt(fan_in)
    w = jax.random.uniform(k_w, (fan_in, fan_out), jnp.float32, -bound, bound)
    b = jax.random.uniform(k_b, (1, fan_out), jnp.float32, -bound, bound)
    return w, b


def _round_up(a, m):
    return ((a + m - 1) // m) * m


def make_monotonic_kernel(TB, H1, H2, K, steps_half, ccw_half, matmul_dtype):
    """Kernel body: one batch tile of TB rows (batch along lanes), quadrature unrolled."""
    S = len(steps_half)
    cdt = matmul_dtype

    def kernel(x_ref, h_ref,
               wA_ref, w1x_ref, ib1_ref, nb1_ref,
               iw2_ref, ib2_ref, iw3_ref, ib3_ref,
               nw2_ref, nb2_ref, nw3_ref, nb3_ref,
               out_ref):
        x_row = x_ref[...]                      # (1, TB)  monotonic variable
        h = h_ref[...]                          # (Dh, TB) conditioning variables

        # ---- fused first layers: [cond W1 ; integrand W1 (h-columns)] @ h ------
        z0 = jnp.dot(wA_ref[...], h.astype(cdt),
                     preferred_element_type=jnp.float32)                 # (2*H1, TB)
        z1 = jnp.maximum(z0[:H1, :] + nb1_ref[...], 0.0)                 # (H1, TB)
        hpart = z0[H1:, :] + ib1_ref[...]                                # (H1, TB)

        # ---- conditioning net: fused offset/scaling head ------------------------
        z2 = jnp.maximum(
            jnp.dot(nw2_ref[...], z1.astype(cdt),
                    preferred_element_type=jnp.float32) + nb2_ref[...], 0.0)
        o = jnp.dot(nw3_ref[...], z2.astype(cdt),
                    preferred_element_type=jnp.float32) + nb3_ref[...]   # (2K, TB)
        offset = o[:K, :]
        scaling = jnp.exp(o[K:, :])

        # ---- Clenshaw-Curtis quadrature of ELU(MLP(cat(x_s, h))) + 1 ------------
        # integral = (sum_s ccw_half[s] * f_s) * x  (0.5*(xT-x0) folded into ccw_half)
        xw = w1x_ref[...] * x_row                                        # (H1, TB)
        ib2_b = jnp.broadcast_to(ib2_ref[...], (H2, TB))  # hoisted lane-broadcasts
        ib3_b = jnp.broadcast_to(ib3_ref[...], (K, TB))
        iw2 = iw2_ref[...]                                # (H2, H1), matmul dtype
        iw3 = iw3_ref[...]                                # (K,  H2), matmul dtype

        acc = jnp.zeros((K, TB), jnp.float32)
        for s in range(S):                                # unrolled; constants baked
            a1 = jnp.maximum(steps_half[s] * xw + hpart, 0.0)            # (H1, TB)
            a2 = jnp.maximum(
                jnp.dot(iw2, a1.astype(cdt),
                        preferred_element_type=jnp.float32) + ib2_b, 0.0)  # (H2, TB)
            a3 = jnp.dot(iw3, a2.astype(cdt),
                         preferred_element_type=jnp.float32) + ib3_b       # (K, TB)
            f = jnp.where(a3 > 0.0, a3, jnp.exp(a3) - 1.0) + 1.0           # ELU + 1
            acc = acc + ccw_half[s] * f

        out_ref[...] = scaling * (acc * x_row) + offset                    # (K, TB)

    return kernel


def monotonic_nn_forward(x, h, params, nb_steps, n_out, *,
                         tile_b=256, matmul_dtype=jnp.bfloat16):
    """Forward pass of MonotonicNN(in_d, [H1, H2], nb_steps, n_out) with Pallas."""
    (iw1, ib1, iw2, ib2, iw3, ib3, nw1, nb1, nw2, nb2, nw3, nb3) = params
    B = x.shape[0]
    Dh = h.shape[1]
    H1 = iw1.shape[1]
    H2 = iw2.shape[1]
    K = n_out
    S = nb_steps + 1
    assert iw1.shape[0] == Dh + 1 and iw3.shape[1] == K and nw3.shape[1] == 2 * K
    assert nw1.shape[1] == H1 and nw2.shape[1] == H2

    # Quadrature constants, folded host-side and baked into the kernel.
    ccw_np, steps_np = compute_cc_quadrature(nb_steps)
    steps_half = [float(v) for v in ((steps_np + 1.0) * 0.5).reshape(-1)]
    ccw_half = [float(v) for v in (ccw_np * 0.5).reshape(-1)]

    cdt = matmul_dtype
    f32 = jnp.float32
    # Host-side weight prep: transpose to feature-major, fuse layers, pre-cast MXU
    # operands to the matmul dtype; biases / rank-1 x-column stay f32.
    wA = jnp.concatenate([nw1.T, iw1[1:, :].T], axis=0).astype(cdt)    # (2*H1, Dh)
    w1x = iw1[0:1, :].T.astype(f32)                                    # (H1, 1)
    ib1c = ib1.T.astype(f32)                                           # (H1, 1)
    nb1c = nb1.T.astype(f32)                                           # (H1, 1)
    iw2t = iw2.T.astype(cdt)                                           # (H2, H1)
    ib2c = ib2.T.astype(f32)                                           # (H2, 1)
    iw3t = iw3.T.astype(cdt)                                           # (K, H2)
    ib3c = ib3.T.astype(f32)                                           # (K, 1)
    nw2t = nw2.T.astype(cdt)                                           # (H2, H1)
    nb2c = nb2.T.astype(f32)                                           # (H2, 1)
    nw3t = nw3.T.astype(cdt)                                           # (2K, H2)
    nb3c = nb3.T.astype(f32)                                           # (2K, 1)
    weights = (wA, w1x, ib1c, nb1c, iw2t, ib2c, iw3t, ib3c, nw2t, nb2c, nw3t, nb3c)

    # Batch-tile size: multiple of 128 (it is the lane axis); for B > 256 ensure at
    # least two tiles so the "parallel" grid axis can feed both v7x TensorCores.
    TB = max(128, min(tile_b, _round_up(B, 128)))
    if B > 256 and -(-B // TB) < 2:
        TB = _round_up(-(-B // 2), 128)
    num_tiles = -(-B // TB)
    B_pad = num_tiles * TB

    # Batch-in-lanes inputs: (1, B) / (Dh, B). Padded lanes are zeros (stay finite
    # through exp/ELU, no cross-lane reductions) and are sliced off on return.
    x_t = x.T.astype(f32)
    h_t = h.T.astype(f32)
    if B_pad != B:
        x_t = jnp.pad(x_t, ((0, 0), (0, B_pad - B)))
        h_t = jnp.pad(h_t, ((0, 0), (0, B_pad - B)))

    kernel = make_monotonic_kernel(TB, H1, H2, K, steps_half, ccw_half, matmul_dtype)

    # Advisory cost estimate for XLA's scheduler.
    flops = B_pad * (2 * Dh * 2 * H1 + 2 * H1 * H2 + 2 * H2 * 2 * K + 2 * H1 + 4 * K
                     + S * (2 * H1 * H2 + 2 * H2 * K + 4 * H1 + 2 * H2 + 6 * K))
    transcendentals = B_pad * (S * K + K)
    bytes_accessed = 4 * (x_t.size + h_t.size + B_pad * K) + sum(
        int(np.prod(w.shape)) * w.dtype.itemsize for w in weights)

    out = pl.pallas_call(
        kernel,
        out_shape=jax.ShapeDtypeStruct((K, B_pad), jnp.float32),
        grid=(num_tiles,),
        in_specs=[
            pl.BlockSpec((1, TB), lambda t: (0, t)),             # x tile (lanes = batch)
            pl.BlockSpec((Dh, TB), lambda t: (0, t)),            # h tile
        ] + [pl.BlockSpec(w.shape, lambda t: (0, 0)) for w in weights],
        out_specs=pl.BlockSpec((K, TB), lambda t: (0, t)),       # lane-dense store
        compiler_params=pltpu.CompilerParams(
            dimension_semantics=("parallel",)),
        cost_estimate=pl.CostEstimate(flops=int(flops),
                                      transcendentals=int(transcendentals),
                                      bytes_accessed=int(bytes_accessed)),
    )(x_t, h_t, *weights)
    return out[:, :B].T                                          # (B, K)


def reference_forward(x, h, params, ccw, steps, n_out, matmul_dtype=jnp.float32):
    """Pure-JAX reference mirroring the PyTorch MonotonicNN.forward."""
    (iw1, ib1, iw2, ib2, iw3, ib3, nw1, nb1, nw2, nb2, nw3, nb3) = params
    cdt = matmul_dtype

    def mm(a, b):
        return jnp.dot(a.astype(cdt), b.astype(cdt), preferred_element_type=jnp.float32)

    z = jnp.maximum(mm(h, nw1) + nb1, 0.0)
    z = jnp.maximum(mm(z, nw2) + nb2, 0.0)
    o = mm(z, nw3) + nb3
    offset = o[:, :n_out]
    scaling = jnp.exp(o[:, n_out:])

    B = x.shape[0]
    S = steps.shape[0]
    xs = x[:, None, :] * (steps[None, :, :] + 1.0) * 0.5          # (B, S, 1)
    hh = jnp.broadcast_to(h[:, None, :], (B, S, h.shape[1]))      # (B, S, Dh)
    inp = jnp.concatenate([xs, hh], axis=-1).reshape(B * S, -1)
    a = jnp.maximum(mm(inp, iw1) + ib1, 0.0)
    a = jnp.maximum(mm(a, iw2) + ib2, 0.0)
    a = mm(a, iw3) + ib3
    f = jnp.where(a > 0.0, a, jnp.exp(a) - 1.0) + 1.0
    f = f.reshape(B, S, n_out)
    z_est = jnp.sum(f * ccw[None, :, :], axis=1)                  # (B, n_out)
    integral = z_est * x * 0.5
    return scaling * integral + offset


if __name__ == "__main__":
    # Shapes consistent with MonotonicNN(in_d=4, hidden_layers=[32, 32], nb_steps=32, n_out=1)
    B, in_d, H1, H2, n_out, nb_steps = 8, 4, 32, 32, 1, 32
    Dh = in_d - 1

    key = jax.random.PRNGKey(0)
    keys = jax.random.split(key, 8)

    # integrand net:  in_d -> H1 -> H2 -> n_out   (ReLU, ReLU, ELU; +1 in forward)
    iw1, ib1 = init_linear(keys[0], in_d, H1)
    iw2, ib2 = init_linear(keys[1], H1, H2)
    iw3, ib3 = init_linear(keys[2], H2, n_out)
    # conditioning net:  (in_d - 1) -> H1 -> H2 -> 2*n_out   (ReLU, ReLU, linear)
    nw1, nb1 = init_linear(keys[3], Dh, H1)
    nw2, nb2 = init_linear(keys[4], H1, H2)
    nw3, nb3 = init_linear(keys[5], H2, 2 * n_out)
    params = (iw1, ib1, iw2, ib2, iw3, ib3, nw1, nb1, nw2, nb2, nw3, nb3)

    x = jax.random.normal(keys[6], (B, 1), jnp.float32)
    h = jax.random.normal(keys[7], (B, Dh), jnp.float32)

    ccw_np, steps_np = compute_cc_quadrature(nb_steps)
    ccw = jnp.asarray(ccw_np)
    steps = jnp.asarray(steps_np)

    # --- exact-precision path (f32 MXU operands): tight check vs reference -------
    out_f32 = monotonic_nn_forward(x, h, params, nb_steps, n_out,
                                   tile_b=256, matmul_dtype=jnp.float32)
    out_f32 = jax.block_until_ready(out_f32)
    ref_f32 = reference_forward(x, h, params, ccw, steps, n_out, jnp.float32)
    assert out_f32.shape == (B, n_out)
    assert jnp.allclose(out_f32, ref_f32, rtol=1e-4, atol=1e-4), (out_f32, ref_f32)

    # --- production path (bf16 MXU operands, f32 accumulate/elementwise) ---------
    out_bf16 = monotonic_nn_forward(x, h, params, nb_steps, n_out,
                                    tile_b=256, matmul_dtype=jnp.bfloat16)
    out_bf16 = jax.block_until_ready(out_bf16)
    ref_bf16 = reference_forward(x, h, params, ccw, steps, n_out, jnp.bfloat16)
    assert jnp.allclose(out_bf16, ref_bf16, rtol=5e-2, atol=5e-2), (out_bf16, ref_bf16)

    print("KERNEL_OK")
</pallas_src>

<mosaic_0001>
module attributes {stable_mosaic.version = 11 : i64} {
  func.func @kernel(%arg0: i32, %arg1: memref<1x128xf32, #tpu.memory_space<vmem>>, %arg2: memref<3x128xf32, #tpu.memory_space<vmem>>, %arg3: memref<64x3xf32, #tpu.memory_space<vmem>>, %arg4: memref<32x1xf32, #tpu.memory_space<vmem>>, %arg5: memref<32x1xf32, #tpu.memory_space<vmem>>, %arg6: memref<32x1xf32, #tpu.memory_space<vmem>>, %arg7: memref<32x32xf32, #tpu.memory_space<vmem>>, %arg8: memref<32x1xf32, #tpu.memory_space<vmem>>, %arg9: memref<1x32xf32, #tpu.memory_space<vmem>>, %arg10: memref<1x1xf32, #tpu.memory_space<vmem>>, %arg11: memref<32x32xf32, #tpu.memory_space<vmem>>, %arg12: memref<32x1xf32, #tpu.memory_space<vmem>>, %arg13: memref<2x32xf32, #tpu.memory_space<vmem>>, %arg14: memref<2x1xf32, #tpu.memory_space<vmem>>, %arg15: memref<1x128xf32, #tpu.memory_space<vmem>>) attributes {dimension_semantics = [#tpu.dimension_semantics<parallel>], iteration_bounds = array<i64: 1>, scalar_prefetch = 0 : i64, scratch_operands = 0 : i64, tpu.core_type = #tpu.core_type<tc>, window_params = [{transform_indices = @transform_0, window_bounds = array<i64: 1, 128>}, {transform_indices = @transform_1, window_bounds = array<i64: 3, 128>}, {pipeline_mode = #tpu.pipeline_mode<synchronous>, transform_indices = @transform_2, window_bounds = array<i64: 64, 3>}, {pipeline_mode = #tpu.pipeline_mode<synchronous>, transform_indices = @transform_3, window_bounds = array<i64: 32, 1>}, {pipeline_mode = #tpu.pipeline_mode<synchronous>, transform_indices = @transform_4, window_bounds = array<i64: 32, 1>}, {pipeline_mode = #tpu.pipeline_mode<synchronous>, transform_indices = @transform_5, window_bounds = array<i64: 32, 1>}, {pipeline_mode = #tpu.pipeline_mode<synchronous>, transform_indices = @transform_6, window_bounds = array<i64: 32, 32>}, {pipeline_mode = #tpu.pipeline_mode<synchronous>, transform_indices = @transform_7, window_bounds = array<i64: 32, 1>}, {pipeline_mode = #tpu.pipeline_mode<synchronous>, transform_indices = @transform_8, window_bounds = array<i64: 1, 32>}, {pipeline_mode = #tpu.pipeline_mode<synchronous>, transform_indices = @transform_9, window_bounds = array<i64: 1, 1>}, {pipeline_mode = #tpu.pipeline_mode<synchronous>, transform_indices = @transform_10, window_bounds = array<i64: 32, 32>}, {pipeline_mode = #tpu.pipeline_mode<synchronous>, transform_indices = @transform_11, window_bounds = array<i64: 32, 1>}, {pipeline_mode = #tpu.pipeline_mode<synchronous>, transform_indices = @transform_12, window_bounds = array<i64: 2, 32>}, {pipeline_mode = #tpu.pipeline_mode<synchronous>, transform_indices = @transform_13, window_bounds = array<i64: 2, 1>}, {transform_indices = @transform_14, window_bounds = array<i64: 1, 128>}]} {
    %c0 = arith.constant 0 : index
    %c0_0 = arith.constant 0 : index
    %0 = vector.load %arg1[%c0, %c0_0] : memref<1x128xf32, #tpu.memory_space<vmem>>, vector<1x128xf32>
    %c0_1 = arith.constant 0 : index
    %c0_2 = arith.constant 0 : index
    %1 = vector.load %arg2[%c0_1, %c0_2] : memref<3x128xf32, #tpu.memory_space<vmem>>, vector<3x128xf32>
    %c0_3 = arith.constant 0 : index
    %c0_4 = arith.constant 0 : index
    %2 = vector.load %arg3[%c0_3, %c0_4] : memref<64x3xf32, #tpu.memory_space<vmem>>, vector<64x3xf32>
    %cst = arith.constant dense<0.000000e+00> : vector<64x128xf32>
    %3 = tpu.matmul %2, %1, %cst {dimension_numbers = #tpu.dot_dimension_numbers<[1], [0], [0], [1], [0, 0, 1, 1], [], []>} : vector<64x3xf32>, vector<3x128xf32>, vector<64x128xf32> -> vector<64x128xf32>
    %4 = vector.extract_strided_slice %3 {offsets = [0, 0], sizes = [32, 128], strides = [1, 1]} : vector<64x128xf32> to vector<32x128xf32>
    %c0_5 = arith.constant 0 : index
    %c0_6 = arith.constant 0 : index
    %5 = vector.load %arg6[%c0_5, %c0_6] : memref<32x1xf32, #tpu.memory_space<vmem>>, vector<32x1xf32>
    %6 = vector.broadcast %5 : vector<32x1xf32> to vector<32x128xf32>
    %7 = arith.addf %4, %6 : vector<32x128xf32>
    %cst_7 = arith.constant 0.000000e+00 : f32
    %8 = vector.broadcast %cst_7 : f32 to vector<32x128xf32>
    %9 = arith.maximumf %7, %8 : vector<32x128xf32>
    %10 = vector.extract_strided_slice %3 {offsets = [32, 0], sizes = [32, 128], strides = [1, 1]} : vector<64x128xf32> to vector<32x128xf32>
    %c0_8 = arith.constant 0 : index
    %c0_9 = arith.constant 0 : index
    %11 = vector.load %arg5[%c0_8, %c0_9] : memref<32x1xf32, #tpu.memory_space<vmem>>, vector<32x1xf32>
    %12 = vector.broadcast %11 : vector<32x1xf32> to vector<32x128xf32>
    %13 = arith.addf %10, %12 : vector<32x128xf32>
    %c0_10 = arith.constant 0 : index
    %c0_11 = arith.constant 0 : index
    %14 = vector.load %arg11[%c0_10, %c0_11] : memref<32x32xf32, #tpu.memory_space<vmem>>, vector<32x32xf32>
    %cst_12 = arith.constant dense<0.000000e+00> : vector<32x128xf32>
    %15 = tpu.matmul %14, %9, %cst_12 {dimension_numbers = #tpu.dot_dimension_numbers<[1], [0], [0], [1], [0, 0, 1, 1], [], []>} : vector<32x32xf32>, vector<32x128xf32>, vector<32x128xf32> -> vector<32x128xf32>
    %c0_13 = arith.constant 0 : index
    %c0_14 = arith.constant 0 : index
    %16 = vector.load %arg12[%c0_13, %c0_14] : memref<32x1xf32, #tpu.memory_space<vmem>>, vector<32x1xf32>
    %17 = vector.broadcast %16 : vector<32x1xf32> to vector<32x128xf32>
    %18 = arith.addf %15, %17 : vector<32x128xf32>
    %cst_15 = arith.constant 0.000000e+00 : f32
    %19 = vector.broadcast %cst_15 : f32 to vector<32x128xf32>
    %20 = arith.maximumf %18, %19 : vector<32x128xf32>
    %c0_16 = arith.constant 0 : index
    %c0_17 = arith.constant 0 : index
    %21 = vector.load %arg13[%c0_16, %c0_17] : memref<2x32xf32, #tpu.memory_space<vmem>>, vector<2x32xf32>
    %cst_18 = arith.constant dense<0.000000e+00> : vector<2x128xf32>
    %22 = tpu.matmul %21, %20, %cst_18 {dimension_numbers = #tpu.dot_dimension_numbers<[1], [0], [0], [1], [0, 0, 1, 1], [], []>} : vector<2x32xf32>, vector<32x128xf32>, vector<2x128xf32> -> vector<2x128xf32>
    %c0_19 = arith.constant 0 : index
    %c0_20 = arith.constant 0 : index
    %23 = vector.load %arg14[%c0_19, %c0_20] : memref<2x1xf32, #tpu.memory_space<vmem>>, vector<2x1xf32>
    %24 = vector.broadcast %23 : vector<2x1xf32> to vector<2x128xf32>
    %25 = arith.addf %22, %24 : vector<2x128xf32>
    %26 = vector.extract_strided_slice %25 {offsets = [0, 0], sizes = [1, 128], strides = [1, 1]} : vector<2x128xf32> to vector<1x128xf32>
    %27 = vector.extract_strided_slice %25 {offsets = [1, 0], sizes = [1, 128], strides = [1, 1]} : vector<2x128xf32> to vector<1x128xf32>
    %28 = math.exp %27 : vector<1x128xf32>
    %c0_21 = arith.constant 0 : index
    %c0_22 = arith.constant 0 : index
    %29 = vector.load %arg4[%c0_21, %c0_22] : memref<32x1xf32, #tpu.memory_space<vmem>>, vector<32x1xf32>
    %30 = vector.broadcast %29 : vector<32x1xf32> to vector<32x128xf32>
    %31 = vector.broadcast %0 : vector<1x128xf32> to vector<32x128xf32>
    %32 = arith.mulf %30, %31 : vector<32x128xf32>
    %c0_23 = arith.constant 0 : index
    %c0_24 = arith.constant 0 : index
    %33 = vector.load %arg8[%c0_23, %c0_24] : memref<32x1xf32, #tpu.memory_space<vmem>>, vector<32x1xf32>
    %34 = vector.shape_cast %33 : vector<32x1xf32> to vector<32x1xf32>
    %35 = vector.broadcast %34 : vector<32x1xf32> to vector<32x128xf32>
    %c0_25 = arith.constant 0 : index
    %c0_26 = arith.constant 0 : index
    %36 = vector.load %arg10[%c0_25, %c0_26] : memref<1x1xf32, #tpu.memory_space<vmem>>, vector<1x1xf32>
    %37 = vector.shape_cast %36 : vector<1x1xf32> to vector<1x1xf32>
    %38 = vector.broadcast %37 : vector<1x1xf32> to vector<1x128xf32>
    %c0_27 = arith.constant 0 : index
    %c0_28 = arith.constant 0 : index
    %39 = vector.load %arg7[%c0_27, %c0_28] : memref<32x32xf32, #tpu.memory_space<vmem>>, vector<32x32xf32>
    %c0_29 = arith.constant 0 : index
    %c0_30 = arith.constant 0 : index
    %40 = vector.load %arg9[%c0_29, %c0_30] : memref<1x32xf32, #tpu.memory_space<vmem>>, vector<1x32xf32>
    %cst_31 = arith.constant 0.000000e+00 : f32
    %41 = vector.broadcast %cst_31 : f32 to vector<1x128xf32>
    %cst_32 = arith.constant 1.000000e+00 : f32
    %42 = vector.broadcast %cst_32 : f32 to vector<32x128xf32>
    %43 = arith.mulf %42, %32 : vector<32x128xf32>
    %44 = arith.addf %43, %13 : vector<32x128xf32>
    %cst_33 = arith.constant 0.000000e+00 : f32
    %45 = vector.broadcast %cst_33 : f32 to vector<32x128xf32>
    %46 = arith.maximumf %44, %45 : vector<32x128xf32>
    %cst_34 = arith.constant dense<0.000000e+00> : vector<32x128xf32>
    %47 = tpu.matmul %39, %46, %cst_34 {dimension_numbers = #tpu.dot_dimension_numbers<[1], [0], [0], [1], [0, 0, 1, 1], [], []>} : vector<32x32xf32>, vector<32x128xf32>, vector<32x128xf32> -> vector<32x128xf32>
    %48 = arith.addf %47, %35 : vector<32x128xf32>
    %cst_35 = arith.constant 0.000000e+00 : f32
    %49 = vector.broadcast %cst_35 : f32 to vector<32x128xf32>
    %50 = arith.maximumf %48, %49 : vector<32x128xf32>
    %cst_36 = arith.constant dense<0.000000e+00> : vector<1x128xf32>
    %51 = tpu.matmul %40, %50, %cst_36 {dimension_numbers = #tpu.dot_dimension_numbers<[1], [0], [0], [1], [0, 0, 1, 1], [], []>} : vector<1x32xf32>, vector<32x128xf32>, vector<1x128xf32> -> vector<1x128xf32>
    %52 = arith.addf %51, %38 : vector<1x128xf32>
    %cst_37 = arith.constant 0.000000e+00 : f32
    %53 = vector.broadcast %cst_37 : f32 to vector<1x128xf32>
    %54 = arith.cmpf ogt, %52, %53 : vector<1x128xf32>
    %55 = math.exp %52 : vector<1x128xf32>
    %cst_38 = arith.constant 1.000000e+00 : f32
    %56 = vector.broadcast %cst_38 : f32 to vector<1x128xf32>
    %57 = arith.subf %55, %56 : vector<1x128xf32>
    %58 = arith.select %54, %52, %57 : vector<1x128xi1>, vector<1x128xf32>
    %cst_39 = arith.constant 1.000000e+00 : f32
    %59 = vector.broadcast %cst_39 : f32 to vector<1x128xf32>
    %60 = arith.addf %58, %59 : vector<1x128xf32>
    %cst_40 = arith.constant 4.73484863E-4 : f32
    %61 = vector.broadcast %cst_40 : f32 to vector<1x128xf32>
    %62 = arith.mulf %61, %60 : vector<1x128xf32>
    %63 = arith.addf %41, %62 : vector<1x128xf32>
    %cst_41 = arith.constant 0.997592329 : f32
    %64 = vector.broadcast %cst_41 : f32 to vector<32x128xf32>
    %65 = arith.mulf %64, %32 : vector<32x128xf32>
    %66 = arith.addf %65, %13 : vector<32x128xf32>
    %cst_42 = arith.constant 0.000000e+00 : f32
    %67 = vector.broadcast %cst_42 : f32 to vector<32x128xf32>
    %68 = arith.maximumf %66, %67 : vector<32x128xf32>
    %cst_43 = arith.constant dense<0.000000e+00> : vector<32x128xf32>
    %69 = tpu.matmul %39, %68, %cst_43 {dimension_numbers = #tpu.dot_dimension_numbers<[1], [0], [0], [1], [0, 0, 1, 1], [], []>} : vector<32x32xf32>, vector<32x128xf32>, vector<32x128xf32> -> vector<32x128xf32>
    %70 = arith.addf %69, %35 : vector<32x128xf32>
    %cst_44 = arith.constant 0.000000e+00 : f32
    %71 = vector.broadcast %cst_44 : f32 to vector<32x128xf32>
    %72 = arith.maximumf %70, %71 : vector<32x128xf32>
    %cst_45 = arith.constant dense<0.000000e+00> : vector<1x128xf32>
    %73 = tpu.matmul %40, %72, %cst_45 {dimension_numbers = #tpu.dot_dimension_numbers<[1], [0], [0], [1], [0, 0, 1, 1], [], []>} : vector<1x32xf32>, vector<32x128xf32>, vector<1x128xf32> -> vector<1x128xf32>
    %74 = arith.addf %73, %38 : vector<1x128xf32>
    %cst_46 = arith.constant 0.000000e+00 : f32
    %75 = vector.broadcast %cst_46 : f32 to vector<1x128xf32>
    %76 = arith.cmpf ogt, %74, %75 : vector<1x128xf32>
    %77 = math.exp %74 : vector<1x128xf32>
    %cst_47 = arith.constant 1.000000e+00 : f32
    %78 = vector.broadcast %cst_47 : f32 to vector<1x128xf32>
    %79 = arith.subf %77, %78 : vector<1x128xf32>
    %80 = arith.select %76, %74, %79 : vector<1x128xi1>, vector<1x128xf32>
    %cst_48 = arith.constant 1.000000e+00 : f32
    %81 = vector.broadcast %cst_48 : f32 to vector<1x128xf32>
    %82 = arith.addf %80, %81 : vector<1x128xf32>
    %cst_49 = arith.constant 0.00472714659 : f32
    %83 = vector.broadcast %cst_49 : f32 to vector<1x128xf32>
    %84 = arith.mulf %83, %82 : vector<1x128xf32>
    %85 = arith.addf %63, %84 : vector<1x128xf32>
    %cst_50 = arith.constant 0.990392625 : f32
    %86 = vector.broadcast %cst_50 : f32 to vector<32x128xf32>
    %87 = arith.mulf %86, %32 : vector<32x128xf32>
    %88 = arith.addf %87, %13 : vector<32x128xf32>
    %cst_51 = arith.constant 0.000000e+00 : f32
    %89 = vector.broadcast %cst_51 : f32 to vector<32x128xf32>
    %90 = arith.maximumf %88, %89 : vector<32x128xf32>
    %cst_52 = arith.constant dense<0.000000e+00> : vector<32x128xf32>
    %91 = tpu.matmul %39, %90, %cst_52 {dimension_numbers = #tpu.dot_dimension_numbers<[1], [0], [0], [1], [0, 0, 1, 1], [], []>} : vector<32x32xf32>, vector<32x128xf32>, vector<32x128xf32> -> vector<32x128xf32>
    %92 = arith.addf %91, %35 : vector<32x128xf32>
    %cst_53 = arith.constant 0.000000e+00 : f32
    %93 = vector.broadcast %cst_53 : f32 to vector<32x128xf32>
    %94 = arith.maximumf %92, %93 : vector<32x128xf32>
    %cst_54 = arith.constant dense<0.000000e+00> : vector<1x128xf32>
    %95 = tpu.matmul %40, %94, %cst_54 {dimension_numbers = #tpu.dot_dimension_numbers<[1], [0], [0], [1], [0, 0, 1, 1], [], []>} : vector<1x32xf32>, vector<32x128xf32>, vector<1x128xf32> -> vector<1x128xf32>
    %96 = arith.addf %95, %38 : vector<1x128xf32>
    %cst_55 = arith.constant 0.000000e+00 : f32
    %97 = vector.broadcast %cst_55 : f32 to vector<1x128xf32>
    %98 = arith.cmpf ogt, %96, %97 : vector<1x128xf32>
    %99 = math.exp %96 : vector<1x128xf32>
    %cst_56 = arith.constant 1.000000e+00 : f32
    %100 = vector.broadcast %cst_56 : f32 to vector<1x128xf32>
    %101 = arith.subf %99, %100 : vector<1x128xf32>
    %102 = arith.select %98, %96, %101 : vector<1x128xi1>, vector<1x128xf32>
    %cst_57 = arith.constant 1.000000e+00 : f32
    %103 = vector.broadcast %cst_57 : f32 to vector<1x128xf32>
    %104 = arith.addf %102, %103 : vector<1x128xf32>
    %cst_58 = arith.constant 0.00958657544 : f32
    %105 = vector.broadcast %cst_58 : f32 to vector<1x128xf32>
    %106 = arith.mulf %105, %104 : vector<1x128xf32>
    %107 = arith.addf %85, %106 : vector<1x128xf32>
    %cst_59 = arith.constant 0.978470206 : f32
    %108 = vector.broadcast %cst_59 : f32 to vector<32x128xf32>
    %109 = arith.mulf %108, %32 : vector<32x128xf32>
    %110 = arith.addf %109, %13 : vector<32x128xf32>
    %cst_60 = arith.constant 0.000000e+00 : f32
    %111 = vector.broadcast %cst_60 : f32 to vector<32x128xf32>
    %112 = arith.maximumf %110, %111 : vector<32x128xf32>
    %cst_61 = arith.constant dense<0.000000e+00> : vector<32x128xf32>
    %113 = tpu.matmul %39, %112, %cst_61 {dimension_numbers = #tpu.dot_dimension_numbers<[1], [0], [0], [1], [0, 0, 1, 1], [], []>} : vector<32x32xf32>, vector<32x128xf32>, vector<32x128xf32> -> vector<32x128xf32>
    %114 = arith.addf %113, %35 : vector<32x128xf32>
    %cst_62 = arith.constant 0.000000e+00 : f32
    %115 = vector.broadcast %cst_62 : f32 to vector<32x128xf32>
    %116 = arith.maximumf %114, %115 : vector<32x128xf32>
    %cst_63 = arith.constant dense<0.000000e+00> : vector<1x128xf32>
    %117 = tpu.matmul %40, %116, %cst_63 {dimension_numbers = #tpu.dot_dimension_numbers<[1], [0], [0], [1], [0, 0, 1, 1], [], []>} : vector<1x32xf32>, vector<32x128xf32>, vector<1x128xf32> -> vector<1x128xf32>
    %118 = arith.addf %117, %38 : vector<1x128xf32>
    %cst_64 = arith.constant 0.000000e+00 : f32
    %119 = vector.broadcast %cst_64 : f32 to vector<1x128xf32>
    %120 = arith.cmpf ogt, %118, %119 : vector<1x128xf32>
    %121 = math.exp %118 : vector<1x128xf32>
    %cst_65 = arith.constant 1.000000e+00 : f32
    %122 = vector.broadcast %cst_65 : f32 to vector<1x128xf32>
    %123 = arith.subf %121, %122 : vector<1x128xf32>
    %124 = arith.select %120, %118, %123 : vector<1x128xi1>, vector<1x128xf32>
    %cst_66 = arith.constant 1.000000e+00 : f32
    %125 = vector.broadcast %cst_66 : f32 to vector<1x128xf32>
    %126 = arith.addf %124, %125 : vector<1x128xf32>
    %cst_67 = arith.constant 0.014259506 : f32
    %127 = vector.broadcast %cst_67 : f32 to vector<1x128xf32>
    %128 = arith.mulf %127, %126 : vector<1x128xf32>
    %129 = arith.addf %107, %128 : vector<1x128xf32>
    %cst_68 = arith.constant 0.961939752 : f32
    %130 = vector.broadcast %cst_68 : f32 to vector<32x128xf32>
    %131 = arith.mulf %130, %32 : vector<32x128xf32>
    %132 = arith.addf %131, %13 : vector<32x128xf32>
    %cst_69 = arith.constant 0.000000e+00 : f32
    %133 = vector.broadcast %cst_69 : f32 to vector<32x128xf32>
    %134 = arith.maximumf %132, %133 : vector<32x128xf32>
    %cst_70 = arith.constant dense<0.000000e+00> : vector<32x128xf32>
    %135 = tpu.matmul %39, %134, %cst_70 {dimension_numbers = #tpu.dot_dimension_numbers<[1], [0], [0], [1], [0, 0, 1, 1], [], []>} : vector<32x32xf32>, vector<32x128xf32>, vector<32x128xf32> -> vector<32x128xf32>
    %136 = arith.addf %135, %35 : vector<32x128xf32>
    %cst_71 = arith.constant 0.000000e+00 : f32
    %137 = vector.broadcast %cst_71 : f32 to vector<32x128xf32>
    %138 = arith.maximumf %136, %137 : vector<32x128xf32>
    %cst_72 = arith.constant dense<0.000000e+00> : vector<1x128xf32>
    %139 = tpu.matmul %40, %138, %cst_72 {dimension_numbers = #tpu.dot_dimension_numbers<[1], [0], [0], [1], [0, 0, 1, 1], [], []>} : vector<1x32xf32>, vector<32x128xf32>, vector<1x128xf32> -> vector<1x128xf32>
    %140 = arith.addf %139, %38 : vector<1x128xf32>
    %cst_73 = arith.constant 0.000000e+00 : f32
    %141 = vector.broadcast %cst_73 : f32 to vector<1x128xf32>
    %142 = arith.cmpf ogt, %140, %141 : vector<1x128xf32>
    %143 = math.exp %140 : vector<1x128xf32>
    %cst_74 = arith.constant 1.000000e+00 : f32
    %144 = vector.broadcast %cst_74 : f32 to vector<1x128xf32>
    %145 = arith.subf %143, %144 : vector<1x128xf32>
    %146 = arith.select %142, %140, %145 : vector<1x128xi1>, vector<1x128xf32>
    %cst_75 = arith.constant 1.000000e+00 : f32
    %147 = vector.broadcast %cst_75 : f32 to vector<1x128xf32>
    %148 = arith.addf %146, %147 : vector<1x128xf32>
    %cst_76 = arith.constant 0.018766623 : f32
    %149 = vector.broadcast %cst_76 : f32 to vector<1x128xf32>
    %150 = arith.mulf %149, %148 : vector<1x128xf32>
    %151 = arith.addf %129, %150 : vector<1x128xf32>
    %cst_77 = arith.constant 0.940960646 : f32
    %152 = vector.broadcast %cst_77 : f32 to vector<32x128xf32>
    %153 = arith.mulf %152, %32 : vector<32x128xf32>
    %154 = arith.addf %153, %13 : vector<32x128xf32>
    %cst_78 = arith.constant 0.000000e+00 : f32
    %155 = vector.broadcast %cst_78 : f32 to vector<32x128xf32>
    %156 = arith.maximumf %154, %155 : vector<32x128xf32>
    %cst_79 = arith.constant dense<0.000000e+00> : vector<32x128xf32>
    %157 = tpu.matmul %39, %156, %cst_79 {dimension_numbers = #tpu.dot_dimension_numbers<[1], [0], [0], [1], [0, 0, 1, 1], [], []>} : vector<32x32xf32>, vector<32x128xf32>, vector<32x128xf32> -> vector<32x128xf32>
    %158 = arith.addf %157, %35 : vector<32x128xf32>
    %cst_80 = arith.constant 0.000000e+00 : f32
    %159 = vector.broadcast %cst_80 : f32 to vector<32x128xf32>
    %160 = arith.maximumf %158, %159 : vector<32x128xf32>
    %cst_81 = arith.constant dense<0.000000e+00> : vector<1x128xf32>
    %161 = tpu.matmul %40, %160, %cst_81 {dimension_numbers = #tpu.dot_dimension_numbers<[1], [0], [0], [1], [0, 0, 1, 1], [], []>} : vector<1x32xf32>, vector<32x128xf32>, vector<1x128xf32> -> vector<1x128xf32>
    %162 = arith.addf %161, %38 : vector<1x128xf32>
    %cst_82 = arith.constant 0.000000e+00 : f32
    %163 = vector.broadcast %cst_82 : f32 to vector<1x128xf32>
    %164 = arith.cmpf ogt, %162, %163 : vector<1x128xf32>
    %165 = math.exp %162 : vector<1x128xf32>
    %cst_83 = arith.constant 1.000000e+00 : f32
    %166 = vector.broadcast %cst_83 : f32 to vector<1x128xf32>
    %167 = arith.subf %165, %166 : vector<1x128xf32>
    %168 = arith.select %164, %162, %167 : vector<1x128xi1>, vector<1x128xf32>
    %cst_84 = arith.constant 1.000000e+00 : f32
    %169 = vector.broadcast %cst_84 : f32 to vector<1x128xf32>
    %170 = arith.addf %168, %169 : vector<1x128xf32>
    %cst_85 = arith.constant 0.0231619291 : f32
    %171 = vector.broadcast %cst_85 : f32 to vector<1x128xf32>
    %172 = arith.mulf %171, %170 : vector<1x128xf32>
    %173 = arith.addf %151, %172 : vector<1x128xf32>
    %cst_86 = arith.constant 0.915734767 : f32
    %174 = vector.broadcast %cst_86 : f32 to vector<32x128xf32>
    %175 = arith.mulf %174, %32 : vector<32x128xf32>
    %176 = arith.addf %175, %13 : vector<32x128xf32>
    %cst_87 = arith.constant 0.000000e+00 : f32
    %177 = vector.broadcast %cst_87 : f32 to vector<32x128xf32>
    %178 = arith.maximumf %176, %177 : vector<32x128xf32>
    %cst_88 = arith.constant dense<0.000000e+00> : vector<32x128xf32>
    %179 = tpu.matmul %39, %178, %cst_88 {dimension_numbers = #tpu.dot_dimension_numbers<[1], [0], [0], [1], [0, 0, 1, 1], [], []>} : vector<32x32xf32>, vector<32x128xf32>, vector<32x128xf32> -> vector<32x128xf32>
    %180 = arith.addf %179, %35 : vector<32x128xf32>
    %cst_89 = arith.constant 0.000000e+00 : f32
    %181 = vector.broadcast %cst_89 : f32 to vector<32x128xf32>
    %182 = arith.maximumf %180, %181 : vector<32x128xf32>
    %cst_90 = arith.constant dense<0.000000e+00> : vector<1x128xf32>
    %183 = tpu.matmul %40, %182, %cst_90 {dimension_numbers = #tpu.dot_dimension_numbers<[1], [0], [0], [1], [0, 0, 1, 1], [], []>} : vector<1x32xf32>, vector<32x128xf32>, vector<1x128xf32> -> vector<1x128xf32>
    %184 = arith.addf %183, %38 : vector<1x128xf32>
    %cst_91 = arith.constant 0.000000e+00 : f32
    %185 = vector.broadcast %cst_91 : f32 to vector<1x128xf32>
    %186 = arith.cmpf ogt, %184, %185 : vector<1x128xf32>
    %187 = math.exp %184 : vector<1x128xf32>
    %cst_92 = arith.constant 1.000000e+00 : f32
    %188 = vector.broadcast %cst_92 : f32 to vector<1x128xf32>
    %189 = arith.subf %187, %188 : vector<1x128xf32>
    %190 = arith.select %186, %184, %189 : vector<1x128xi1>, vector<1x128xf32>
    %cst_93 = arith.constant 1.000000e+00 : f32
    %191 = vector.broadcast %cst_93 : f32 to vector<1x128xf32>
    %192 = arith.addf %190, %191 : vector<1x128xf32>
    %cst_94 = arith.constant 0.0272469614 : f32
    %193 = vector.broadcast %cst_94 : f32 to vector<1x128xf32>
    %194 = arith.mulf %193, %192 : vector<1x128xf32>
    %195 = arith.addf %173, %194 : vector<1x128xf32>
    %cst_95 = arith.constant 0.886505246 : f32
    %196 = vector.broadcast %cst_95 : f32 to vector<32x128xf32>
    %197 = arith.mulf %196, %32 : vector<32x128xf32>
    %198 = arith.addf %197, %13 : vector<32x128xf32>
    %cst_96 = arith.constant 0.000000e+00 : f32
    %199 = vector.broadcast %cst_96 : f32 to vector<32x128xf32>
    %200 = arith.maximumf %198, %199 : vector<32x128xf32>
    %cst_97 = arith.constant dense<0.000000e+00> : vector<32x128xf32>
    %201 = tpu.matmul %39, %200, %cst_97 {dimension_numbers = #tpu.dot_dimension_numbers<[1], [0], [0], [1], [0, 0, 1, 1], [], []>} : vector<32x32xf32>, vector<32x128xf32>, vector<32x128xf32> -> vector<32x128xf32>
    %202 = arith.addf %201, %35 : vector<32x128xf32>
    %cst_98 = arith.constant 0.000000e+00 : f32
    %203 = vector.broadcast %cst_98 : f32 to vector<32x128xf32>
    %204 = arith.maximumf %202, %203 : vector<32x128xf32>
    %cst_99 = arith.constant dense<0.000000e+00> : vector<1x128xf32>
    %205 = tpu.matmul %40, %204, %cst_99 {dimension_numbers = #tpu.dot_dimension_numbers<[1], [0], [0], [1], [0, 0, 1, 1], [], []>} : vector<1x32xf32>, vector<32x128xf32>, vector<1x128xf32> -> vector<1x128xf32>
    %206 = arith.addf %205, %38 : vector<1x128xf32>
    %cst_100 = arith.constant 0.000000e+00 : f32
    %207 = vector.broadcast %cst_100 : f32 to vector<1x128xf32>
    %208 = arith.cmpf ogt, %206, %207 : vector<1x128xf32>
    %209 = math.exp %206 : vector<1x128xf32>
    %cst_101 = arith.constant 1.000000e+00 : f32
    %210 = vector.broadcast %cst_101 : f32 to vector<1x128xf32>
    %211 = arith.subf %209, %210 : vector<1x128xf32>
    %212 = arith.select %208, %206, %211 : vector<1x128xi1>, vector<1x128xf32>
    %cst_102 = arith.constant 1.000000e+00 : f32
    %213 = vector.broadcast %cst_102 : f32 to vector<1x128xf32>
    %214 = arith.addf %212, %213 : vector<1x128xf32>
    %cst_103 = arith.constant 0.0311666019 : f32
    %215 = vector.broadcast %cst_103 : f32 to vector<1x128xf32>
    %216 = arith.mulf %215, %214 : vector<1x128xf32>
    %217 = arith.addf %195, %216 : vector<1x128xf32>
    %cst_104 = arith.constant 0.853553414 : f32
    %218 = vector.broadcast %cst_104 : f32 to vector<32x128xf32>
    %219 = arith.mulf %218, %32 : vector<32x128xf32>
    %220 = arith.addf %219, %13 : vector<32x128xf32>
    %cst_105 = arith.constant 0.000000e+00 : f32
    %221 = vector.broadcast %cst_105 : f32 to vector<32x128xf32>
    %222 = arith.maximumf %220, %221 : vector<32x128xf32>
    %cst_106 = arith.constant dense<0.000000e+00> : vector<32x128xf32>
    %223 = tpu.matmul %39, %222, %cst_106 {dimension_numbers = #tpu.dot_dimension_numbers<[1], [0], [0], [1], [0, 0, 1, 1], [], []>} : vector<32x32xf32>, vector<32x128xf32>, vector<32x128xf32> -> vector<32x128xf32>
    %224 = arith.addf %223, %35 : vector<32x128xf32>
    %cst_107 = arith.constant 0.000000e+00 : f32
    %225 = vector.broadcast %cst_107 : f32 to vector<32x128xf32>
    %226 = arith.maximumf %224, %225 : vector<32x128xf32>
    %cst_108 = arith.constant dense<0.000000e+00> : vector<1x128xf32>
    %227 = tpu.matmul %40, %226, %cst_108 {dimension_numbers = #tpu.dot_dimension_numbers<[1], [0], [0], [1], [0, 0, 1, 1], [], []>} : vector<1x32xf32>, vector<32x128xf32>, vector<1x128xf32> -> vector<1x128xf32>
    %228 = arith.addf %227, %38 : vector<1x128xf32>
    %cst_109 = arith.constant 0.000000e+00 : f32
    %229 = vector.broadcast %cst_109 : f32 to vector<1x128xf32>
    %230 = arith.cmpf ogt, %228, %229 : vector<1x128xf32>
    %231 = math.exp %228 : vector<1x128xf32>
    %cst_110 = arith.constant 1.000000e+00 : f32
    %232 = vector.broadcast %cst_110 : f32 to vector<1x128xf32>
    %233 = arith.subf %231, %232 : vector<1x128xf32>
    %234 = arith.select %230, %228, %233 : vector<1x128xi1>, vector<1x128xf32>
    %cst_111 = arith.constant 1.000000e+00 : f32
    %235 = vector.broadcast %cst_111 : f32 to vector<1x128xf32>
    %236 = arith.addf %234, %235 : vector<1x128xf32>
    %cst_112 = arith.constant 0.0346832387 : f32
    %237 = vector.broadcast %cst_112 : f32 to vector<1x128xf32>
    %238 = arith.mulf %237, %236 : vector<1x128xf32>
    %239 = arith.addf %217, %238 : vector<1x128xf32>
    %cst_113 = arith.constant 0.817196608 : f32
    %240 = vector.broadcast %cst_113 : f32 to vector<32x128xf32>
    %241 = arith.mulf %240, %32 : vector<32x128xf32>
    %242 = arith.addf %241, %13 : vector<32x128xf32>
    %cst_114 = arith.constant 0.000000e+00 : f32
    %243 = vector.broadcast %cst_114 : f32 to vector<32x128xf32>
    %244 = arith.maximumf %242, %243 : vector<32x128xf32>
    %cst_115 = arith.constant dense<0.000000e+00> : vector<32x128xf32>
    %245 = tpu.matmul %39, %244, %cst_115 {dimension_numbers = #tpu.dot_dimension_numbers<[1], [0], [0], [1], [0, 0, 1, 1], [], []>} : vector<32x32xf32>, vector<32x128xf32>, vector<32x128xf32> -> vector<32x128xf32>
    %246 = arith.addf %245, %35 : vector<32x128xf32>
    %cst_116 = arith.constant 0.000000e+00 : f32
    %247 = vector.broadcast %cst_116 : f32 to vector<32x128xf32>
    %248 = arith.maximumf %246, %247 : vector<32x128xf32>
    %cst_117 = arith.constant dense<0.000000e+00> : vector<1x128xf32>
    %249 = tpu.matmul %40, %248, %cst_117 {dimension_numbers = #tpu.dot_dimension_numbers<[1], [0], [0], [1], [0, 0, 1, 1], [], []>} : vector<1x32xf32>, vector<32x128xf32>, vector<1x128xf32> -> vector<1x128xf32>
    %250 = arith.addf %249, %38 : vector<1x128xf32>
    %cst_118 = arith.constant 0.000000e+00 : f32
    %251 = vector.broadcast %cst_118 : f32 to vector<1x128xf32>
    %252 = arith.cmpf ogt, %250, %251 : vector<1x128xf32>
    %253 = math.exp %250 : vector<1x128xf32>
    %cst_119 = arith.constant 1.000000e+00 : f32
    %254 = vector.broadcast %cst_119 : f32 to vector<1x128xf32>
    %255 = arith.subf %253, %254 : vector<1x128xf32>
    %256 = arith.select %252, %250, %255 : vector<1x128xi1>, vector<1x128xf32>
    %cst_120 = arith.constant 1.000000e+00 : f32
    %257 = vector.broadcast %cst_120 : f32 to vector<1x128xf32>
    %258 = arith.addf %256, %257 : vector<1x128xf32>
    %cst_121 = arith.constant 0.0379724465 : f32
    %259 = vector.broadcast %cst_121 : f32 to vector<1x128xf32>
    %260 = arith.mulf %259, %258 : vector<1x128xf32>
    %261 = arith.addf %239, %260 : vector<1x128xf32>
    %cst_122 = arith.constant 0.777785122 : f32
    %262 = vector.broadcast %cst_122 : f32 to vector<32x128xf32>
    %263 = arith.mulf %262, %32 : vector<32x128xf32>
    %264 = arith.addf %263, %13 : vector<32x128xf32>
    %cst_123 = arith.constant 0.000000e+00 : f32
    %265 = vector.broadcast %cst_123 : f32 to vector<32x128xf32>
    %266 = arith.maximumf %264, %265 : vector<32x128xf32>
    %cst_124 = arith.constant dense<0.000000e+00> : vector<32x128xf32>
    %267 = tpu.matmul %39, %266, %cst_124 {dimension_numbers = #tpu.dot_dimension_numbers<[1], [0], [0], [1], [0, 0, 1, 1], [], []>} : vector<32x32xf32>, vector<32x128xf32>, vector<32x128xf32> -> vector<32x128xf32>
    %268 = arith.addf %267, %35 : vector<32x128xf32>
    %cst_125 = arith.constant 0.000000e+00 : f32
    %269 = vector.broadcast %cst_125 : f32 to vector<32x128xf32>
    %270 = arith.maximumf %268, %269 : vector<32x128xf32>
    %cst_126 = arith.constant dense<0.000000e+00> : vector<1x128xf32>
    %271 = tpu.matmul %40, %270, %cst_126 {dimension_numbers = #tpu.dot_dimension_numbers<[1], [0], [0], [1], [0, 0, 1, 1], [], []>} : vector<1x32xf32>, vector<32x128xf32>, vector<1x128xf32> -> vector<1x128xf32>
    %272 = arith.addf %271, %38 : vector<1x128xf32>
    %cst_127 = arith.constant 0.000000e+00 : f32
    %273 = vector.broadcast %cst_127 : f32 to vector<1x128xf32>
    %274 = arith.cmpf ogt, %272, %273 : vector<1x128xf32>
    %275 = math.exp %272 : vector<1x128xf32>
    %cst_128 = arith.constant 1.000000e+00 : f32
    %276 = vector.broadcast %cst_128 : f32 to vector<1x128xf32>
    %277 = arith.subf %275, %276 : vector<1x128xf32>
    %278 = arith.select %274, %272, %277 : vector<1x128xi1>, vector<1x128xf32>
    %cst_129 = arith.constant 1.000000e+00 : f32
    %279 = vector.broadcast %cst_129 : f32 to vector<1x128xf32>
    %280 = arith.addf %278, %279 : vector<1x128xf32>
    %cst_130 = arith.constant 0.0407868624 : f32
    %281 = vector.broadcast %cst_130 : f32 to vector<1x128xf32>
    %282 = arith.mulf %281, %280 : vector<1x128xf32>
    %283 = arith.addf %261, %282 : vector<1x128xf32>
    %cst_131 = arith.constant 0.735698342 : f32
    %284 = vector.broadcast %cst_131 : f32 to vector<32x128xf32>
    %285 = arith.mulf %284, %32 : vector<32x128xf32>
    %286 = arith.addf %285, %13 : vector<32x128xf32>
    %cst_132 = arith.constant 0.000000e+00 : f32
    %287 = vector.broadcast %cst_132 : f32 to vector<32x128xf32>
    %288 = arith.maximumf %286, %287 : vector<32x128xf32>
    %cst_133 = arith.constant dense<0.000000e+00> : vector<32x128xf32>
    %289 = tpu.matmul %39, %288, %cst_133 {dimension_numbers = #tpu.dot_dimension_numbers<[1], [0], [0], [1], [0, 0, 1, 1], [], []>} : vector<32x32xf32>, vector<32x128xf32>, vector<32x128xf32> -> vector<32x128xf32>
    %290 = arith.addf %289, %35 : vector<32x128xf32>
    %cst_134 = arith.constant 0.000000e+00 : f32
    %291 = vector.broadcast %cst_134 : f32 to vector<32x128xf32>
    %292 = arith.maximumf %290, %291 : vector<32x128xf32>
    %cst_135 = arith.constant dense<0.000000e+00> : vector<1x128xf32>
    %293 = tpu.matmul %40, %292, %cst_135 {dimension_numbers = #tpu.dot_dimension_numbers<[1], [0], [0], [1], [0, 0, 1, 1], [], []>} : vector<1x32xf32>, vector<32x128xf32>, vector<1x128xf32> -> vector<1x128xf32>
    %294 = arith.addf %293, %38 : vector<1x128xf32>
    %cst_136 = arith.constant 0.000000e+00 : f32
    %295 = vector.broadcast %cst_136 : f32 to vector<1x128xf32>
    %296 = arith.cmpf ogt, %294, %295 : vector<1x128xf32>
    %297 = math.exp %294 : vector<1x128xf32>
    %cst_137 = arith.constant 1.000000e+00 : f32
    %298 = vector.broadcast %cst_137 : f32 to vector<1x128xf32>
    %299 = arith.subf %297, %298 : vector<1x128xf32>
    %300 = arith.select %296, %294, %299 : vector<1x128xi1>, vector<1x128xf32>
    %cst_138 = arith.constant 1.000000e+00 : f32
    %301 = vector.broadcast %cst_138 : f32 to vector<1x128xf32>
    %302 = arith.addf %300, %301 : vector<1x128xf32>
    %cst_139 = arith.constant 0.0433193184 : f32
    %303 = vector.broadcast %cst_139 : f32 to vector<1x128xf32>
    %304 = arith.mulf %303, %302 : vector<1x128xf32>
    %305 = arith.addf %283, %304 : vector<1x128xf32>
    %cst_140 = arith.constant 0.691341698 : f32
    %306 = vector.broadcast %cst_140 : f32 to vector<32x128xf32>
    %307 = arith.mulf %306, %32 : vector<32x128xf32>
    %308 = arith.addf %307, %13 : vector<32x128xf32>
    %cst_141 = arith.constant 0.000000e+00 : f32
    %309 = vector.broadcast %cst_141 : f32 to vector<32x128xf32>
    %310 = arith.maximumf %308, %309 : vector<32x128xf32>
    %cst_142 = arith.constant dense<0.000000e+00> : vector<32x128xf32>
    %311 = tpu.matmul %39, %310, %cst_142 {dimension_numbers = #tpu.dot_dimension_numbers<[1], [0], [0], [1], [0, 0, 1, 1], [], []>} : vector<32x32xf32>, vector<32x128xf32>, vector<32x128xf32> -> vector<32x128xf32>
    %312 = arith.addf %311, %35 : vector<32x128xf32>
    %cst_143 = arith.constant 0.000000e+00 : f32
    %313 = vector.broadcast %cst_143 : f32 to vector<32x128xf32>
    %314 = arith.maximumf %312, %313 : vector<32x128xf32>
    %cst_144 = arith.constant dense<0.000000e+00> : vector<1x128xf32>
    %315 = tpu.matmul %40, %314, %cst_144 {dimension_numbers = #tpu.dot_dimension_numbers<[1], [0], [0], [1], [0, 0, 1, 1], [], []>} : vector<1x32xf32>, vector<32x128xf32>, vector<1x128xf32> -> vector<1x128xf32>
    %316 = arith.addf %315, %38 : vector<1x128xf32>
    %cst_145 = arith.constant 0.000000e+00 : f32
    %317 = vector.broadcast %cst_145 : f32 to vector<1x128xf32>
    %318 = arith.cmpf ogt, %316, %317 : vector<1x128xf32>
    %319 = math.exp %316 : vector<1x128xf32>
    %cst_146 = arith.constant 1.000000e+00 : f32
    %320 = vector.broadcast %cst_146 : f32 to vector<1x128xf32>
    %321 = arith.subf %319, %320 : vector<1x128xf32>
    %322 = arith.select %318, %316, %321 : vector<1x128xi1>, vector<1x128xf32>
    %cst_147 = arith.constant 1.000000e+00 : f32
    %323 = vector.broadcast %cst_147 : f32 to vector<1x128xf32>
    %324 = arith.addf %322, %323 : vector<1x128xf32>
    %cst_148 = arith.constant 0.0453225076 : f32
    %325 = vector.broadcast %cst_148 : f32 to vector<1x128xf32>
    %326 = arith.mulf %325, %324 : vector<1x128xf32>
    %327 = arith.addf %305, %326 : vector<1x128xf32>
    %cst_149 = arith.constant 0.645142317 : f32
    %328 = vector.broadcast %cst_149 : f32 to vector<32x128xf32>
    %329 = arith.mulf %328, %32 : vector<32x128xf32>
    %330 = arith.addf %329, %13 : vector<32x128xf32>
    %cst_150 = arith.constant 0.000000e+00 : f32
    %331 = vector.broadcast %cst_150 : f32 to vector<32x128xf32>
    %332 = arith.maximumf %330, %331 : vector<32x128xf32>
    %cst_151 = arith.constant dense<0.000000e+00> : vector<32x128xf32>
    %333 = tpu.matmul %39, %332, %cst_151 {dimension_numbers = #tpu.dot_dimension_numbers<[1], [0], [0], [1], [0, 0, 1, 1], [], []>} : vector<32x32xf32>, vector<32x128xf32>, vector<32x128xf32> -> vector<32x128xf32>
    %334 = arith.addf %333, %35 : vector<32x128xf32>
    %cst_152 = arith.constant 0.000000e+00 : f32
    %335 = vector.broadcast %cst_152 : f32 to vector<32x128xf32>
    %336 = arith.maximumf %334, %335 : vector<32x128xf32>
    %cst_153 = arith.constant dense<0.000000e+00> : vector<1x128xf32>
    %337 = tpu.matmul %40, %336, %cst_153 {dimension_numbers = #tpu.dot_dimension_numbers<[1], [0], [0], [1], [0, 0, 1, 1], [], []>} : vector<1x32xf32>, vector<32x128xf32>, vector<1x128xf32> -> vector<1x128xf32>
    %338 = arith.addf %337, %38 : vector<1x128xf32>
    %cst_154 = arith.constant 0.000000e+00 : f32
    %339 = vector.broadcast %cst_154 : f32 to vector<1x128xf32>
    %340 = arith.cmpf ogt, %338, %339 : vector<1x128xf32>
    %341 = math.exp %338 : vector<1x128xf32>
    %cst_155 = arith.constant 1.000000e+00 : f32
    %342 = vector.broadcast %cst_155 : f32 to vector<1x128xf32>
    %343 = arith.subf %341, %342 : vector<1x128xf32>
    %344 = arith.select %340, %338, %343 : vector<1x128xi1>, vector<1x128xf32>
    %cst_156 = arith.constant 1.000000e+00 : f32
    %345 = vector.broadcast %cst_156 : f32 to vector<1x128xf32>
    %346 = arith.addf %344, %345 : vector<1x128xf32>
    %cst_157 = arith.constant 0.0470021702 : f32
    %347 = vector.broadcast %cst_157 : f32 to vector<1x128xf32>
    %348 = arith.mulf %347, %346 : vector<1x128xf32>
    %349 = arith.addf %327, %348 : vector<1x128xf32>
    %cst_158 = arith.constant 0.597545146 : f32
    %350 = vector.broadcast %cst_158 : f32 to vector<32x128xf32>
    %351 = arith.mulf %350, %32 : vector<32x128xf32>
    %352 = arith.addf %351, %13 : vector<32x128xf32>
    %cst_159 = arith.constant 0.000000e+00 : f32
    %353 = vector.broadcast %cst_159 : f32 to vector<32x128xf32>
    %354 = arith.maximumf %352, %353 : vector<32x128xf32>
    %cst_160 = arith.constant dense<0.000000e+00> : vector<32x128xf32>
    %355 = tpu.matmul %39, %354, %cst_160 {dimension_numbers = #tpu.dot_dimension_numbers<[1], [0], [0], [1], [0, 0, 1, 1], [], []>} : vector<32x32xf32>, vector<32x128xf32>, vector<32x128xf32> -> vector<32x128xf32>
    %356 = arith.addf %355, %35 : vector<32x128xf32>
    %cst_161 = arith.constant 0.000000e+00 : f32
    %357 = vector.broadcast %cst_161 : f32 to vector<32x128xf32>
    %358 = arith.maximumf %356, %357 : vector<32x128xf32>
    %cst_162 = arith.constant dense<0.000000e+00> : vector<1x128xf32>
    %359 = tpu.matmul %40, %358, %cst_162 {dimension_numbers = #tpu.dot_dimension_numbers<[1], [0], [0], [1], [0, 0, 1, 1], [], []>} : vector<1x32xf32>, vector<32x128xf32>, vector<1x128xf32> -> vector<1x128xf32>
    %360 = arith.addf %359, %38 : vector<1x128xf32>
    %cst_163 = arith.constant 0.000000e+00 : f32
    %361 = vector.broadcast %cst_163 : f32 to vector<1x128xf32>
    %362 = arith.cmpf ogt, %360, %361 : vector<1x128xf32>
    %363 = math.exp %360 : vector<1x128xf32>
    %cst_164 = arith.constant 1.000000e+00 : f32
    %364 = vector.broadcast %cst_164 : f32 to vector<1x128xf32>
    %365 = arith.subf %363, %364 : vector<1x128xf32>
    %366 = arith.select %362, %360, %365 : vector<1x128xi1>, vector<1x128xf32>
    %cst_165 = arith.constant 1.000000e+00 : f32
    %367 = vector.broadcast %cst_165 : f32 to vector<1x128xf32>
    %368 = arith.addf %366, %367 : vector<1x128xf32>
    %cst_166 = arith.constant 0.0481156148 : f32
    %369 = vector.broadcast %cst_166 : f32 to vector<1x128xf32>
    %370 = arith.mulf %369, %368 : vector<1x128xf32>
    %371 = arith.addf %349, %370 : vector<1x128xf32>
    %cst_167 = arith.constant 0.549008548 : f32
    %372 = vector.broadcast %cst_167 : f32 to vector<32x128xf32>
    %373 = arith.mulf %372, %32 : vector<32x128xf32>
    %374 = arith.addf %373, %13 : vector<32x128xf32>
    %cst_168 = arith.constant 0.000000e+00 : f32
    %375 = vector.broadcast %cst_168 : f32 to vector<32x128xf32>
    %376 = arith.maximumf %374, %375 : vector<32x128xf32>
    %cst_169 = arith.constant dense<0.000000e+00> : vector<32x128xf32>
    %377 = tpu.matmul %39, %376, %cst_169 {dimension_numbers = #tpu.dot_dimension_numbers<[1], [0], [0], [1], [0, 0, 1, 1], [], []>} : vector<32x32xf32>, vector<32x128xf32>, vector<32x128xf32> -> vector<32x128xf32>
    %378 = arith.addf %377, %35 : vector<32x128xf32>
    %cst_170 = arith.constant 0.000000e+00 : f32
    %379 = vector.broadcast %cst_170 : f32 to vector<32x128xf32>
    %380 = arith.maximumf %378, %379 : vector<32x128xf32>
    %cst_171 = arith.constant dense<0.000000e+00> : vector<1x128xf32>
    %381 = tpu.matmul %40, %380, %cst_171 {dimension_numbers = #tpu.dot_dimension_numbers<[1], [0], [0], [1], [0, 0, 1, 1], [], []>} : vector<1x32xf32>, vector<32x128xf32>, vector<1x128xf32> -> vector<1x128xf32>
    %382 = arith.addf %381, %38 : vector<1x128xf32>
    %cst_172 = arith.constant 0.000000e+00 : f32
    %383 = vector.broadcast %cst_172 : f32 to vector<1x128xf32>
    %384 = arith.cmpf ogt, %382, %383 : vector<1x128xf32>
    %385 = math.exp %382 : vector<1x128xf32>
    %cst_173 = arith.constant 1.000000e+00 : f32
    %386 = vector.broadcast %cst_173 : f32 to vector<1x128xf32>
    %387 = arith.subf %385, %386 : vector<1x128xf32>
    %388 = arith.select %384, %382, %387 : vector<1x128xi1>, vector<1x128xf32>
    %cst_174 = arith.constant 1.000000e+00 : f32
    %389 = vector.broadcast %cst_174 : f32 to vector<1x128xf32>
    %390 = arith.addf %388, %389 : vector<1x128xf32>
    %cst_175 = arith.constant 0.048879642 : f32
    %391 = vector.broadcast %cst_175 : f32 to vector<1x128xf32>
    %392 = arith.mulf %391, %390 : vector<1x128xf32>
    %393 = arith.addf %371, %392 : vector<1x128xf32>
    %cst_176 = arith.constant 5.000000e-01 : f32
    %394 = vector.broadcast %cst_176 : f32 to vector<32x128xf32>
    %395 = arith.mulf %394, %32 : vector<32x128xf32>
    %396 = arith.addf %395, %13 : vector<32x128xf32>
    %cst_177 = arith.constant 0.000000e+00 : f32
    %397 = vector.broadcast %cst_177 : f32 to vector<32x128xf32>
    %398 = arith.maximumf %396, %397 : vector<32x128xf32>
    %cst_178 = arith.constant dense<0.000000e+00> : vector<32x128xf32>
    %399 = tpu.matmul %39, %398, %cst_178 {dimension_numbers = #tpu.dot_dimension_numbers<[1], [0], [0], [1], [0, 0, 1, 1], [], []>} : vector<32x32xf32>, vector<32x128xf32>, vector<32x128xf32> -> vector<32x128xf32>
    %400 = arith.addf %399, %35 : vector<32x128xf32>
    %cst_179 = arith.constant 0.000000e+00 : f32
    %401 = vector.broadcast %cst_179 : f32 to vector<32x128xf32>
    %402 = arith.maximumf %400, %401 : vector<32x128xf32>
    %cst_180 = arith.constant dense<0.000000e+00> : vector<1x128xf32>
    %403 = tpu.matmul %40, %402, %cst_180 {dimension_numbers = #tpu.dot_dimension_numbers<[1], [0], [0], [1], [0, 0, 1, 1], [], []>} : vector<1x32xf32>, vector<32x128xf32>, vector<1x128xf32> -> vector<1x128xf32>
    %404 = arith.addf %403, %38 : vector<1x128xf32>
    %cst_181 = arith.constant 0.000000e+00 : f32
    %405 = vector.broadcast %cst_181 : f32 to vector<1x128xf32>
    %406 = arith.cmpf ogt, %404, %405 : vector<1x128xf32>
    %407 = math.exp %404 : vector<1x128xf32>
    %cst_182 = arith.constant 1.000000e+00 : f32
    %408 = vector.broadcast %cst_182 : f32 to vector<1x128xf32>
    %409 = arith.subf %407, %408 : vector<1x128xf32>
    %410 = arith.select %406, %404, %409 : vector<1x128xi1>, vector<1x128xf32>
    %cst_183 = arith.constant 1.000000e+00 : f32
    %411 = vector.broadcast %cst_183 : f32 to vector<1x128xf32>
    %412 = arith.addf %410, %411 : vector<1x128xf32>
    %cst_184 = arith.constant 0.0490587428 : f32
    %413 = vector.broadcast %cst_184 : f32 to vector<1x128xf32>
    %414 = arith.mulf %413, %412 : vector<1x128xf32>
    %415 = arith.addf %393, %414 : vector<1x128xf32>
    %cst_185 = arith.constant 0.450991422 : f32
    %416 = vector.broadcast %cst_185 : f32 to vector<32x128xf32>
    %417 = arith.mulf %416, %32 : vector<32x128xf32>
    %418 = arith.addf %417, %13 : vector<32x128xf32>
    %cst_186 = arith.constant 0.000000e+00 : f32
    %419 = vector.broadcast %cst_186 : f32 to vector<32x128xf32>
    %420 = arith.maximumf %418, %419 : vector<32x128xf32>
    %cst_187 = arith.constant dense<0.000000e+00> : vector<32x128xf32>
    %421 = tpu.matmul %39, %420, %cst_187 {dimension_numbers = #tpu.dot_dimension_numbers<[1], [0], [0], [1], [0, 0, 1, 1], [], []>} : vector<32x32xf32>, vector<32x128xf32>, vector<32x128xf32> -> vector<32x128xf32>
    %422 = arith.addf %421, %35 : vector<32x128xf32>
    %cst_188 = arith.constant 0.000000e+00 : f32
    %423 = vector.broadcast %cst_188 : f32 to vector<32x128xf32>
    %424 = arith.maximumf %422, %423 : vector<32x128xf32>
    %cst_189 = arith.constant dense<0.000000e+00> : vector<1x128xf32>
    %425 = tpu.matmul %40, %424, %cst_189 {dimension_numbers = #tpu.dot_dimension_numbers<[1], [0], [0], [1], [0, 0, 1, 1], [], []>} : vector<1x32xf32>, vector<32x128xf32>, vector<1x128xf32> -> vector<1x128xf32>
    %426 = arith.addf %425, %38 : vector<1x128xf32>
    %cst_190 = arith.constant 0.000000e+00 : f32
    %427 = vector.broadcast %cst_190 : f32 to vector<1x128xf32>
    %428 = arith.cmpf ogt, %426, %427 : vector<1x128xf32>
    %429 = math.exp %426 : vector<1x128xf32>
    %cst_191 = arith.constant 1.000000e+00 : f32
    %430 = vector.broadcast %cst_191 : f32 to vector<1x128xf32>
    %431 = arith.subf %429, %430 : vector<1x128xf32>
    %432 = arith.select %428, %426, %431 : vector<1x128xi1>, vector<1x128xf32>
    %cst_192 = arith.constant 1.000000e+00 : f32
    %433 = vector.broadcast %cst_192 : f32 to vector<1x128xf32>
    %434 = arith.addf %432, %433 : vector<1x128xf32>
    %cst_193 = arith.constant 0.048879642 : f32
    %435 = vector.broadcast %cst_193 : f32 to vector<1x128xf32>
    %436 = arith.mulf %435, %434 : vector<1x128xf32>
    %437 = arith.addf %415, %436 : vector<1x128xf32>
    %cst_194 = arith.constant 0.402454853 : f32
    %438 = vector.broadcast %cst_194 : f32 to vector<32x128xf32>
    %439 = arith.mulf %438, %32 : vector<32x128xf32>
    %440 = arith.addf %439, %13 : vector<32x128xf32>
    %cst_195 = arith.constant 0.000000e+00 : f32
    %441 = vector.broadcast %cst_195 : f32 to vector<32x128xf32>
    %442 = arith.maximumf %440, %441 : vector<32x128xf32>
    %cst_196 = arith.constant dense<0.000000e+00> : vector<32x128xf32>
    %443 = tpu.matmul %39, %442, %cst_196 {dimension_numbers = #tpu.dot_dimension_numbers<[1], [0], [0], [1], [0, 0, 1, 1], [], []>} : vector<32x32xf32>, vector<32x128xf32>, vector<32x128xf32> -> vector<32x128xf32>
    %444 = arith.addf %443, %35 : vector<32x128xf32>
    %cst_197 = arith.constant 0.000000e+00 : f32
    %445 = vector.broadcast %cst_197 : f32 to vector<32x128xf32>
    %446 = arith.maximumf %444, %445 : vector<32x128xf32>
    %cst_198 = arith.constant dense<0.000000e+00> : vector<1x128xf32>
    %447 = tpu.matmul %40, %446, %cst_198 {dimension_numbers = #tpu.dot_dimension_numbers<[1], [0], [0], [1], [0, 0, 1, 1], [], []>} : vector<1x32xf32>, vector<32x128xf32>, vector<1x128xf32> -> vector<1x128xf32>
    %448 = arith.addf %447, %38 : vector<1x128xf32>
    %cst_199 = arith.constant 0.000000e+00 : f32
    %449 = vector.broadcast %cst_199 : f32 to vector<1x128xf32>
    %450 = arith.cmpf ogt, %448, %449 : vector<1x128xf32>
    %451 = math.exp %448 : vector<1x128xf32>
    %cst_200 = arith.constant 1.000000e+00 : f32
    %452 = vector.broadcast %cst_200 : f32 to vector<1x128xf32>
    %453 = arith.subf %451, %452 : vector<1x128xf32>
    %454 = arith.select %450, %448, %453 : vector<1x128xi1>, vector<1x128xf32>
    %cst_201 = arith.constant 1.000000e+00 : f32
    %455 = vector.broadcast %cst_201 : f32 to vector<1x128xf32>
    %456 = arith.addf %454, %455 : vector<1x128xf32>
    %cst_202 = arith.constant 0.0481156148 : f32
    %457 = vector.broadcast %cst_202 : f32 to vector<1x128xf32>
    %458 = arith.mulf %457, %456 : vector<1x128xf32>
    %459 = arith.addf %437, %458 : vector<1x128xf32>
    %cst_203 = arith.constant 0.354857683 : f32
    %460 = vector.broadcast %cst_203 : f32 to vector<32x128xf32>
    %461 = arith.mulf %460, %32 : vector<32x128xf32>
    %462 = arith.addf %461, %13 : vector<32x128xf32>
    %cst_204 = arith.constant 0.000000e+00 : f32
    %463 = vector.broadcast %cst_204 : f32 to vector<32x128xf32>
    %464 = arith.maximumf %462, %463 : vector<32x128xf32>
    %cst_205 = arith.constant dense<0.000000e+00> : vector<32x128xf32>
    %465 = tpu.matmul %39, %464, %cst_205 {dimension_numbers = #tpu.dot_dimension_numbers<[1], [0], [0], [1], [0, 0, 1, 1], [], []>} : vector<32x32xf32>, vector<32x128xf32>, vector<32x128xf32> -> vector<32x128xf32>
    %466 = arith.addf %465, %35 : vector<32x128xf32>
    %cst_206 = arith.constant 0.000000e+00 : f32
    %467 = vector.broadcast %cst_206 : f32 to vector<32x128xf32>
    %468 = arith.maximumf %466, %467 : vector<32x128xf32>
    %cst_207 = arith.constant dense<0.000000e+00> : vector<1x128xf32>
    %469 = tpu.matmul %40, %468, %cst_207 {dimension_numbers = #tpu.dot_dimension_numbers<[1], [0], [0], [1], [0, 0, 1, 1], [], []>} : vector<1x32xf32>, vector<32x128xf32>, vector<1x128xf32> -> vector<1x128xf32>
    %470 = arith.addf %469, %38 : vector<1x128xf32>
    %cst_208 = arith.constant 0.000000e+00 : f32
    %471 = vector.broadcast %cst_208 : f32 to vector<1x128xf32>
    %472 = arith.cmpf ogt, %470, %471 : vector<1x128xf32>
    %473 = math.exp %470 : vector<1x128xf32>
    %cst_209 = arith.constant 1.000000e+00 : f32
    %474 = vector.broadcast %cst_209 : f32 to vector<1x128xf32>
    %475 = arith.subf %473, %474 : vector<1x128xf32>
    %476 = arith.select %472, %470, %475 : vector<1x128xi1>, vector<1x128xf32>
    %cst_210 = arith.constant 1.000000e+00 : f32
    %477 = vector.broadcast %cst_210 : f32 to vector<1x128xf32>
    %478 = arith.addf %476, %477 : vector<1x128xf32>
    %cst_211 = arith.constant 0.0470021702 : f32
    %479 = vector.broadcast %cst_211 : f32 to vector<1x128xf32>
    %480 = arith.mulf %479, %478 : vector<1x128xf32>
    %481 = arith.addf %459, %480 : vector<1x128xf32>
    %cst_212 = arith.constant 0.308658302 : f32
    %482 = vector.broadcast %cst_212 : f32 to vector<32x128xf32>
    %483 = arith.mulf %482, %32 : vector<32x128xf32>
    %484 = arith.addf %483, %13 : vector<32x128xf32>
    %cst_213 = arith.constant 0.000000e+00 : f32
    %485 = vector.broadcast %cst_213 : f32 to vector<32x128xf32>
    %486 = arith.maximumf %484, %485 : vector<32x128xf32>
    %cst_214 = arith.constant dense<0.000000e+00> : vector<32x128xf32>
    %487 = tpu.matmul %39, %486, %cst_214 {dimension_numbers = #tpu.dot_dimension_numbers<[1], [0], [0], [1], [0, 0, 1, 1], [], []>} : vector<32x32xf32>, vector<32x128xf32>, vector<32x128xf32> -> vector<32x128xf32>
    %488 = arith.addf %487, %35 : vector<32x128xf32>
    %cst_215 = arith.constant 0.000000e+00 : f32
    %489 = vector.broadcast %cst_215 : f32 to vector<32x128xf32>
    %490 = arith.maximumf %488, %489 : vector<32x128xf32>
    %cst_216 = arith.constant dense<0.000000e+00> : vector<1x128xf32>
    %491 = tpu.matmul %40, %490, %cst_216 {dimension_numbers = #tpu.dot_dimension_numbers<[1], [0], [0], [1], [0, 0, 1, 1], [], []>} : vector<1x32xf32>, vector<32x128xf32>, vector<1x128xf32> -> vector<1x128xf32>
    %492 = arith.addf %491, %38 : vector<1x128xf32>
    %cst_217 = arith.constant 0.000000e+00 : f32
    %493 = vector.broadcast %cst_217 : f32 to vector<1x128xf32>
    %494 = arith.cmpf ogt, %492, %493 : vector<1x128xf32>
    %495 = math.exp %492 : vector<1x128xf32>
    %cst_218 = arith.constant 1.000000e+00 : f32
    %496 = vector.broadcast %cst_218 : f32 to vector<1x128xf32>
    %497 = arith.subf %495, %496 : vector<1x128xf32>
    %498 = arith.select %494, %492, %497 : vector<1x128xi1>, vector<1x128xf32>
    %cst_219 = arith.constant 1.000000e+00 : f32
    %499 = vector.broadcast %cst_219 : f32 to vector<1x128xf32>
    %500 = arith.addf %498, %499 : vector<1x128xf32>
    %cst_220 = arith.constant 0.0453225076 : f32
    %501 = vector.broadcast %cst_220 : f32 to vector<1x128xf32>
    %502 = arith.mulf %501, %500 : vector<1x128xf32>
    %503 = arith.addf %481, %502 : vector<1x128xf32>
    %cst_221 = arith.constant 0.264301628 : f32
    %504 = vector.broadcast %cst_221 : f32 to vector<32x128xf32>
    %505 = arith.mulf %504, %32 : vector<32x128xf32>
    %506 = arith.addf %505, %13 : vector<32x128xf32>
    %cst_222 = arith.constant 0.000000e+00 : f32
    %507 = vector.broadcast %cst_222 : f32 to vector<32x128xf32>
    %508 = arith.maximumf %506, %507 : vector<32x128xf32>
    %cst_223 = arith.constant dense<0.000000e+00> : vector<32x128xf32>
    %509 = tpu.matmul %39, %508, %cst_223 {dimension_numbers = #tpu.dot_dimension_numbers<[1], [0], [0], [1], [0, 0, 1, 1], [], []>} : vector<32x32xf32>, vector<32x128xf32>, vector<32x128xf32> -> vector<32x128xf32>
    %510 = arith.addf %509, %35 : vector<32x128xf32>
    %cst_224 = arith.constant 0.000000e+00 : f32
    %511 = vector.broadcast %cst_224 : f32 to vector<32x128xf32>
    %512 = arith.maximumf %510, %511 : vector<32x128xf32>
    %cst_225 = arith.constant dense<0.000000e+00> : vector<1x128xf32>
    %513 = tpu.matmul %40, %512, %cst_225 {dimension_numbers = #tpu.dot_dimension_numbers<[1], [0], [0], [1], [0, 0, 1, 1], [], []>} : vector<1x32xf32>, vector<32x128xf32>, vector<1x128xf32> -> vector<1x128xf32>
    %514 = arith.addf %513, %38 : vector<1x128xf32>
    %cst_226 = arith.constant 0.000000e+00 : f32
    %515 = vector.broadcast %cst_226 : f32 to vector<1x128xf32>
    %516 = arith.cmpf ogt, %514, %515 : vector<1x128xf32>
    %517 = math.exp %514 : vector<1x128xf32>
    %cst_227 = arith.constant 1.000000e+00 : f32
    %518 = vector.broadcast %cst_227 : f32 to vector<1x128xf32>
    %519 = arith.subf %517, %518 : vector<1x128xf32>
    %520 = arith.select %516, %514, %519 : vector<1x128xi1>, vector<1x128xf32>
    %cst_228 = arith.constant 1.000000e+00 : f32
    %521 = vector.broadcast %cst_228 : f32 to vector<1x128xf32>
    %522 = arith.addf %520, %521 : vector<1x128xf32>
    %cst_229 = arith.constant 0.0433193184 : f32
    %523 = vector.broadcast %cst_229 : f32 to vector<1x128xf32>
    %524 = arith.mulf %523, %522 : vector<1x128xf32>
    %525 = arith.addf %503, %524 : vector<1x128xf32>
    %cst_230 = arith.constant 0.222214878 : f32
    %526 = vector.broadcast %cst_230 : f32 to vector<32x128xf32>
    %527 = arith.mulf %526, %32 : vector<32x128xf32>
    %528 = arith.addf %527, %13 : vector<32x128xf32>
    %cst_231 = arith.constant 0.000000e+00 : f32
    %529 = vector.broadcast %cst_231 : f32 to vector<32x128xf32>
    %530 = arith.maximumf %528, %529 : vector<32x128xf32>
    %cst_232 = arith.constant dense<0.000000e+00> : vector<32x128xf32>
    %531 = tpu.matmul %39, %530, %cst_232 {dimension_numbers = #tpu.dot_dimension_numbers<[1], [0], [0], [1], [0, 0, 1, 1], [], []>} : vector<32x32xf32>, vector<32x128xf32>, vector<32x128xf32> -> vector<32x128xf32>
    %532 = arith.addf %531, %35 : vector<32x128xf32>
    %cst_233 = arith.constant 0.000000e+00 : f32
    %533 = vector.broadcast %cst_233 : f32 to vector<32x128xf32>
    %534 = arith.maximumf %532, %533 : vector<32x128xf32>
    %cst_234 = arith.constant dense<0.000000e+00> : vector<1x128xf32>
    %535 = tpu.matmul %40, %534, %cst_234 {dimension_numbers = #tpu.dot_dimension_numbers<[1], [0], [0], [1], [0, 0, 1, 1], [], []>} : vector<1x32xf32>, vector<32x128xf32>, vector<1x128xf32> -> vector<1x128xf32>
    %536 = arith.addf %535, %38 : vector<1x128xf32>
    %cst_235 = arith.constant 0.000000e+00 : f32
    %537 = vector.broadcast %cst_235 : f32 to vector<1x128xf32>
    %538 = arith.cmpf ogt, %536, %537 : vector<1x128xf32>
    %539 = math.exp %536 : vector<1x128xf32>
    %cst_236 = arith.constant 1.000000e+00 : f32
    %540 = vector.broadcast %cst_236 : f32 to vector<1x128xf32>
    %541 = arith.subf %539, %540 : vector<1x128xf32>
    %542 = arith.select %538, %536, %541 : vector<1x128xi1>, vector<1x128xf32>
    %cst_237 = arith.constant 1.000000e+00 : f32
    %543 = vector.broadcast %cst_237 : f32 to vector<1x128xf32>
    %544 = arith.addf %542, %543 : vector<1x128xf32>
    %cst_238 = arith.constant 0.0407868624 : f32
    %545 = vector.broadcast %cst_238 : f32 to vector<1x128xf32>
    %546 = arith.mulf %545, %544 : vector<1x128xf32>
    %547 = arith.addf %525, %546 : vector<1x128xf32>
    %cst_239 = arith.constant 0.182803363 : f32
    %548 = vector.broadcast %cst_239 : f32 to vector<32x128xf32>
    %549 = arith.mulf %548, %32 : vector<32x128xf32>
    %550 = arith.addf %549, %13 : vector<32x128xf32>
    %cst_240 = arith.constant 0.000000e+00 : f32
    %551 = vector.broadcast %cst_240 : f32 to vector<32x128xf32>
    %552 = arith.maximumf %550, %551 : vector<32x128xf32>
    %cst_241 = arith.constant dense<0.000000e+00> : vector<32x128xf32>
    %553 = tpu.matmul %39, %552, %cst_241 {dimension_numbers = #tpu.dot_dimension_numbers<[1], [0], [0], [1], [0, 0, 1, 1], [], []>} : vector<32x32xf32>, vector<32x128xf32>, vector<32x128xf32> -> vector<32x128xf32>
    %554 = arith.addf %553, %35 : vector<32x128xf32>
    %cst_242 = arith.constant 0.000000e+00 : f32
    %555 = vector.broadcast %cst_242 : f32 to vector<32x128xf32>
    %556 = arith.maximumf %554, %555 : vector<32x128xf32>
    %cst_243 = arith.constant dense<0.000000e+00> : vector<1x128xf32>
    %557 = tpu.matmul %40, %556, %cst_243 {dimension_numbers = #tpu.dot_dimension_numbers<[1], [0], [0], [1], [0, 0, 1, 1], [], []>} : vector<1x32xf32>, vector<32x128xf32>, vector<1x128xf32> -> vector<1x128xf32>
    %558 = arith.addf %557, %38 : vector<1x128xf32>
    %cst_244 = arith.constant 0.000000e+00 : f32
    %559 = vector.broadcast %cst_244 : f32 to vector<1x128xf32>
    %560 = arith.cmpf ogt, %558, %559 : vector<1x128xf32>
    %561 = math.exp %558 : vector<1x128xf32>
    %cst_245 = arith.constant 1.000000e+00 : f32
    %562 = vector.broadcast %cst_245 : f32 to vector<1x128xf32>
    %563 = arith.subf %561, %562 : vector<1x128xf32>
    %564 = arith.select %560, %558, %563 : vector<1x128xi1>, vector<1x128xf32>
    %cst_246 = arith.constant 1.000000e+00 : f32
    %565 = vector.broadcast %cst_246 : f32 to vector<1x128xf32>
    %566 = arith.addf %564, %565 : vector<1x128xf32>
    %cst_247 = arith.constant 0.0379724465 : f32
    %567 = vector.broadcast %cst_247 : f32 to vector<1x128xf32>
    %568 = arith.mulf %567, %566 : vector<1x128xf32>
    %569 = arith.addf %547, %568 : vector<1x128xf32>
    %cst_248 = arith.constant 0.146446615 : f32
    %570 = vector.broadcast %cst_248 : f32 to vector<32x128xf32>
    %571 = arith.mulf %570, %32 : vector<32x128xf32>
    %572 = arith.addf %571, %13 : vector<32x128xf32>
    %cst_249 = arith.constant 0.000000e+00 : f32
    %573 = vector.broadcast %cst_249 : f32 to vector<32x128xf32>
    %574 = arith.maximumf %572, %573 : vector<32x128xf32>
    %cst_250 = arith.constant dense<0.000000e+00> : vector<32x128xf32>
    %575 = tpu.matmul %39, %574, %cst_250 {dimension_numbers = #tpu.dot_dimension_numbers<[1], [0], [0], [1], [0, 0, 1, 1], [], []>} : vector<32x32xf32>, vector<32x128xf32>, vector<32x128xf32> -> vector<32x128xf32>
    %576 = arith.addf %575, %35 : vector<32x128xf32>
    %cst_251 = arith.constant 0.000000e+00 : f32
    %577 = vector.broadcast %cst_251 : f32 to vector<32x128xf32>
    %578 = arith.maximumf %576, %577 : vector<32x128xf32>
    %cst_252 = arith.constant dense<0.000000e+00> : vector<1x128xf32>
    %579 = tpu.matmul %40, %578, %cst_252 {dimension_numbers = #tpu.dot_dimension_numbers<[1], [0], [0], [1], [0, 0, 1, 1], [], []>} : vector<1x32xf32>, vector<32x128xf32>, vector<1x128xf32> -> vector<1x128xf32>
    %580 = arith.addf %579, %38 : vector<1x128xf32>
    %cst_253 = arith.constant 0.000000e+00 : f32
    %581 = vector.broadcast %cst_253 : f32 to vector<1x128xf32>
    %582 = arith.cmpf ogt, %580, %581 : vector<1x128xf32>
    %583 = math.exp %580 : vector<1x128xf32>
    %cst_254 = arith.constant 1.000000e+00 : f32
    %584 = vector.broadcast %cst_254 : f32 to vector<1x128xf32>
    %585 = arith.subf %583, %584 : vector<1x128xf32>
    %586 = arith.select %582, %580, %585 : vector<1x128xi1>, vector<1x128xf32>
    %cst_255 = arith.constant 1.000000e+00 : f32
    %587 = vector.broadcast %cst_255 : f32 to vector<1x128xf32>
    %588 = arith.addf %586, %587 : vector<1x128xf32>
    %cst_256 = arith.constant 0.0346832387 : f32
    %589 = vector.broadcast %cst_256 : f32 to vector<1x128xf32>
    %590 = arith.mulf %589, %588 : vector<1x128xf32>
    %591 = arith.addf %569, %590 : vector<1x128xf32>
    %cst_257 = arith.constant 0.113494784 : f32
    %592 = vector.broadcast %cst_257 : f32 to vector<32x128xf32>
    %593 = arith.mulf %592, %32 : vector<32x128xf32>
    %594 = arith.addf %593, %13 : vector<32x128xf32>
    %cst_258 = arith.constant 0.000000e+00 : f32
    %595 = vector.broadcast %cst_258 : f32 to vector<32x128xf32>
    %596 = arith.maximumf %594, %595 : vector<32x128xf32>
    %cst_259 = arith.constant dense<0.000000e+00> : vector<32x128xf32>
    %597 = tpu.matmul %39, %596, %cst_259 {dimension_numbers = #tpu.dot_dimension_numbers<[1], [0], [0], [1], [0, 0, 1, 1], [], []>} : vector<32x32xf32>, vector<32x128xf32>, vector<32x128xf32> -> vector<32x128xf32>
    %598 = arith.addf %597, %35 : vector<32x128xf32>
    %cst_260 = arith.constant 0.000000e+00 : f32
    %599 = vector.broadcast %cst_260 : f32 to vector<32x128xf32>
    %600 = arith.maximumf %598, %599 : vector<32x128xf32>
    %cst_261 = arith.constant dense<0.000000e+00> : vector<1x128xf32>
    %601 = tpu.matmul %40, %600, %cst_261 {dimension_numbers = #tpu.dot_dimension_numbers<[1], [0], [0], [1], [0, 0, 1, 1], [], []>} : vector<1x32xf32>, vector<32x128xf32>, vector<1x128xf32> -> vector<1x128xf32>
    %602 = arith.addf %601, %38 : vector<1x128xf32>
    %cst_262 = arith.constant 0.000000e+00 : f32
    %603 = vector.broadcast %cst_262 : f32 to vector<1x128xf32>
    %604 = arith.cmpf ogt, %602, %603 : vector<1x128xf32>
    %605 = math.exp %602 : vector<1x128xf32>
    %cst_263 = arith.constant 1.000000e+00 : f32
    %606 = vector.broadcast %cst_263 : f32 to vector<1x128xf32>
    %607 = arith.subf %605, %606 : vector<1x128xf32>
    %608 = arith.select %604, %602, %607 : vector<1x128xi1>, vector<1x128xf32>
    %cst_264 = arith.constant 1.000000e+00 : f32
    %609 = vector.broadcast %cst_264 : f32 to vector<1x128xf32>
    %610 = arith.addf %608, %609 : vector<1x128xf32>
    %cst_265 = arith.constant 0.0311666019 : f32
    %611 = vector.broadcast %cst_265 : f32 to vector<1x128xf32>
    %612 = arith.mulf %611, %610 : vector<1x128xf32>
    %613 = arith.addf %591, %612 : vector<1x128xf32>
    %cst_266 = arith.constant 8.426520e-02 : f32
    %614 = vector.broadcast %cst_266 : f32 to vector<32x128xf32>
    %615 = arith.mulf %614, %32 : vector<32x128xf32>
    %616 = arith.addf %615, %13 : vector<32x128xf32>
    %cst_267 = arith.constant 0.000000e+00 : f32
    %617 = vector.broadcast %cst_267 : f32 to vector<32x128xf32>
    %618 = arith.maximumf %616, %617 : vector<32x128xf32>
    %cst_268 = arith.constant dense<0.000000e+00> : vector<32x128xf32>
    %619 = tpu.matmul %39, %618, %cst_268 {dimension_numbers = #tpu.dot_dimension_numbers<[1], [0], [0], [1], [0, 0, 1, 1], [], []>} : vector<32x32xf32>, vector<32x128xf32>, vector<32x128xf32> -> vector<32x128xf32>
    %620 = arith.addf %619, %35 : vector<32x128xf32>
    %cst_269 = arith.constant 0.000000e+00 : f32
    %621 = vector.broadcast %cst_269 : f32 to vector<32x128xf32>
    %622 = arith.maximumf %620, %621 : vector<32x128xf32>
    %cst_270 = arith.constant dense<0.000000e+00> : vector<1x128xf32>
    %623 = tpu.matmul %40, %622, %cst_270 {dimension_numbers = #tpu.dot_dimension_numbers<[1], [0], [0], [1], [0, 0, 1, 1], [], []>} : vector<1x32xf32>, vector<32x128xf32>, vector<1x128xf32> -> vector<1x128xf32>
    %624 = arith.addf %623, %38 : vector<1x128xf32>
    %cst_271 = arith.constant 0.000000e+00 : f32
    %625 = vector.broadcast %cst_271 : f32 to vector<1x128xf32>
    %626 = arith.cmpf ogt, %624, %625 : vector<1x128xf32>
    %627 = math.exp %624 : vector<1x128xf32>
    %cst_272 = arith.constant 1.000000e+00 : f32
    %628 = vector.broadcast %cst_272 : f32 to vector<1x128xf32>
    %629 = arith.subf %627, %628 : vector<1x128xf32>
    %630 = arith.select %626, %624, %629 : vector<1x128xi1>, vector<1x128xf32>
    %cst_273 = arith.constant 1.000000e+00 : f32
    %631 = vector.broadcast %cst_273 : f32 to vector<1x128xf32>
    %632 = arith.addf %630, %631 : vector<1x128xf32>
    %cst_274 = arith.constant 0.0272469614 : f32
    %633 = vector.broadcast %cst_274 : f32 to vector<1x128xf32>
    %634 = arith.mulf %633, %632 : vector<1x128xf32>
    %635 = arith.addf %613, %634 : vector<1x128xf32>
    %cst_275 = arith.constant 0.0590393543 : f32
    %636 = vector.broadcast %cst_275 : f32 to vector<32x128xf32>
    %637 = arith.mulf %636, %32 : vector<32x128xf32>
    %638 = arith.addf %637, %13 : vector<32x128xf32>
    %cst_276 = arith.constant 0.000000e+00 : f32
    %639 = vector.broadcast %cst_276 : f32 to vector<32x128xf32>
    %640 = arith.maximumf %638, %639 : vector<32x128xf32>
    %cst_277 = arith.constant dense<0.000000e+00> : vector<32x128xf32>
    %641 = tpu.matmul %39, %640, %cst_277 {dimension_numbers = #tpu.dot_dimension_numbers<[1], [0], [0], [1], [0, 0, 1, 1], [], []>} : vector<32x32xf32>, vector<32x128xf32>, vector<32x128xf32> -> vector<32x128xf32>
    %642 = arith.addf %641, %35 : vector<32x128xf32>
    %cst_278 = arith.constant 0.000000e+00 : f32
    %643 = vector.broadcast %cst_278 : f32 to vector<32x128xf32>
    %644 = arith.maximumf %642, %643 : vector<32x128xf32>
    %cst_279 = arith.constant dense<0.000000e+00> : vector<1x128xf32>
    %645 = tpu.matmul %40, %644, %cst_279 {dimension_numbers = #tpu.dot_dimension_numbers<[1], [0], [0], [1], [0, 0, 1, 1], [], []>} : vector<1x32xf32>, vector<32x128xf32>, vector<1x128xf32> -> vector<1x128xf32>
    %646 = arith.addf %645, %38 : vector<1x128xf32>
    %cst_280 = arith.constant 0.000000e+00 : f32
    %647 = vector.broadcast %cst_280 : f32 to vector<1x128xf32>
    %648 = arith.cmpf ogt, %646, %647 : vector<1x128xf32>
    %649 = math.exp %646 : vector<1x128xf32>
    %cst_281 = arith.constant 1.000000e+00 : f32
    %650 = vector.broadcast %cst_281 : f32 to vector<1x128xf32>
    %651 = arith.subf %649, %650 : vector<1x128xf32>
    %652 = arith.select %648, %646, %651 : vector<1x128xi1>, vector<1x128xf32>
    %cst_282 = arith.constant 1.000000e+00 : f32
    %653 = vector.broadcast %cst_282 : f32 to vector<1x128xf32>
    %654 = arith.addf %652, %653 : vector<1x128xf32>
    %cst_283 = arith.constant 0.0231619291 : f32
    %655 = vector.broadcast %cst_283 : f32 to vector<1x128xf32>
    %656 = arith.mulf %655, %654 : vector<1x128xf32>
    %657 = arith.addf %635, %656 : vector<1x128xf32>
    %cst_284 = arith.constant 0.0380602479 : f32
    %658 = vector.broadcast %cst_284 : f32 to vector<32x128xf32>
    %659 = arith.mulf %658, %32 : vector<32x128xf32>
    %660 = arith.addf %659, %13 : vector<32x128xf32>
    %cst_285 = arith.constant 0.000000e+00 : f32
    %661 = vector.broadcast %cst_285 : f32 to vector<32x128xf32>
    %662 = arith.maximumf %660, %661 : vector<32x128xf32>
    %cst_286 = arith.constant dense<0.000000e+00> : vector<32x128xf32>
    %663 = tpu.matmul %39, %662, %cst_286 {dimension_numbers = #tpu.dot_dimension_numbers<[1], [0], [0], [1], [0, 0, 1, 1], [], []>} : vector<32x32xf32>, vector<32x128xf32>, vector<32x128xf32> -> vector<32x128xf32>
    %664 = arith.addf %663, %35 : vector<32x128xf32>
    %cst_287 = arith.constant 0.000000e+00 : f32
    %665 = vector.broadcast %cst_287 : f32 to vector<32x128xf32>
    %666 = arith.maximumf %664, %665 : vector<32x128xf32>
    %cst_288 = arith.constant dense<0.000000e+00> : vector<1x128xf32>
    %667 = tpu.matmul %40, %666, %cst_288 {dimension_numbers = #tpu.dot_dimension_numbers<[1], [0], [0], [1], [0, 0, 1, 1], [], []>} : vector<1x32xf32>, vector<32x128xf32>, vector<1x128xf32> -> vector<1x128xf32>
    %668 = arith.addf %667, %38 : vector<1x128xf32>
    %cst_289 = arith.constant 0.000000e+00 : f32
    %669 = vector.broadcast %cst_289 : f32 to vector<1x128xf32>
    %670 = arith.cmpf ogt, %668, %669 : vector<1x128xf32>
    %671 = math.exp %668 : vector<1x128xf32>
    %cst_290 = arith.constant 1.000000e+00 : f32
    %672 = vector.broadcast %cst_290 : f32 to vector<1x128xf32>
    %673 = arith.subf %671, %672 : vector<1x128xf32>
    %674 = arith.select %670, %668, %673 : vector<1x128xi1>, vector<1x128xf32>
    %cst_291 = arith.constant 1.000000e+00 : f32
    %675 = vector.broadcast %cst_291 : f32 to vector<1x128xf32>
    %676 = arith.addf %674, %675 : vector<1x128xf32>
    %cst_292 = arith.constant 0.018766623 : f32
    %677 = vector.broadcast %cst_292 : f32 to vector<1x128xf32>
    %678 = arith.mulf %677, %676 : vector<1x128xf32>
    %679 = arith.addf %657, %678 : vector<1x128xf32>
    %cst_293 = arith.constant 0.0215298235 : f32
    %680 = vector.broadcast %cst_293 : f32 to vector<32x128xf32>
    %681 = arith.mulf %680, %32 : vector<32x128xf32>
    %682 = arith.addf %681, %13 : vector<32x128xf32>
    %cst_294 = arith.constant 0.000000e+00 : f32
    %683 = vector.broadcast %cst_294 : f32 to vector<32x128xf32>
    %684 = arith.maximumf %682, %683 : vector<32x128xf32>
    %cst_295 = arith.constant dense<0.000000e+00> : vector<32x128xf32>
    %685 = tpu.matmul %39, %684, %cst_295 {dimension_numbers = #tpu.dot_dimension_numbers<[1], [0], [0], [1], [0, 0, 1, 1], [], []>} : vector<32x32xf32>, vector<32x128xf32>, vector<32x128xf32> -> vector<32x128xf32>
    %686 = arith.addf %685, %35 : vector<32x128xf32>
    %cst_296 = arith.constant 0.000000e+00 : f32
    %687 = vector.broadcast %cst_296 : f32 to vector<32x128xf32>
    %688 = arith.maximumf %686, %687 : vector<32x128xf32>
    %cst_297 = arith.constant dense<0.000000e+00> : vector<1x128xf32>
    %689 = tpu.matmul %40, %688, %cst_297 {dimension_numbers = #tpu.dot_dimension_numbers<[1], [0], [0], [1], [0, 0, 1, 1], [], []>} : vector<1x32xf32>, vector<32x128xf32>, vector<1x128xf32> -> vector<1x128xf32>
    %690 = arith.addf %689, %38 : vector<1x128xf32>
    %cst_298 = arith.constant 0.000000e+00 : f32
    %691 = vector.broadcast %cst_298 : f32 to vector<1x128xf32>
    %692 = arith.cmpf ogt, %690, %691 : vector<1x128xf32>
    %693 = math.exp %690 : vector<1x128xf32>
    %cst_299 = arith.constant 1.000000e+00 : f32
    %694 = vector.broadcast %cst_299 : f32 to vector<1x128xf32>
    %695 = arith.subf %693, %694 : vector<1x128xf32>
    %696 = arith.select %692, %690, %695 : vector<1x128xi1>, vector<1x128xf32>
    %cst_300 = arith.constant 1.000000e+00 : f32
    %697 = vector.broadcast %cst_300 : f32 to vector<1x128xf32>
    %698 = arith.addf %696, %697 : vector<1x128xf32>
    %cst_301 = arith.constant 0.014259506 : f32
    %699 = vector.broadcast %cst_301 : f32 to vector<1x128xf32>
    %700 = arith.mulf %699, %698 : vector<1x128xf32>
    %701 = arith.addf %679, %700 : vector<1x128xf32>
    %cst_302 = arith.constant 0.00960737466 : f32
    %702 = vector.broadcast %cst_302 : f32 to vector<32x128xf32>
    %703 = arith.mulf %702, %32 : vector<32x128xf32>
    %704 = arith.addf %703, %13 : vector<32x128xf32>
    %cst_303 = arith.constant 0.000000e+00 : f32
    %705 = vector.broadcast %cst_303 : f32 to vector<32x128xf32>
    %706 = arith.maximumf %704, %705 : vector<32x128xf32>
    %cst_304 = arith.constant dense<0.000000e+00> : vector<32x128xf32>
    %707 = tpu.matmul %39, %706, %cst_304 {dimension_numbers = #tpu.dot_dimension_numbers<[1], [0], [0], [1], [0, 0, 1, 1], [], []>} : vector<32x32xf32>, vector<32x128xf32>, vector<32x128xf32> -> vector<32x128xf32>
    %708 = arith.addf %707, %35 : vector<32x128xf32>
    %cst_305 = arith.constant 0.000000e+00 : f32
    %709 = vector.broadcast %cst_305 : f32 to vector<32x128xf32>
    %710 = arith.maximumf %708, %709 : vector<32x128xf32>
    %cst_306 = arith.constant dense<0.000000e+00> : vector<1x128xf32>
    %711 = tpu.matmul %40, %710, %cst_306 {dimension_numbers = #tpu.dot_dimension_numbers<[1], [0], [0], [1], [0, 0, 1, 1], [], []>} : vector<1x32xf32>, vector<32x128xf32>, vector<1x128xf32> -> vector<1x128xf32>
    %712 = arith.addf %711, %38 : vector<1x128xf32>
    %cst_307 = arith.constant 0.000000e+00 : f32
    %713 = vector.broadcast %cst_307 : f32 to vector<1x128xf32>
    %714 = arith.cmpf ogt, %712, %713 : vector<1x128xf32>
    %715 = math.exp %712 : vector<1x128xf32>
    %cst_308 = arith.constant 1.000000e+00 : f32
    %716 = vector.broadcast %cst_308 : f32 to vector<1x128xf32>
    %717 = arith.subf %715, %716 : vector<1x128xf32>
    %718 = arith.select %714, %712, %717 : vector<1x128xi1>, vector<1x128xf32>
    %cst_309 = arith.constant 1.000000e+00 : f32
    %719 = vector.broadcast %cst_309 : f32 to vector<1x128xf32>
    %720 = arith.addf %718, %719 : vector<1x128xf32>
    %cst_310 = arith.constant 0.00958657544 : f32
    %721 = vector.broadcast %cst_310 : f32 to vector<1x128xf32>
    %722 = arith.mulf %721, %720 : vector<1x128xf32>
    %723 = arith.addf %701, %722 : vector<1x128xf32>
    %cst_311 = arith.constant 0.00240764022 : f32
    %724 = vector.broadcast %cst_311 : f32 to vector<32x128xf32>
    %725 = arith.mulf %724, %32 : vector<32x128xf32>
    %726 = arith.addf %725, %13 : vector<32x128xf32>
    %cst_312 = arith.constant 0.000000e+00 : f32
    %727 = vector.broadcast %cst_312 : f32 to vector<32x128xf32>
    %728 = arith.maximumf %726, %727 : vector<32x128xf32>
    %cst_313 = arith.constant dense<0.000000e+00> : vector<32x128xf32>
    %729 = tpu.matmul %39, %728, %cst_313 {dimension_numbers = #tpu.dot_dimension_numbers<[1], [0], [0], [1], [0, 0, 1, 1], [], []>} : vector<32x32xf32>, vector<32x128xf32>, vector<32x128xf32> -> vector<32x128xf32>
    %730 = arith.addf %729, %35 : vector<32x128xf32>
    %cst_314 = arith.constant 0.000000e+00 : f32
    %731 = vector.broadcast %cst_314 : f32 to vector<32x128xf32>
    %732 = arith.maximumf %730, %731 : vector<32x128xf32>
    %cst_315 = arith.constant dense<0.000000e+00> : vector<1x128xf32>
    %733 = tpu.matmul %40, %732, %cst_315 {dimension_numbers = #tpu.dot_dimension_numbers<[1], [0], [0], [1], [0, 0, 1, 1], [], []>} : vector<1x32xf32>, vector<32x128xf32>, vector<1x128xf32> -> vector<1x128xf32>
    %734 = arith.addf %733, %38 : vector<1x128xf32>
    %cst_316 = arith.constant 0.000000e+00 : f32
    %735 = vector.broadcast %cst_316 : f32 to vector<1x128xf32>
    %736 = arith.cmpf ogt, %734, %735 : vector<1x128xf32>
    %737 = math.exp %734 : vector<1x128xf32>
    %cst_317 = arith.constant 1.000000e+00 : f32
    %738 = vector.broadcast %cst_317 : f32 to vector<1x128xf32>
    %739 = arith.subf %737, %738 : vector<1x128xf32>
    %740 = arith.select %736, %734, %739 : vector<1x128xi1>, vector<1x128xf32>
    %cst_318 = arith.constant 1.000000e+00 : f32
    %741 = vector.broadcast %cst_318 : f32 to vector<1x128xf32>
    %742 = arith.addf %740, %741 : vector<1x128xf32>
    %cst_319 = arith.constant 0.00472714659 : f32
    %743 = vector.broadcast %cst_319 : f32 to vector<1x128xf32>
    %744 = arith.mulf %743, %742 : vector<1x128xf32>
    %745 = arith.addf %723, %744 : vector<1x128xf32>
    %cst_320 = arith.constant 0.000000e+00 : f32
    %746 = vector.broadcast %cst_320 : f32 to vector<32x128xf32>
    %747 = arith.mulf %746, %32 : vector<32x128xf32>
    %748 = arith.addf %747, %13 : vector<32x128xf32>
    %cst_321 = arith.constant 0.000000e+00 : f32
    %749 = vector.broadcast %cst_321 : f32 to vector<32x128xf32>
    %750 = arith.maximumf %748, %749 : vector<32x128xf32>
    %cst_322 = arith.constant dense<0.000000e+00> : vector<32x128xf32>
    %751 = tpu.matmul %39, %750, %cst_322 {dimension_numbers = #tpu.dot_dimension_numbers<[1], [0], [0], [1], [0, 0, 1, 1], [], []>} : vector<32x32xf32>, vector<32x128xf32>, vector<32x128xf32> -> vector<32x128xf32>
    %752 = arith.addf %751, %35 : vector<32x128xf32>
    %cst_323 = arith.constant 0.000000e+00 : f32
    %753 = vector.broadcast %cst_323 : f32 to vector<32x128xf32>
    %754 = arith.maximumf %752, %753 : vector<32x128xf32>
    %cst_324 = arith.constant dense<0.000000e+00> : vector<1x128xf32>
    %755 = tpu.matmul %40, %754, %cst_324 {dimension_numbers = #tpu.dot_dimension_numbers<[1], [0], [0], [1], [0, 0, 1, 1], [], []>} : vector<1x32xf32>, vector<32x128xf32>, vector<1x128xf32> -> vector<1x128xf32>
    %756 = arith.addf %755, %38 : vector<1x128xf32>
    %cst_325 = arith.constant 0.000000e+00 : f32
    %757 = vector.broadcast %cst_325 : f32 to vector<1x128xf32>
    %758 = arith.cmpf ogt, %756, %757 : vector<1x128xf32>
    %759 = math.exp %756 : vector<1x128xf32>
    %cst_326 = arith.constant 1.000000e+00 : f32
    %760 = vector.broadcast %cst_326 : f32 to vector<1x128xf32>
    %761 = arith.subf %759, %760 : vector<1x128xf32>
    %762 = arith.select %758, %756, %761 : vector<1x128xi1>, vector<1x128xf32>
    %cst_327 = arith.constant 1.000000e+00 : f32
    %763 = vector.broadcast %cst_327 : f32 to vector<1x128xf32>
    %764 = arith.addf %762, %763 : vector<1x128xf32>
    %cst_328 = arith.constant 4.73484863E-4 : f32
    %765 = vector.broadcast %cst_328 : f32 to vector<1x128xf32>
    %766 = arith.mulf %765, %764 : vector<1x128xf32>
    %767 = arith.addf %745, %766 : vector<1x128xf32>
    %768 = arith.mulf %767, %0 : vector<1x128xf32>
    %769 = arith.mulf %28, %768 : vector<1x128xf32>
    %770 = arith.addf %769, %26 : vector<1x128xf32>
    %c0_329 = arith.constant 0 : index
    %c0_330 = arith.constant 0 : index
    %771 = vector.load %arg15[%c0_329, %c0_330] : memref<1x128xf32, #tpu.memory_space<vmem>>, vector<1x128xf32>
    tpu.vector_store %arg15[%c0_329, %c0_330], %770 {strides = array<i32>} : memref<1x128xf32, #tpu.memory_space<vmem>>, vector<1x128xf32>,
    return
  }
  func.func @transform_0(%arg0: i32) -> (i32, i32) {
    %c0_i32 = arith.constant 0 : i32
    %c0_i32_0 = arith.constant 0 : i32
    return %c0_i32, %arg0 : i32, i32
  }
  func.func @transform_1(%arg0: i32) -> (i32, i32) {
    %c0_i32 = arith.constant 0 : i32
    %c0_i32_0 = arith.constant 0 : i32
    return %c0_i32, %arg0 : i32, i32
  }
  func.func @transform_2(%arg0: i32) -> (i32, i32) {
    %c0_i32 = arith.constant 0 : i32
    %c0_i32_0 = arith.constant 0 : i32
    %c0_i32_1 = arith.constant 0 : i32
    return %c0_i32, %c0_i32_0 : i32, i32
  }
  func.func @transform_3(%arg0: i32) -> (i32, i32) {
    %c0_i32 = arith.constant 0 : i32
    %c0_i32_0 = arith.constant 0 : i32
    %c0_i32_1 = arith.constant 0 : i32
    return %c0_i32, %c0_i32_0 : i32, i32
  }
  func.func @transform_4(%arg0: i32) -> (i32, i32) {
    %c0_i32 = arith.constant 0 : i32
    %c0_i32_0 = arith.constant 0 : i32
    %c0_i32_1 = arith.constant 0 : i32
    return %c0_i32, %c0_i32_0 : i32, i32
  }
  func.func @transform_5(%arg0: i32) -> (i32, i32) {
    %c0_i32 = arith.constant 0 : i32
    %c0_i32_0 = arith.constant 0 : i32
    %c0_i32_1 = arith.constant 0 : i32
    return %c0_i32, %c0_i32_0 : i32, i32
  }
  func.func @transform_6(%arg0: i32) -> (i32, i32) {
    %c0_i32 = arith.constant 0 : i32
    %c0_i32_0 = arith.constant 0 : i32
    %c0_i32_1 = arith.constant 0 : i32
    return %c0_i32, %c0_i32_0 : i32, i32
  }
  func.func @transform_7(%arg0: i32) -> (i32, i32) {
    %c0_i32 = arith.constant 0 : i32
    %c0_i32_0 = arith.constant 0 : i32
    %c0_i32_1 = arith.constant 0 : i32
    return %c0_i32, %c0_i32_0 : i32, i32
  }
  func.func @transform_8(%arg0: i32) -> (i32, i32) {
    %c0_i32 = arith.constant 0 : i32
    %c0_i32_0 = arith.constant 0 : i32
    %c0_i32_1 = arith.constant 0 : i32
    return %c0_i32, %c0_i32_0 : i32, i32
  }
  func.func @transform_9(%arg0: i32) -> (i32, i32) {
    %c0_i32 = arith.constant 0 : i32
    %c0_i32_0 = arith.constant 0 : i32
    %c0_i32_1 = arith.constant 0 : i32
    return %c0_i32, %c0_i32_0 : i32, i32
  }
  func.func @transform_10(%arg0: i32) -> (i32, i32) {
    %c0_i32 = arith.constant 0 : i32
    %c0_i32_0 = arith.constant 0 : i32
    %c0_i32_1 = arith.constant 0 : i32
    return %c0_i32, %c0_i32_0 : i32, i32
  }
  func.func @transform_11(%arg0: i32) -> (i32, i32) {
    %c0_i32 = arith.constant 0 : i32
    %c0_i32_0 = arith.constant 0 : i32
    %c0_i32_1 = arith.constant 0 : i32
    return %c0_i32, %c0_i32_0 : i32, i32
  }
  func.func @transform_12(%arg0: i32) -> (i32, i32) {
    %c0_i32 = arith.constant 0 : i32
    %c0_i32_0 = arith.constant 0 : i32
    %c0_i32_1 = arith.constant 0 : i32
    return %c0_i32, %c0_i32_0 : i32, i32
  }
  func.func @transform_13(%arg0: i32) -> (i32, i32) {
    %c0_i32 = arith.constant 0 : i32
    %c0_i32_0 = arith.constant 0 : i32
    %c0_i32_1 = arith.constant 0 : i32
    return %c0_i32, %c0_i32_0 : i32, i32
  }
  func.func @transform_14(%arg0: i32) -> (i32, i32) {
    %c0_i32 = arith.constant 0 : i32
    %c0_i32_0 = arith.constant 0 : i32
    return %c0_i32, %arg0 : i32, i32
  }
}

</mosaic_0001>

<llo_original>
// kernel: tpu_custom_call.1
$region0: #{tpu_custom_call.1}
  #allocation0 [shape = 'u32[]', space=smem, size = 0x4, offset = 0x4, fixed_abs, tag = 'smem constant byte address 0x4 - core index']
  #allocation1 [shape = 'u32[72,128]{1,0:T(1,128)}', space=vmem, size = 0x9000, scoped, tag = 'internal scratch']
  #allocation2 [shape = 'f32[1,1]{1,0:T(1,128)S(1)}', space=vmem, size = 0x200, scoped, tag = 'scoped memory for tpu_custom_call.1']
  %s0 = inlined_call_operand.vmem [shape: f32[1,128], index: 0, kind: input, shape index: {}]
  %s1 = inlined_call_operand.vmem [shape: f32[3,128], index: 1, kind: input, shape index: {}]
  %s2 = inlined_call_operand.vmem [shape: f32[64,3], index: 2, kind: input, shape index: {}]
  %s3 = inlined_call_operand.vmem [shape: f32[32,1], index: 3, kind: input, shape index: {}]
  %s4 = inlined_call_operand.vmem [shape: f32[32,1], index: 4, kind: input, shape index: {}]
  %s5 = inlined_call_operand.vmem [shape: f32[32,1], index: 5, kind: input, shape index: {}]
  %s6 = inlined_call_operand.vmem [shape: f32[32,32], index: 6, kind: input, shape index: {}]
  %s7 = inlined_call_operand.vmem [shape: f32[32,1], index: 7, kind: input, shape index: {}]
  %s8 = inlined_call_operand.vmem [shape: f32[1,32], index: 8, kind: input, shape index: {}]
  %s9 = inlined_call_operand.<no memory space> [shape: f32[1,1], index: 9, kind: input, shape index: {}]
  %s10 = inlined_call_operand.vmem [shape: f32[32,32], index: 10, kind: input, shape index: {}]
  %s11 = inlined_call_operand.vmem [shape: f32[32,1], index: 11, kind: input, shape index: {}]
  %s12 = inlined_call_operand.vmem [shape: f32[2,32], index: 12, kind: input, shape index: {}]
  %s13 = inlined_call_operand.vmem [shape: f32[2,1], index: 13, kind: input, shape index: {}]
  %s14 = inlined_call_operand.hbm [shape: f32[1,128], index: 14, kind: output, shape index: {}]
  %s15 = sld [smem:[#allocation0]]
  $region66: #{tpu_custom_call.1} parent=0
    _
  %s17 = ssub.s32 1, %s15
  %s18 = scalar_select 0, %s17, %s15
  %v19 = vstv %s9
  %20 = vst [vmem:[#allocation2] sm:$0x1] %v19
  $region1: #{tpu_custom_call.1} parent=0
    #allocation3 [shape = 'u8[512]{0}', space=vmem, size = 0x400, scoped, tag = 'output window, operand 0, single buffered']
    #allocation4 [shape = 's32[1]{0}', space=sflag, size = 0x4, scoped, tag = 'scoped memory for tpu_custom_call.1']
    %21 = vsyncpa [#allocation4], 0
    // Predicated region
    $region2: #{tpu_custom_call.1} parent=1 // pred_check
      _
    $region3: #{tpu_custom_call.1} parent=1 // pred_check_branch
      %23 = sbr.rel (0) target = $region5
    $region4: #{tpu_custom_call.1} parent=1 // pred_region
      _
    $region5: #{tpu_custom_call.1} parent=1 // pred_fallthru
      _
    // Predicated region
    $region6: #{tpu_custom_call.1} parent=1 // pred_check
      _
    $region7: #{tpu_custom_call.1} parent=1 // pred_check_branch
      %25 = sbr.rel (0) target = $region9
    $region8: #{tpu_custom_call.1} parent=1 // pred_region
      _
    $region9: #{tpu_custom_call.1} parent=1 // pred_fallthru
      _
    // Predicated region
    $region10: #{tpu_custom_call.1} parent=1 // pred_check
      _
    $region11: #{tpu_custom_call.1} parent=1 // pred_check_branch
      %27 = sbr.rel (0) target = $region13
    $region12: #{tpu_custom_call.1} parent=1 // pred_region
      _
    $region13: #{tpu_custom_call.1} parent=1 // pred_fallthru
      _
    // Predicated region
    $region14: #{tpu_custom_call.1} parent=1 // pred_check
      _
    $region15: #{tpu_custom_call.1} parent=1 // pred_check_branch
      %29 = sbr.rel (0) target = $region17
    $region16: #{tpu_custom_call.1} parent=1 // pred_region
      _
    $region17: #{tpu_custom_call.1} parent=1 // pred_fallthru
      _
    // Predicated region
    $region18: #{tpu_custom_call.1} parent=1 // pred_check
      _
    $region19: #{tpu_custom_call.1} parent=1 // pred_check_branch
      %31 = sbr.rel (0) target = $region21
    $region20: #{tpu_custom_call.1} parent=1 // pred_region
      _
    $region21: #{tpu_custom_call.1} parent=1 // pred_fallthru
      _
    // Predicated region
    $region22: #{tpu_custom_call.1} parent=1 // pred_check
      _
    $region23: #{tpu_custom_call.1} parent=1 // pred_check_branch
      %33 = sbr.rel (0) target = $region25
    $region24: #{tpu_custom_call.1} parent=1 // pred_region
      _
    $region25: #{tpu_custom_call.1} parent=1 // pred_fallthru
      _
    // Predicated region
    $region26: #{tpu_custom_call.1} parent=1 // pred_check
      _
    $region27: #{tpu_custom_call.1} parent=1 // pred_check_branch
      %35 = sbr.rel (0) target = $region29
    $region28: #{tpu_custom_call.1} parent=1 // pred_region
      _
    $region29: #{tpu_custom_call.1} parent=1 // pred_fallthru
      _
    // Predicated region
    $region30: #{tpu_custom_call.1} parent=1 // pred_check
      _
    $region31: #{tpu_custom_call.1} parent=1 // pred_check_branch
      %37 = sbr.rel (0) target = $region33
    $region32: #{tpu_custom_call.1} parent=1 // pred_region
      _
    $region33: #{tpu_custom_call.1} parent=1 // pred_fallthru
      _
    // Predicated region
    $region34: #{tpu_custom_call.1} parent=1 // pred_check
      _
    $region35: #{tpu_custom_call.1} parent=1 // pred_check_branch
      %39 = sbr.rel (0) target = $region37
    $region36: #{tpu_custom_call.1} parent=1 // pred_region
      _
    $region37: #{tpu_custom_call.1} parent=1 // pred_fallthru
      _
    // Predicated region
    $region38: #{tpu_custom_call.1} parent=1 // pred_check
      _
    $region39: #{tpu_custom_call.1} parent=1 // pred_check_branch
      %41 = sbr.rel (0) target = $region41
    $region40: #{tpu_custom_call.1} parent=1 // pred_region
      _
    $region41: #{tpu_custom_call.1} parent=1 // pred_fallthru
      _
    // Predicated region
    $region42: #{tpu_custom_call.1} parent=1 // pred_check
      _
    $region43: #{tpu_custom_call.1} parent=1 // pred_check_branch
      %43 = sbr.rel (0) target = $region45
    $region44: #{tpu_custom_call.1} parent=1 // pred_region
      _
    $region45: #{tpu_custom_call.1} parent=1 // pred_fallthru
      _
    // Predicated region
    $region46: #{tpu_custom_call.1} parent=1 // pred_check
      _
    $region47: #{tpu_custom_call.1} parent=1 // pred_check_branch
      %45 = sbr.rel (0) target = $region49
    $region48: #{tpu_custom_call.1} parent=1 // pred_region
      _
    $region49: #{tpu_custom_call.1} parent=1 // pred_fallthru
      _
    // Predicated region
    $region50: #{tpu_custom_call.1} parent=1 // pred_check
      _
    $region51: #{tpu_custom_call.1} parent=1 // pred_check_branch
      %47 = sbr.rel (0) target = $region53
    $region52: #{tpu_custom_call.1} parent=1 // pred_region
      _
    $region53: #{tpu_custom_call.1} parent=1 // pred_fallthru
      _
    // Predicated region
    $region54: #{tpu_custom_call.1} parent=1 // pred_check
      _
    $region55: #{tpu_custom_call.1} parent=1 // pred_check_branch
      %49 = sbr.rel (0) target = $region57
    $region56: #{tpu_custom_call.1} parent=1 // pred_region
      _
    $region57: #{tpu_custom_call.1} parent=1 // pred_fallthru
      _
    %v50 = vld [vmem:[%s0] sm:$0x1]
    %v51 = vld [vmem:[%s1] sm:$0x7]
    %v52 = vld [vmem:[%s2] sm:$0xff]
    %v53 = vld [vmem:[%s2 + $0x8] sm:$0xff]
    %v54 = vld [vmem:[%s2 + $0x10] sm:$0xff]
    %v55 = vld [vmem:[%s2 + $0x18] sm:$0xff]
    %v56 = vld [vmem:[%s2 + $0x20] sm:$0xff]
    %v57 = vld [vmem:[%s2 + $0x28] sm:$0xff]
    %v58 = vld [vmem:[%s2 + $0x30] sm:$0xff]
    %v59 = vld [vmem:[%s2 + $0x38] sm:$0xff]
    %vm60 = vcmask 23552
    %v62 = vsel %vm60, %v52, 0
    %v65 = vsel %vm60, %v53, 0
    %v68 = vsel %vm60, %v54, 0
    %v71 = vsel %vm60, %v55, 0
    %v74 = vsel %vm60, %v56, 0
    %v77 = vsel %vm60, %v57, 0
    %v80 = vsel %vm60, %v58, 0
    %v83 = vsel %vm60, %v59, 0
    %vm85 = vcmask 1042432
    %v87 = vsel %vm85, %v51, 0
    %89 = vmatpush.msra.mxu0 0.0
    %90 = vmatpush.msra.mxu0 0.0
    %91 = vmatpush.msra.mxu0 0.0
    %92 = vmatpush.msra.mxu0 0.0
    %93 = vmatpush.msra.mxu0 0.0
    %94 = vmatpush.msra.mxu0 0.0
    %95 = vmatpush.msra.mxu0 0.0
    %96 = vmatpush.msra.mxu0 0.0
    %97 = vmatpush.msra.mxu0 0.0
    %98 = vmatpush.msra.mxu0 0.0
    %99 = vmatpush.msra.mxu0 0.0
    %100 = vmatpush.msra.mxu0 0.0
    %101 = vmatpush.msra.mxu0 0.0
    %102 = vmatpush.msra.mxu0 0.0
    %103 = vmatpush.msra.mxu0 0.0
    %104 = vmatpush.msra.mxu0 %v87
    %105 = vmatmul.f32.gmra.mxu0 %v62
    %v106 = vpop.f32.mrf.mxu0
    %v107 = vadd.f32 0.0, %v106
    %108 = vmatmul.f32.gmra.mxu0 %v65
    %v109 = vpop.f32.mrf.mxu0
    %v110 = vadd.f32 0.0, %v109
    %111 = vmatmul.f32.gmra.mxu0 %v68
    %v112 = vpop.f32.mrf.mxu0
    %v113 = vadd.f32 0.0, %v112
    %114 = vmatmul.f32.gmra.mxu0 %v71
    %v115 = vpop.f32.mrf.mxu0
    %v116 = vadd.f32 0.0, %v115
    %117 = vmatmul.f32.gmra.mxu0 %v74
    %v118 = vpop.f32.mrf.mxu0
    %v119 = vadd.f32 0.0, %v118
    %120 = vmatmul.f32.gmra.mxu0 %v77
    %v121 = vpop.f32.mrf.mxu0
    %v122 = vadd.f32 0.0, %v121
    %123 = vmatmul.f32.gmra.mxu0 %v80
    %v124 = vpop.f32.mrf.mxu0
    %v125 = vadd.f32 0.0, %v124
    %126 = vmatmul.f32.gmra.mxu0 %v83
    %v127 = vpop.f32.mrf.mxu0
    %v128 = vadd.f32 0.0, %v127
    %129 = vdwg.mxu0
    %v130 = vld [vmem:[%s5] sm:$0xff]
    %v131 = vld [vmem:[%s5 + $0x8] sm:$0xff]
    %v132 = vld [vmem:[%s5 + $0x10] sm:$0xff]
    %v133 = vld [vmem:[%s5 + $0x18] sm:$0xff]
    %135 = vset.pattern.permute.xlu0 0
    %136 = vperm.xlu0 %135, %v130
    %v137 = vpop.permute.xlu0 %136
    %140 = vset.pattern.permute.xlu0 0
    %141 = vperm.xlu0 %140, %v131
    %v142 = vpop.permute.xlu0 %141
    %145 = vset.pattern.permute.xlu0 0
    %146 = vperm.xlu0 %145, %v132
    %v147 = vpop.permute.xlu0 %146
    %150 = vset.pattern.permute.xlu0 0
    %151 = vperm.xlu0 %150, %v133
    %v152 = vpop.permute.xlu0 %151
    %v154 = vadd.f32 %v107, %v137
    %v155 = vadd.f32 %v110, %v142
    %v156 = vadd.f32 %v113, %v147
    %v157 = vadd.f32 %v116, %v152
    %v158 = vmax.f32 %v154, 0.0
    %v159 = vmax.f32 %v155, 0.0
    %v160 = vmax.f32 %v156, 0.0
    %v161 = vmax.f32 %v157, 0.0
    %v162 = vld [vmem:[%s4] sm:$0xff]
    %v163 = vld [vmem:[%s4 + $0x8] sm:$0xff]
    %v164 = vld [vmem:[%s4 + $0x10] sm:$0xff]
    %v165 = vld [vmem:[%s4 + $0x18] sm:$0xff]
    %167 = vset.pattern.permute.xlu0 0
    %168 = vperm.xlu0 %167, %v162
    %v169 = vpop.permute.xlu0 %168
    %172 = vset.pattern.permute.xlu0 0
    %173 = vperm.xlu0 %172, %v163
    %v174 = vpop.permute.xlu0 %173
    %177 = vset.pattern.permute.xlu0 0
    %178 = vperm.xlu0 %177, %v164
    %v179 = vpop.permute.xlu0 %178
    %182 = vset.pattern.permute.xlu0 0
    %183 = vperm.xlu0 %182, %v165
    %v184 = vpop.permute.xlu0 %183
    %v186 = vadd.f32 %v119, %v169
    %v187 = vadd.f32 %v122, %v174
    %v188 = vadd.f32 %v125, %v179
    %v189 = vadd.f32 %v128, %v184
    %v190 = vld [vmem:[%s10] sm:$0xff]
    %v191 = vld [vmem:[%s10 + $0x8] sm:$0xff]
    %v192 = vld [vmem:[%s10 + $0x10] sm:$0xff]
    %v193 = vld [vmem:[%s10 + $0x18] sm:$0xff]
    %v194 = vld [vmem:[%s11] sm:$0xff]
    %v195 = vld [vmem:[%s11 + $0x8] sm:$0xff]
    %v196 = vld [vmem:[%s11 + $0x10] sm:$0xff]
    %v197 = vld [vmem:[%s11 + $0x18] sm:$0xff]
    %199 = vset.pattern.permute.xlu0 0
    %200 = vperm.xlu0 %199, %v194
    %v201 = vpop.permute.xlu0 %200
    %204 = vset.pattern.permute.xlu0 0
    %205 = vperm.xlu0 %204, %v195
    %v206 = vpop.permute.xlu0 %205
    %209 = vset.pattern.permute.xlu0 0
    %210 = vperm.xlu0 %209, %v196
    %v211 = vpop.permute.xlu0 %210
    %214 = vset.pattern.permute.xlu0 0
    %215 = vperm.xlu0 %214, %v197
    %v216 = vpop.permute.xlu0 %215
    %vm218 = vcmask 261120
    %v220 = vsel %vm218, %v190, 0
    %v223 = vsel %vm218, %v191, 0
    %v226 = vsel %vm218, %v192, 0
    %v229 = vsel %vm218, %v193, 0
    %231 = vmatpush.msra.mxu0 0.0
    %232 = vmatpush.msra.mxu0 0.0
    %233 = vmatpush.msra.mxu0 0.0
    %234 = vmatpush.msra.mxu0 0.0
    %235 = vmatpush.msra.mxu0 0.0
    %236 = vmatpush.msra.mxu0 0.0
    %237 = vmatpush.msra.mxu0 0.0
    %238 = vmatpush.msra.mxu0 0.0
    %239 = vmatpush.msra.mxu0 0.0
    %240 = vmatpush.msra.mxu0 0.0
    %241 = vmatpush.msra.mxu0 0.0
    %242 = vmatpush.msra.mxu0 0.0
    %243 = vmatpush.msra.mxu0 %v161
    %244 = vmatpush.msra.mxu0 %v160
    %245 = vmatpush.msra.mxu0 %v159
    %246 = vmatpush.msra.mxu0 %v158
    %247 = vmatmul.f32.gmra.mxu0 %v220
    %v248 = vpop.f32.mrf.mxu0
    %v249 = vadd.f32 %v201, %v248
    %250 = vmatmul.f32.gmra.mxu0 %v223
    %v251 = vpop.f32.mrf.mxu0
    %v252 = vadd.f32 %v206, %v251
    %253 = vmatmul.f32.gmra.mxu0 %v226
    %v254 = vpop.f32.mrf.mxu0
    %v255 = vadd.f32 %v211, %v254
    %256 = vmatmul.f32.gmra.mxu0 %v229
    %v257 = vpop.f32.mrf.mxu0
    %v258 = vadd.f32 %v216, %v257
    %259 = vdwg.mxu0
    %v260 = vmax.f32 %v249, 0.0
    %v261 = vmax.f32 %v252, 0.0
    %v262 = vmax.f32 %v255, 0.0
    %v263 = vmax.f32 %v258, 0.0
    %v264 = vld [vmem:[%s12] sm:$0x3]
    %v265 = vld [vmem:[%s13] sm:$0x3]
    %267 = vset.pattern.permute.xlu0 0
    %268 = vperm.xlu0 %267, %v265
    %v269 = vpop.permute.xlu0 %268
    %v272 = vsel %vm218, %v264, 0
    %274 = vmatpush.msra.mxu0 0.0
    %275 = vmatpush.msra.mxu0 0.0
    %276 = vmatpush.msra.mxu0 0.0
    %277 = vmatpush.msra.mxu0 0.0
    %278 = vmatpush.msra.mxu0 0.0
    %279 = vmatpush.msra.mxu0 0.0
    %280 = vmatpush.msra.mxu0 0.0
    %281 = vmatpush.msra.mxu0 0.0
    %282 = vmatpush.msra.mxu0 0.0
    %283 = vmatpush.msra.mxu0 0.0
    %284 = vmatpush.msra.mxu0 0.0
    %285 = vmatpush.msra.mxu0 0.0
    %286 = vmatpush.msra.mxu0 %v263
    %287 = vmatpush.msra.mxu0 %v262
    %288 = vmatpush.msra.mxu0 %v261
    %289 = vmatpush.msra.mxu0 %v260
    %290 = vmatmul.f32.gmra.mxu0 %v272
    %v291 = vpop.f32.mrf.mxu0
    %v292 = vadd.f32 %v269, %v291
    %293 = vdwg.mxu0
    %v294 = vmul.f32 %v292, 1.442695
    %v295 = vpow.pop %v294
    %v296 = vld [vmem:[%s3] sm:$0xff]
    %v297 = vld [vmem:[%s3 + $0x8] sm:$0xff]
    %v298 = vld [vmem:[%s3 + $0x10] sm:$0xff]
    %v299 = vld [vmem:[%s3 + $0x18] sm:$0xff]
    %301 = vset.pattern.permute.xlu0 0
    %302 = vperm.xlu0 %301, %v296
    %v303 = vpop.permute.xlu0 %302
    %306 = vset.pattern.permute.xlu0 0
    %307 = vperm.xlu0 %306, %v297
    %v308 = vpop.permute.xlu0 %307
    %311 = vset.pattern.permute.xlu0 0
    %312 = vperm.xlu0 %311, %v298
    %v313 = vpop.permute.xlu0 %312
    %316 = vset.pattern.permute.xlu0 0
    %317 = vperm.xlu0 %316, %v299
    %v318 = vpop.permute.xlu0 %317
    %v321 = vperm.slane %v50, 0
    %v323 = vmul.f32 %v303, %v321
    %v324 = vmul.f32 %v308, %v321
    %v325 = vmul.f32 %v313, %v321
    %v326 = vmul.f32 %v318, %v321
    %v327 = vld [vmem:[%s7] sm:$0xff]
    %v328 = vld [vmem:[%s7 + $0x8] sm:$0xff]
    %v329 = vld [vmem:[%s7 + $0x10] sm:$0xff]
    %v330 = vld [vmem:[%s7 + $0x18] sm:$0xff]
    %332 = vset.pattern.permute.xlu0 0
    %333 = vperm.xlu0 %332, %v327
    %v334 = vpop.permute.xlu0 %333
    %337 = vset.pattern.permute.xlu0 0
    %338 = vperm.xlu0 %337, %v328
    %v339 = vpop.permute.xlu0 %338
    %342 = vset.pattern.permute.xlu0 0
    %343 = vperm.xlu0 %342, %v329
    %v344 = vpop.permute.xlu0 %343
    %347 = vset.pattern.permute.xlu0 0
    %348 = vperm.xlu0 %347, %v330
    %v349 = vpop.permute.xlu0 %348
    %v351 = vld [vmem:[#allocation2] sm:$0x1]
    %353 = vset.pattern.permute.xlu0 0
    %354 = vperm.xlu0 %353, %v351
    %v355 = vpop.permute.xlu0 %354
    %v357 = vperm.slane %v355, 0
    %v358 = vld [vmem:[%s6] sm:$0xff]
    %v359 = vld [vmem:[%s6 + $0x8] sm:$0xff]
    %v360 = vld [vmem:[%s6 + $0x10] sm:$0xff]
    %v361 = vld [vmem:[%s6 + $0x18] sm:$0xff]
    %v362 = vld [vmem:[%s8] sm:$0x1]
    %v363 = vadd.f32 %v323, %v186
    %v364 = vadd.f32 %v324, %v187
    %v365 = vadd.f32 %v325, %v188
    %v366 = vadd.f32 %v326, %v189
    %v367 = vmax.f32 %v363, 0.0
    %v368 = vmax.f32 %v364, 0.0
    %v369 = vmax.f32 %v365, 0.0
    %v370 = vmax.f32 %v366, 0.0
    %v372 = vsel %vm218, %v358, 0
    %v375 = vsel %vm218, %v359, 0
    %v378 = vsel %vm218, %v360, 0
    %v381 = vsel %vm218, %v361, 0
    %383 = vmatpush.msra.mxu0 0.0
    %384 = vmatpush.msra.mxu0 0.0
    %385 = vmatpush.msra.mxu0 0.0
    %386 = vmatpush.msra.mxu0 0.0
    %387 = vmatpush.msra.mxu0 0.0
    %388 = vmatpush.msra.mxu0 0.0
    %389 = vmatpush.msra.mxu0 0.0
    %390 = vmatpush.msra.mxu0 0.0
    %391 = vmatpush.msra.mxu0 0.0
    %392 = vmatpush.msra.mxu0 0.0
    %393 = vmatpush.msra.mxu0 0.0
    %394 = vmatpush.msra.mxu0 0.0
    %395 = vmatpush.msra.mxu0 %v370
    %396 = vmatpush.msra.mxu0 %v369
    %397 = vmatpush.msra.mxu0 %v368
    %398 = vmatpush.msra.mxu0 %v367
    %399 = vmatmul.f32.gmra.mxu0 %v372
    %v400 = vpop.f32.mrf.mxu0
    %v401 = vadd.f32 %v334, %v400
    %402 = vmatmul.f32.gmra.mxu0 %v375
    %v403 = vpop.f32.mrf.mxu0
    %v404 = vadd.f32 %v339, %v403
    %405 = vmatmul.f32.gmra.mxu0 %v378
    %v406 = vpop.f32.mrf.mxu0
    %v407 = vadd.f32 %v344, %v406
    %408 = vmatmul.f32.gmra.mxu0 %v381
    %v409 = vpop.f32.mrf.mxu0
    %v410 = vadd.f32 %v349, %v409
    %411 = vdwg.mxu0
    %v412 = vmax.f32 %v401, 0.0
    %v413 = vmax.f32 %v404, 0.0
    %v414 = vmax.f32 %v407, 0.0
    %v415 = vmax.f32 %v410, 0.0
    %v417 = vsel %vm218, %v362, 0
    %419 = vmatpush.msra.mxu0 0.0
    %420 = vmatpush.msra.mxu0 0.0
    %421 = vmatpush.msra.mxu0 0.0
    %422 = vmatpush.msra.mxu0 0.0
    %423 = vmatpush.msra.mxu0 0.0
    %424 = vmatpush.msra.mxu0 0.0
    %425 = vmatpush.msra.mxu0 0.0
    %426 = vmatpush.msra.mxu0 0.0
    %427 = vmatpush.msra.mxu0 0.0
    %428 = vmatpush.msra.mxu0 0.0
    %429 = vmatpush.msra.mxu0 0.0
    %430 = vmatpush.msra.mxu0 0.0
    %431 = vmatpush.msra.mxu0 %v415
    %432 = vmatpush.msra.mxu0 %v414
    %433 = vmatpush.msra.mxu0 %v413
    %434 = vmatpush.msra.mxu0 %v412
    %435 = vmatmul.f32.gmra.mxu0 %v417
    %v436 = vpop.f32.mrf.mxu0
    %v437 = vadd.f32 %v357, %v436
    %438 = vdwg.mxu0
    %vm439 = vcmp.gt.f32.partialorder %v437, 0.0
    %v440 = vmul.f32 %v437, 1.442695
    %v441 = vpow.pop %v440
    %v442 = vsub.f32 %v441, 1.0
    %v443 = vsel %vm439, %v437, %v442
    %v444 = vadd.f32 %v443, 1.0
    %v445 = vmul.f32 %v444, 0.00047348486
    %v446 = vadd.f32 %v445, 0.0
    %v447 = vmul.f32 %v323, 0.99759233
    %v448 = vmul.f32 %v324, 0.99759233
    %v449 = vmul.f32 %v325, 0.99759233
    %v450 = vmul.f32 %v326, 0.99759233
    %v451 = vadd.f32 %v447, %v186
    %v452 = vadd.f32 %v448, %v187
    %v453 = vadd.f32 %v449, %v188
    %v454 = vadd.f32 %v450, %v189
    %v455 = vmax.f32 %v451, 0.0
    %v456 = vmax.f32 %v452, 0.0
    %v457 = vmax.f32 %v453, 0.0
    %v458 = vmax.f32 %v454, 0.0
    %459 = vmatpush.msra.mxu0 0.0
    %460 = vmatpush.msra.mxu0 0.0
    %461 = vmatpush.msra.mxu0 0.0
    %462 = vmatpush.msra.mxu0 0.0
    %463 = vmatpush.msra.mxu0 0.0
    %464 = vmatpush.msra.mxu0 0.0
    %465 = vmatpush.msra.mxu0 0.0
    %466 = vmatpush.msra.mxu0 0.0
    %467 = vmatpush.msra.mxu0 0.0
    %468 = vmatpush.msra.mxu0 0.0
    %469 = vmatpush.msra.mxu0 0.0
    %470 = vmatpush.msra.mxu0 0.0
    %471 = vmatpush.msra.mxu0 %v458
    %472 = vmatpush.msra.mxu0 %v457
    %473 = vmatpush.msra.mxu0 %v456
    %474 = vmatpush.msra.mxu0 %v455
    %475 = vmatmul.f32.gmra.mxu0 %v372
    %v476 = vpop.f32.mrf.mxu0
    %v477 = vadd.f32 %v334, %v476
    %478 = vmatmul.f32.gmra.mxu0 %v375
    %v479 = vpop.f32.mrf.mxu0
    %v480 = vadd.f32 %v339, %v479
    %481 = vmatmul.f32.gmra.mxu0 %v378
    %v482 = vpop.f32.mrf.mxu0
    %v483 = vadd.f32 %v344, %v482
    %484 = vmatmul.f32.gmra.mxu0 %v381
    %v485 = vpop.f32.mrf.mxu0
    %v486 = vadd.f32 %v349, %v485
    %487 = vdwg.mxu0
    %v488 = vmax.f32 %v477, 0.0
    %v489 = vmax.f32 %v480, 0.0
    %v490 = vmax.f32 %v483, 0.0
    %v491 = vmax.f32 %v486, 0.0
    %492 = vmatpush.msra.mxu0 0.0
    %493 = vmatpush.msra.mxu0 0.0
    %494 = vmatpush.msra.mxu0 0.0
    %495 = vmatpush.msra.mxu0 0.0
    %496 = vmatpush.msra.mxu0 0.0
    %497 = vmatpush.msra.mxu0 0.0
    %498 = vmatpush.msra.mxu0 0.0
    %499 = vmatpush.msra.mxu0 0.0
    %500 = vmatpush.msra.mxu0 0.0
    %501 = vmatpush.msra.mxu0 0.0
    %502 = vmatpush.msra.mxu0 0.0
    %503 = vmatpush.msra.mxu0 0.0
    %504 = vmatpush.msra.mxu0 %v491
    %505 = vmatpush.msra.mxu0 %v490
    %506 = vmatpush.msra.mxu0 %v489
    %507 = vmatpush.msra.mxu0 %v488
    %508 = vmatmul.f32.gmra.mxu0 %v417
    %v509 = vpop.f32.mrf.mxu0
    %v510 = vadd.f32 %v357, %v509
    %511 = vdwg.mxu0
    %vm512 = vcmp.gt.f32.partialorder %v510, 0.0
    %v513 = vmul.f32 %v510, 1.442695
    %v514 = vpow.pop %v513
    %v515 = vsub.f32 %v514, 1.0
    %v516 = vsel %vm512, %v510, %v515
    %v517 = vadd.f32 %v516, 1.0
    %v518 = vmul.f32 %v517, 0.0047271466
    %v519 = vadd.f32 %v446, %v518
    %v520 = vmul.f32 %v323, 0.9903926
    %v521 = vmul.f32 %v324, 0.9903926
    %v522 = vmul.f32 %v325, 0.9903926
    %v523 = vmul.f32 %v326, 0.9903926
    %v524 = vadd.f32 %v520, %v186
    %v525 = vadd.f32 %v521, %v187
    %v526 = vadd.f32 %v522, %v188
    %v527 = vadd.f32 %v523, %v189
    %v528 = vmax.f32 %v524, 0.0
    %v529 = vmax.f32 %v525, 0.0
    %v530 = vmax.f32 %v526, 0.0
    %v531 = vmax.f32 %v527, 0.0
    %532 = vmatpush.msra.mxu0 0.0
    %533 = vmatpush.msra.mxu0 0.0
    %534 = vmatpush.msra.mxu0 0.0
    %535 = vmatpush.msra.mxu0 0.0
    %536 = vmatpush.msra.mxu0 0.0
    %537 = vmatpush.msra.mxu0 0.0
    %538 = vmatpush.msra.mxu0 0.0
    %539 = vmatpush.msra.mxu0 0.0
    %540 = vmatpush.msra.mxu0 0.0
    %541 = vmatpush.msra.mxu0 0.0
    %542 = vmatpush.msra.mxu0 0.0
    %543 = vmatpush.msra.mxu0 0.0
    %544 = vmatpush.msra.mxu0 %v531
    %545 = vmatpush.msra.mxu0 %v530
    %546 = vmatpush.msra.mxu0 %v529
    %547 = vmatpush.msra.mxu0 %v528
    %548 = vmatmul.f32.gmra.mxu0 %v372
    %v549 = vpop.f32.mrf.mxu0
    %v550 = vadd.f32 %v334, %v549
    %551 = vmatmul.f32.gmra.mxu0 %v375
    %v552 = vpop.f32.mrf.mxu0
    %v553 = vadd.f32 %v339, %v552
    %554 = vmatmul.f32.gmra.mxu0 %v378
    %v555 = vpop.f32.mrf.mxu0
    %v556 = vadd.f32 %v344, %v555
    %557 = vmatmul.f32.gmra.mxu0 %v381
    %v558 = vpop.f32.mrf.mxu0
    %v559 = vadd.f32 %v349, %v558
    %560 = vdwg.mxu0
    %v561 = vmax.f32 %v550, 0.0
    %v562 = vmax.f32 %v553, 0.0
    %v563 = vmax.f32 %v556, 0.0
    %v564 = vmax.f32 %v559, 0.0
    %565 = vmatpush.msra.mxu0 0.0
    %566 = vmatpush.msra.mxu0 0.0
    %567 = vmatpush.msra.mxu0 0.0
    %568 = vmatpush.msra.mxu0 0.0
    %569 = vmatpush.msra.mxu0 0.0
    %570 = vmatpush.msra.mxu0 0.0
    %571 = vmatpush.msra.mxu0 0.0
    %572 = vmatpush.msra.mxu0 0.0
    %573 = vmatpush.msra.mxu0 0.0
    %574 = vmatpush.msra.mxu0 0.0
    %575 = vmatpush.msra.mxu0 0.0
    %576 = vmatpush.msra.mxu0 0.0
    %577 = vmatpush.msra.mxu0 %v564
    %578 = vmatpush.msra.mxu0 %v563
    %579 = vmatpush.msra.mxu0 %v562
    %580 = vmatpush.msra.mxu0 %v561
    %581 = vmatmul.f32.gmra.mxu0 %v417
    %v582 = vpop.f32.mrf.mxu0
    %v583 = vadd.f32 %v357, %v582
    %584 = vdwg.mxu0
    %vm585 = vcmp.gt.f32.partialorder %v583, 0.0
    %v586 = vmul.f32 %v583, 1.442695
    %v587 = vpow.pop %v586
    %v588 = vsub.f32 %v587, 1.0
    %v589 = vsel %vm585, %v583, %v588
    %v590 = vadd.f32 %v589, 1.0
    %v591 = vmul.f32 %v590, 0.009586575
    %v592 = vadd.f32 %v519, %v591
    %v593 = vmul.f32 %v323, 0.9784702
    %v594 = vmul.f32 %v324, 0.9784702
    %v595 = vmul.f32 %v325, 0.9784702
    %v596 = vmul.f32 %v326, 0.9784702
    %v597 = vadd.f32 %v593, %v186
    %v598 = vadd.f32 %v594, %v187
    %v599 = vadd.f32 %v595, %v188
    %v600 = vadd.f32 %v596, %v189
    %v601 = vmax.f32 %v597, 0.0
    %v602 = vmax.f32 %v598, 0.0
    %v603 = vmax.f32 %v599, 0.0
    %v604 = vmax.f32 %v600, 0.0
    %605 = vmatpush.msra.mxu0 0.0
    %606 = vmatpush.msra.mxu0 0.0
    %607 = vmatpush.msra.mxu0 0.0
    %608 = vmatpush.msra.mxu0 0.0
    %609 = vmatpush.msra.mxu0 0.0
    %610 = vmatpush.msra.mxu0 0.0
    %611 = vmatpush.msra.mxu0 0.0
    %612 = vmatpush.msra.mxu0 0.0
    %613 = vmatpush.msra.mxu0 0.0
    %614 = vmatpush.msra.mxu0 0.0
    %615 = vmatpush.msra.mxu0 0.0
    %616 = vmatpush.msra.mxu0 0.0
    %617 = vmatpush.msra.mxu0 %v604
    %618 = vmatpush.msra.mxu0 %v603
    %619 = vmatpush.msra.mxu0 %v602
    %620 = vmatpush.msra.mxu0 %v601
    %621 = vmatmul.f32.gmra.mxu0 %v372
    %v622 = vpop.f32.mrf.mxu0
    %v623 = vadd.f32 %v334, %v622
    %624 = vmatmul.f32.gmra.mxu0 %v375
    %v625 = vpop.f32.mrf.mxu0
    %v626 = vadd.f32 %v339, %v625
    %627 = vmatmul.f32.gmra.mxu0 %v378
    %v628 = vpop.f32.mrf.mxu0
    %v629 = vadd.f32 %v344, %v628
    %630 = vmatmul.f32.gmra.mxu0 %v381
    %v631 = vpop.f32.mrf.mxu0
    %v632 = vadd.f32 %v349, %v631
    %633 = vdwg.mxu0
    %v634 = vmax.f32 %v623, 0.0
    %v635 = vmax.f32 %v626, 0.0
    %v636 = vmax.f32 %v629, 0.0
    %v637 = vmax.f32 %v632, 0.0
    %638 = vmatpush.msra.mxu0 0.0
    %639 = vmatpush.msra.mxu0 0.0
    %640 = vmatpush.msra.mxu0 0.0
    %641 = vmatpush.msra.mxu0 0.0
    %642 = vmatpush.msra.mxu0 0.0
    %643 = vmatpush.msra.mxu0 0.0
    %644 = vmatpush.msra.mxu0 0.0
    %645 = vmatpush.msra.mxu0 0.0
    %646 = vmatpush.msra.mxu0 0.0
    %647 = vmatpush.msra.mxu0 0.0
    %648 = vmatpush.msra.mxu0 0.0
    %649 = vmatpush.msra.mxu0 0.0
    %650 = vmatpush.msra.mxu0 %v637
    %651 = vmatpush.msra.mxu0 %v636
    %652 = vmatpush.msra.mxu0 %v635
    %653 = vmatpush.msra.mxu0 %v634
    %654 = vmatmul.f32.gmra.mxu0 %v417
    %v655 = vpop.f32.mrf.mxu0
    %v656 = vadd.f32 %v357, %v655
    %657 = vdwg.mxu0
    %vm658 = vcmp.gt.f32.partialorder %v656, 0.0
    %v659 = vmul.f32 %v656, 1.442695
    %v660 = vpow.pop %v659
    %v661 = vsub.f32 %v660, 1.0
    %v662 = vsel %vm658, %v656, %v661
    %v663 = vadd.f32 %v662, 1.0
    %v664 = vmul.f32 %v663, 0.014259506
    %v665 = vadd.f32 %v592, %v664
    %v666 = vmul.f32 %v323, 0.96193975
    %v667 = vmul.f32 %v324, 0.96193975
    %v668 = vmul.f32 %v325, 0.96193975
    %v669 = vmul.f32 %v326, 0.96193975
    %v670 = vadd.f32 %v666, %v186
    %v671 = vadd.f32 %v667, %v187
    %v672 = vadd.f32 %v668, %v188
    %v673 = vadd.f32 %v669, %v189
    %v674 = vmax.f32 %v670, 0.0
    %v675 = vmax.f32 %v671, 0.0
    %v676 = vmax.f32 %v672, 0.0
    %v677 = vmax.f32 %v673, 0.0
    %678 = vmatpush.msra.mxu0 0.0
    %679 = vmatpush.msra.mxu0 0.0
    %680 = vmatpush.msra.mxu0 0.0
    %681 = vmatpush.msra.mxu0 0.0
    %682 = vmatpush.msra.mxu0 0.0
    %683 = vmatpush.msra.mxu0 0.0
    %684 = vmatpush.msra.mxu0 0.0
    %685 = vmatpush.msra.mxu0 0.0
    %686 = vmatpush.msra.mxu0 0.0
    %687 = vmatpush.msra.mxu0 0.0
    %688 = vmatpush.msra.mxu0 0.0
    %689 = vmatpush.msra.mxu0 0.0
    %690 = vmatpush.msra.mxu0 %v677
    %691 = vmatpush.msra.mxu0 %v676
    %692 = vmatpush.msra.mxu0 %v675
    %693 = vmatpush.msra.mxu0 %v674
    %694 = vmatmul.f32.gmra.mxu0 %v372
    %v695 = vpop.f32.mrf.mxu0
    %v696 = vadd.f32 %v334, %v695
    %697 = vmatmul.f32.gmra.mxu0 %v375
    %v698 = vpop.f32.mrf.mxu0
    %v699 = vadd.f32 %v339, %v698
    %700 = vmatmul.f32.gmra.mxu0 %v378
    %v701 = vpop.f32.mrf.mxu0
    %v702 = vadd.f32 %v344, %v701
    %703 = vmatmul.f32.gmra.mxu0 %v381
    %v704 = vpop.f32.mrf.mxu0
    %v705 = vadd.f32 %v349, %v704
    %706 = vdwg.mxu0
    %v707 = vmax.f32 %v696, 0.0
    %v708 = vmax.f32 %v699, 0.0
    %v709 = vmax.f32 %v702, 0.0
    %v710 = vmax.f32 %v705, 0.0
    %711 = vmatpush.msra.mxu0 0.0
    %712 = vmatpush.msra.mxu0 0.0
    %713 = vmatpush.msra.mxu0 0.0
    %714 = vmatpush.msra.mxu0 0.0
    %715 = vmatpush.msra.mxu0 0.0
    %716 = vmatpush.msra.mxu0 0.0
    %717 = vmatpush.msra.mxu0 0.0
    %718 = vmatpush.msra.mxu0 0.0
    %719 = vmatpush.msra.mxu0 0.0
    %720 = vmatpush.msra.mxu0 0.0
    %721 = vmatpush.msra.mxu0 0.0
    %722 = vmatpush.msra.mxu0 0.0
    %723 = vmatpush.msra.mxu0 %v710
    %724 = vmatpush.msra.mxu0 %v709
    %725 = vmatpush.msra.mxu0 %v708
    %726 = vmatpush.msra.mxu0 %v707
    %727 = vmatmul.f32.gmra.mxu0 %v417
    %v728 = vpop.f32.mrf.mxu0
    %v729 = vadd.f32 %v357, %v728
    %730 = vdwg.mxu0
    %vm731 = vcmp.gt.f32.partialorder %v729, 0.0
    %v732 = vmul.f32 %v729, 1.442695
    %v733 = vpow.pop %v732
    %v734 = vsub.f32 %v733, 1.0
    %v735 = vsel %vm731, %v729, %v734
    %v736 = vadd.f32 %v735, 1.0
    %v737 = vmul.f32 %v736, 0.018766623
    %v738 = vadd.f32 %v665, %v737
    %v739 = vmul.f32 %v323, 0.94096065
    %v740 = vmul.f32 %v324, 0.94096065
    %v741 = vmul.f32 %v325, 0.94096065
    %v742 = vmul.f32 %v326, 0.94096065
    %v743 = vadd.f32 %v739, %v186
    %v744 = vadd.f32 %v740, %v187
    %v745 = vadd.f32 %v741, %v188
    %v746 = vadd.f32 %v742, %v189
    %v747 = vmax.f32 %v743, 0.0
    %v748 = vmax.f32 %v744, 0.0
    %v749 = vmax.f32 %v745, 0.0
    %v750 = vmax.f32 %v746, 0.0
    %751 = vmatpush.msra.mxu0 0.0
    %752 = vmatpush.msra.mxu0 0.0
    %753 = vmatpush.msra.mxu0 0.0
    %754 = vmatpush.msra.mxu0 0.0
    %755 = vmatpush.msra.mxu0 0.0
    %756 = vmatpush.msra.mxu0 0.0
    %757 = vmatpush.msra.mxu0 0.0
    %758 = vmatpush.msra.mxu0 0.0
    %759 = vmatpush.msra.mxu0 0.0
    %760 = vmatpush.msra.mxu0 0.0
    %761 = vmatpush.msra.mxu0 0.0
    %762 = vmatpush.msra.mxu0 0.0
    %763 = vmatpush.msra.mxu0 %v750
    %764 = vmatpush.msra.mxu0 %v749
    %765 = vmatpush.msra.mxu0 %v748
    %766 = vmatpush.msra.mxu0 %v747
    %767 = vmatmul.f32.gmra.mxu0 %v372
    %v768 = vpop.f32.mrf.mxu0
    %v769 = vadd.f32 %v334, %v768
    %770 = vmatmul.f32.gmra.mxu0 %v375
    %v771 = vpop.f32.mrf.mxu0
    %v772 = vadd.f32 %v339, %v771
    %773 = vmatmul.f32.gmra.mxu0 %v378
    %v774 = vpop.f32.mrf.mxu0
    %v775 = vadd.f32 %v344, %v774
    %776 = vmatmul.f32.gmra.mxu0 %v381
    %v777 = vpop.f32.mrf.mxu0
    %v778 = vadd.f32 %v349, %v777
    %779 = vdwg.mxu0
    %v780 = vmax.f32 %v769, 0.0
    %v781 = vmax.f32 %v772, 0.0
    %v782 = vmax.f32 %v775, 0.0
    %v783 = vmax.f32 %v778, 0.0
    %784 = vmatpush.msra.mxu0 0.0
    %785 = vmatpush.msra.mxu0 0.0
    %786 = vmatpush.msra.mxu0 0.0
    %787 = vmatpush.msra.mxu0 0.0
    %788 = vmatpush.msra.mxu0 0.0
    %789 = vmatpush.msra.mxu0 0.0
    %790 = vmatpush.msra.mxu0 0.0
    %791 = vmatpush.msra.mxu0 0.0
    %792 = vmatpush.msra.mxu0 0.0
    %793 = vmatpush.msra.mxu0 0.0
    %794 = vmatpush.msra.mxu0 0.0
    %795 = vmatpush.msra.mxu0 0.0
    %796 = vmatpush.msra.mxu0 %v783
    %797 = vmatpush.msra.mxu0 %v782
    %798 = vmatpush.msra.mxu0 %v781
    %799 = vmatpush.msra.mxu0 %v780
    %800 = vmatmul.f32.gmra.mxu0 %v417
    %v801 = vpop.f32.mrf.mxu0
    %v802 = vadd.f32 %v357, %v801
    %803 = vdwg.mxu0
    %vm804 = vcmp.gt.f32.partialorder %v802, 0.0
    %v805 = vmul.f32 %v802, 1.442695
    %v806 = vpow.pop %v805
    %v807 = vsub.f32 %v806, 1.0
    %v808 = vsel %vm804, %v802, %v807
    %v809 = vadd.f32 %v808, 1.0
    %v810 = vmul.f32 %v809, 0.02316193
    %v811 = vadd.f32 %v738, %v810
    %v812 = vmul.f32 %v323, 0.91573477
    %v813 = vmul.f32 %v324, 0.91573477
    %v814 = vmul.f32 %v325, 0.91573477
    %v815 = vmul.f32 %v326, 0.91573477
    %v816 = vadd.f32 %v812, %v186
    %v817 = vadd.f32 %v813, %v187
    %v818 = vadd.f32 %v814, %v188
    %v819 = vadd.f32 %v815, %v189
    %v820 = vmax.f32 %v816, 0.0
    %v821 = vmax.f32 %v817, 0.0
    %v822 = vmax.f32 %v818, 0.0
    %v823 = vmax.f32 %v819, 0.0
    %824 = vmatpush.msra.mxu0 0.0
    %825 = vmatpush.msra.mxu0 0.0
    %826 = vmatpush.msra.mxu0 0.0
    %827 = vmatpush.msra.mxu0 0.0
    %828 = vmatpush.msra.mxu0 0.0
    %829 = vmatpush.msra.mxu0 0.0
    %830 = vmatpush.msra.mxu0 0.0
    %831 = vmatpush.msra.mxu0 0.0
    %832 = vmatpush.msra.mxu0 0.0
    %833 = vmatpush.msra.mxu0 0.0
    %834 = vmatpush.msra.mxu0 0.0
    %835 = vmatpush.msra.mxu0 0.0
    %836 = vmatpush.msra.mxu0 %v823
    %837 = vmatpush.msra.mxu0 %v822
    %838 = vmatpush.msra.mxu0 %v821
    %839 = vmatpush.msra.mxu0 %v820
    %840 = vmatmul.f32.gmra.mxu0 %v372
    %v841 = vpop.f32.mrf.mxu0
    %v842 = vadd.f32 %v334, %v841
    %843 = vmatmul.f32.gmra.mxu0 %v375
    %v844 = vpop.f32.mrf.mxu0
    %v845 = vadd.f32 %v339, %v844
    %846 = vmatmul.f32.gmra.mxu0 %v378
    %v847 = vpop.f32.mrf.mxu0
    %v848 = vadd.f32 %v344, %v847
    %849 = vmatmul.f32.gmra.mxu0 %v381
    %v850 = vpop.f32.mrf.mxu0
    %v851 = vadd.f32 %v349, %v850
    %852 = vdwg.mxu0
    %v853 = vmax.f32 %v842, 0.0
    %v854 = vmax.f32 %v845, 0.0
    %v855 = vmax.f32 %v848, 0.0
    %v856 = vmax.f32 %v851, 0.0
    %857 = vmatpush.msra.mxu0 0.0
    %858 = vmatpush.msra.mxu0 0.0
    %859 = vmatpush.msra.mxu0 0.0
    %860 = vmatpush.msra.mxu0 0.0
    %861 = vmatpush.msra.mxu0 0.0
    %862 = vmatpush.msra.mxu0 0.0
    %863 = vmatpush.msra.mxu0 0.0
    %864 = vmatpush.msra.mxu0 0.0
    %865 = vmatpush.msra.mxu0 0.0
    %866 = vmatpush.msra.mxu0 0.0
    %867 = vmatpush.msra.mxu0 0.0
    %868 = vmatpush.msra.mxu0 0.0
    %869 = vmatpush.msra.mxu0 %v856
    %870 = vmatpush.msra.mxu0 %v855
    %871 = vmatpush.msra.mxu0 %v854
    %872 = vmatpush.msra.mxu0 %v853
    %873 = vmatmul.f32.gmra.mxu0 %v417
    %v874 = vpop.f32.mrf.mxu0
    %v875 = vadd.f32 %v357, %v874
    %876 = vdwg.mxu0
    %vm877 = vcmp.gt.f32.partialorder %v875, 0.0
    %v878 = vmul.f32 %v875, 1.442695
    %v879 = vpow.pop %v878
    %v880 = vsub.f32 %v879, 1.0
    %v881 = vsel %vm877, %v875, %v880
    %v882 = vadd.f32 %v881, 1.0
    %v883 = vmul.f32 %v882, 0.027246961
    %v884 = vadd.f32 %v811, %v883
    %v885 = vmul.f32 %v323, 0.88650525
    %v886 = vmul.f32 %v324, 0.88650525
    %v887 = vmul.f32 %v325, 0.88650525
    %v888 = vmul.f32 %v326, 0.88650525
    %v889 = vadd.f32 %v885, %v186
    %v890 = vadd.f32 %v886, %v187
    %v891 = vadd.f32 %v887, %v188
    %v892 = vadd.f32 %v888, %v189
    %v893 = vmax.f32 %v889, 0.0
    %v894 = vmax.f32 %v890, 0.0
    %v895 = vmax.f32 %v891, 0.0
    %v896 = vmax.f32 %v892, 0.0
    %897 = vmatpush.msra.mxu0 0.0
    %898 = vmatpush.msra.mxu0 0.0
    %899 = vmatpush.msra.mxu0 0.0
    %900 = vmatpush.msra.mxu0 0.0
    %901 = vmatpush.msra.mxu0 0.0
    %902 = vmatpush.msra.mxu0 0.0
    %903 = vmatpush.msra.mxu0 0.0
    %904 = vmatpush.msra.mxu0 0.0
    %905 = vmatpush.msra.mxu0 0.0
    %906 = vmatpush.msra.mxu0 0.0
    %907 = vmatpush.msra.mxu0 0.0
    %908 = vmatpush.msra.mxu0 0.0
    %909 = vmatpush.msra.mxu0 %v896
    %910 = vmatpush.msra.mxu0 %v895
    %911 = vmatpush.msra.mxu0 %v894
    %912 = vmatpush.msra.mxu0 %v893
    %913 = vmatmul.f32.gmra.mxu0 %v372
    %v914 = vpop.f32.mrf.mxu0
    %v915 = vadd.f32 %v334, %v914
    %916 = vmatmul.f32.gmra.mxu0 %v375
    %v917 = vpop.f32.mrf.mxu0
    %v918 = vadd.f32 %v339, %v917
    %919 = vmatmul.f32.gmra.mxu0 %v378
    %v920 = vpop.f32.mrf.mxu0
    %v921 = vadd.f32 %v344, %v920
    %922 = vmatmul.f32.gmra.mxu0 %v381
    %v923 = vpop.f32.mrf.mxu0
    %v924 = vadd.f32 %v349, %v923
    %925 = vdwg.mxu0
    %v926 = vmax.f32 %v915, 0.0
    %v927 = vmax.f32 %v918, 0.0
    %v928 = vmax.f32 %v921, 0.0
    %v929 = vmax.f32 %v924, 0.0
    %930 = vmatpush.msra.mxu0 0.0
    %931 = vmatpush.msra.mxu0 0.0
    %932 = vmatpush.msra.mxu0 0.0
    %933 = vmatpush.msra.mxu0 0.0
    %934 = vmatpush.msra.mxu0 0.0
    %935 = vmatpush.msra.mxu0 0.0
    %936 = vmatpush.msra.mxu0 0.0
    %937 = vmatpush.msra.mxu0 0.0
    %938 = vmatpush.msra.mxu0 0.0
    %939 = vmatpush.msra.mxu0 0.0
    %940 = vmatpush.msra.mxu0 0.0
    %941 = vmatpush.msra.mxu0 0.0
    %942 = vmatpush.msra.mxu0 %v929
    %943 = vmatpush.msra.mxu0 %v928
    %944 = vmatpush.msra.mxu0 %v927
    %945 = vmatpush.msra.mxu0 %v926
    %946 = vmatmul.f32.gmra.mxu0 %v417
    %v947 = vpop.f32.mrf.mxu0
    %v948 = vadd.f32 %v357, %v947
    %949 = vdwg.mxu0
    %vm950 = vcmp.gt.f32.partialorder %v948, 0.0
    %v951 = vmul.f32 %v948, 1.442695
    %v952 = vpow.pop %v951
    %v953 = vsub.f32 %v952, 1.0
    %v954 = vsel %vm950, %v948, %v953
    %v955 = vadd.f32 %v954, 1.0
    %v956 = vmul.f32 %v955, 0.031166602
    %v957 = vadd.f32 %v884, %v956
    %v958 = vmul.f32 %v323, 0.8535534
    %v959 = vmul.f32 %v324, 0.8535534
    %v960 = vmul.f32 %v325, 0.8535534
    %v961 = vmul.f32 %v326, 0.8535534
    %v962 = vadd.f32 %v958, %v186
    %v963 = vadd.f32 %v959, %v187
    %v964 = vadd.f32 %v960, %v188
    %v965 = vadd.f32 %v961, %v189
    %v966 = vmax.f32 %v962, 0.0
    %v967 = vmax.f32 %v963, 0.0
    %v968 = vmax.f32 %v964, 0.0
    %v969 = vmax.f32 %v965, 0.0
    %970 = vmatpush.msra.mxu0 0.0
    %971 = vmatpush.msra.mxu0 0.0
    %972 = vmatpush.msra.mxu0 0.0
    %973 = vmatpush.msra.mxu0 0.0
    %974 = vmatpush.msra.mxu0 0.0
    %975 = vmatpush.msra.mxu0 0.0
    %976 = vmatpush.msra.mxu0 0.0
    %977 = vmatpush.msra.mxu0 0.0
    %978 = vmatpush.msra.mxu0 0.0
    %979 = vmatpush.msra.mxu0 0.0
    %980 = vmatpush.msra.mxu0 0.0
    %981 = vmatpush.msra.mxu0 0.0
    %982 = vmatpush.msra.mxu0 %v969
    %983 = vmatpush.msra.mxu0 %v968
    %984 = vmatpush.msra.mxu0 %v967
    %985 = vmatpush.msra.mxu0 %v966
    %986 = vmatmul.f32.gmra.mxu0 %v372
    %v987 = vpop.f32.mrf.mxu0
    %v988 = vadd.f32 %v334, %v987
    %989 = vmatmul.f32.gmra.mxu0 %v375
    %v990 = vpop.f32.mrf.mxu0
    %v991 = vadd.f32 %v339, %v990
    %992 = vmatmul.f32.gmra.mxu0 %v378
    %v993 = vpop.f32.mrf.mxu0
    %v994 = vadd.f32 %v344, %v993
    %995 = vmatmul.f32.gmra.mxu0 %v381
    %v996 = vpop.f32.mrf.mxu0
    %v997 = vadd.f32 %v349, %v996
    %998 = vdwg.mxu0
    %v999 = vmax.f32 %v988, 0.0
    %v1000 = vmax.f32 %v991, 0.0
    %v1001 = vmax.f32 %v994, 0.0
    %v1002 = vmax.f32 %v997, 0.0
    %1003 = vmatpush.msra.mxu0 0.0
    %1004 = vmatpush.msra.mxu0 0.0
    %1005 = vmatpush.msra.mxu0 0.0
    %1006 = vmatpush.msra.mxu0 0.0
    %1007 = vmatpush.msra.mxu0 0.0
    %1008 = vmatpush.msra.mxu0 0.0
    %1009 = vmatpush.msra.mxu0 0.0
    %1010 = vmatpush.msra.mxu0 0.0
    %1011 = vmatpush.msra.mxu0 0.0
    %1012 = vmatpush.msra.mxu0 0.0
    %1013 = vmatpush.msra.mxu0 0.0
    %1014 = vmatpush.msra.mxu0 0.0
    %1015 = vmatpush.msra.mxu0 %v1002
    %1016 = vmatpush.msra.mxu0 %v1001
    %1017 = vmatpush.msra.mxu0 %v1000
    %1018 = vmatpush.msra.mxu0 %v999
    %1019 = vmatmul.f32.gmra.mxu0 %v417
    %v1020 = vpop.f32.mrf.mxu0
    %v1021 = vadd.f32 %v357, %v1020
    %1022 = vdwg.mxu0
    %vm1023 = vcmp.gt.f32.partialorder %v1021, 0.0
    %v1024 = vmul.f32 %v1021, 1.442695
    %v1025 = vpow.pop %v1024
    %v1026 = vsub.f32 %v1025, 1.0
    %v1027 = vsel %vm1023, %v1021, %v1026
    %v1028 = vadd.f32 %v1027, 1.0
    %v1029 = vmul.f32 %v1028, 0.03468324
    %v1030 = vadd.f32 %v957, %v1029
    %v1031 = vmul.f32 %v323, 0.8171966
    %v1032 = vmul.f32 %v324, 0.8171966
    %v1033 = vmul.f32 %v325, 0.8171966
    %v1034 = vmul.f32 %v326, 0.8171966
    %v1035 = vadd.f32 %v1031, %v186
    %v1036 = vadd.f32 %v1032, %v187
    %v1037 = vadd.f32 %v1033, %v188
    %v1038 = vadd.f32 %v1034, %v189
    %v1039 = vmax.f32 %v1035, 0.0
    %v1040 = vmax.f32 %v1036, 0.0
    %v1041 = vmax.f32 %v1037, 0.0
    %v1042 = vmax.f32 %v1038, 0.0
    %1043 = vmatpush.msra.mxu0 0.0
    %1044 = vmatpush.msra.mxu0 0.0
    %1045 = vmatpush.msra.mxu0 0.0
    %1046 = vmatpush.msra.mxu0 0.0
    %1047 = vmatpush.msra.mxu0 0.0
    %1048 = vmatpush.msra.mxu0 0.0
    %1049 = vmatpush.msra.mxu0 0.0
    %1050 = vmatpush.msra.mxu0 0.0
    %1051 = vmatpush.msra.mxu0 0.0
    %1052 = vmatpush.msra.mxu0 0.0
    %1053 = vmatpush.msra.mxu0 0.0
    %1054 = vmatpush.msra.mxu0 0.0
    %1055 = vmatpush.msra.mxu0 %v1042
    %1056 = vmatpush.msra.mxu0 %v1041
    %1057 = vmatpush.msra.mxu0 %v1040
    %1058 = vmatpush.msra.mxu0 %v1039
    %1059 = vmatmul.f32.gmra.mxu0 %v372
    %v1060 = vpop.f32.mrf.mxu0
    %v1061 = vadd.f32 %v334, %v1060
    %1062 = vmatmul.f32.gmra.mxu0 %v375
    %v1063 = vpop.f32.mrf.mxu0
    %v1064 = vadd.f32 %v339, %v1063
    %1065 = vmatmul.f32.gmra.mxu0 %v378
    %v1066 = vpop.f32.mrf.mxu0
    %v1067 = vadd.f32 %v344, %v1066
    %1068 = vmatmul.f32.gmra.mxu0 %v381
    %v1069 = vpop.f32.mrf.mxu0
    %v1070 = vadd.f32 %v349, %v1069
    %1071 = vdwg.mxu0
    %v1072 = vmax.f32 %v1061, 0.0
    %v1073 = vmax.f32 %v1064, 0.0
    %v1074 = vmax.f32 %v1067, 0.0
    %v1075 = vmax.f32 %v1070, 0.0
    %1076 = vmatpush.msra.mxu0 0.0
    %1077 = vmatpush.msra.mxu0 0.0
    %1078 = vmatpush.msra.mxu0 0.0
    %1079 = vmatpush.msra.mxu0 0.0
    %1080 = vmatpush.msra.mxu0 0.0
    %1081 = vmatpush.msra.mxu0 0.0
    %1082 = vmatpush.msra.mxu0 0.0
    %1083 = vmatpush.msra.mxu0 0.0
    %1084 = vmatpush.msra.mxu0 0.0
    %1085 = vmatpush.msra.mxu0 0.0
    %1086 = vmatpush.msra.mxu0 0.0
    %1087 = vmatpush.msra.mxu0 0.0
    %1088 = vmatpush.msra.mxu0 %v1075
    %1089 = vmatpush.msra.mxu0 %v1074
    %1090 = vmatpush.msra.mxu0 %v1073
    %1091 = vmatpush.msra.mxu0 %v1072
    %1092 = vmatmul.f32.gmra.mxu0 %v417
    %v1093 = vpop.f32.mrf.mxu0
    %v1094 = vadd.f32 %v357, %v1093
    %1095 = vdwg.mxu0
    %vm1096 = vcmp.gt.f32.partialorder %v1094, 0.0
    %v1097 = vmul.f32 %v1094, 1.442695
    %v1098 = vpow.pop %v1097
    %v1099 = vsub.f32 %v1098, 1.0
    %v1100 = vsel %vm1096, %v1094, %v1099
    %v1101 = vadd.f32 %v1100, 1.0
    %v1102 = vmul.f32 %v1101, 0.037972447
    %v1103 = vadd.f32 %v1030, %v1102
    %v1104 = vmul.f32 %v323, 0.7777851
    %v1105 = vmul.f32 %v324, 0.7777851
    %v1106 = vmul.f32 %v325, 0.7777851
    %v1107 = vmul.f32 %v326, 0.7777851
    %v1108 = vadd.f32 %v1104, %v186
    %v1109 = vadd.f32 %v1105, %v187
    %v1110 = vadd.f32 %v1106, %v188
    %v1111 = vadd.f32 %v1107, %v189
    %v1112 = vmax.f32 %v1108, 0.0
    %v1113 = vmax.f32 %v1109, 0.0
    %v1114 = vmax.f32 %v1110, 0.0
    %v1115 = vmax.f32 %v1111, 0.0
    %1116 = vmatpush.msra.mxu0 0.0
    %1117 = vmatpush.msra.mxu0 0.0
    %1118 = vmatpush.msra.mxu0 0.0
    %1119 = vmatpush.msra.mxu0 0.0
    %1120 = vmatpush.msra.mxu0 0.0
    %1121 = vmatpush.msra.mxu0 0.0
    %1122 = vmatpush.msra.mxu0 0.0
    %1123 = vmatpush.msra.mxu0 0.0
    %1124 = vmatpush.msra.mxu0 0.0
    %1125 = vmatpush.msra.mxu0 0.0
    %1126 = vmatpush.msra.mxu0 0.0
    %1127 = vmatpush.msra.mxu0 0.0
    %1128 = vmatpush.msra.mxu0 %v1115
    %1129 = vmatpush.msra.mxu0 %v1114
    %1130 = vmatpush.msra.mxu0 %v1113
    %1131 = vmatpush.msra.mxu0 %v1112
    %1132 = vmatmul.f32.gmra.mxu0 %v372
    %v1133 = vpop.f32.mrf.mxu0
    %v1134 = vadd.f32 %v334, %v1133
    %1135 = vmatmul.f32.gmra.mxu0 %v375
    %v1136 = vpop.f32.mrf.mxu0
    %v1137 = vadd.f32 %v339, %v1136
    %1138 = vmatmul.f32.gmra.mxu0 %v378
    %v1139 = vpop.f32.mrf.mxu0
    %v1140 = vadd.f32 %v344, %v1139
    %1141 = vmatmul.f32.gmra.mxu0 %v381
    %v1142 = vpop.f32.mrf.mxu0
    %v1143 = vadd.f32 %v349, %v1142
    %1144 = vdwg.mxu0
    %v1145 = vmax.f32 %v1134, 0.0
    %v1146 = vmax.f32 %v1137, 0.0
    %v1147 = vmax.f32 %v1140, 0.0
    %v1148 = vmax.f32 %v1143, 0.0
    %1149 = vmatpush.msra.mxu0 0.0
    %1150 = vmatpush.msra.mxu0 0.0
    %1151 = vmatpush.msra.mxu0 0.0
    %1152 = vmatpush.msra.mxu0 0.0
    %1153 = vmatpush.msra.mxu0 0.0
    %1154 = vmatpush.msra.mxu0 0.0
    %1155 = vmatpush.msra.mxu0 0.0
    %1156 = vmatpush.msra.mxu0 0.0
    %1157 = vmatpush.msra.mxu0 0.0
    %1158 = vmatpush.msra.mxu0 0.0
    %1159 = vmatpush.msra.mxu0 0.0
    %1160 = vmatpush.msra.mxu0 0.0
    %1161 = vmatpush.msra.mxu0 %v1148
    %1162 = vmatpush.msra.mxu0 %v1147
    %1163 = vmatpush.msra.mxu0 %v1146
    %1164 = vmatpush.msra.mxu0 %v1145
    %1165 = vmatmul.f32.gmra.mxu0 %v417
    %v1166 = vpop.f32.mrf.mxu0
    %v1167 = vadd.f32 %v357, %v1166
    %1168 = vdwg.mxu0
    %vm1169 = vcmp.gt.f32.partialorder %v1167, 0.0
    %v1170 = vmul.f32 %v1167, 1.442695
    %v1171 = vpow.pop %v1170
    %v1172 = vsub.f32 %v1171, 1.0
    %v1173 = vsel %vm1169, %v1167, %v1172
    %v1174 = vadd.f32 %v1173, 1.0
    %v1175 = vmul.f32 %v1174, 0.040786862
    %v1176 = vadd.f32 %v1103, %v1175
    %v1177 = vmul.f32 %v323, 0.73569834
    %v1178 = vmul.f32 %v324, 0.73569834
    %v1179 = vmul.f32 %v325, 0.73569834
    %v1180 = vmul.f32 %v326, 0.73569834
    %v1181 = vadd.f32 %v1177, %v186
    %v1182 = vadd.f32 %v1178, %v187
    %v1183 = vadd.f32 %v1179, %v188
    %v1184 = vadd.f32 %v1180, %v189
    %v1185 = vmax.f32 %v1181, 0.0
    %v1186 = vmax.f32 %v1182, 0.0
    %v1187 = vmax.f32 %v1183, 0.0
    %v1188 = vmax.f32 %v1184, 0.0
    %1189 = vmatpush.msra.mxu0 0.0
    %1190 = vmatpush.msra.mxu0 0.0
    %1191 = vmatpush.msra.mxu0 0.0
    %1192 = vmatpush.msra.mxu0 0.0
    %1193 = vmatpush.msra.mxu0 0.0
    %1194 = vmatpush.msra.mxu0 0.0
    %1195 = vmatpush.msra.mxu0 0.0
    %1196 = vmatpush.msra.mxu0 0.0
    %1197 = vmatpush.msra.mxu0 0.0
    %1198 = vmatpush.msra.mxu0 0.0
    %1199 = vmatpush.msra.mxu0 0.0
    %1200 = vmatpush.msra.mxu0 0.0
    %1201 = vmatpush.msra.mxu0 %v1188
    %1202 = vmatpush.msra.mxu0 %v1187
    %1203 = vmatpush.msra.mxu0 %v1186
    %1204 = vmatpush.msra.mxu0 %v1185
    %1205 = vmatmul.f32.gmra.mxu0 %v372
    %v1206 = vpop.f32.mrf.mxu0
    %v1207 = vadd.f32 %v334, %v1206
    %1208 = vmatmul.f32.gmra.mxu0 %v375
    %v1209 = vpop.f32.mrf.mxu0
    %v1210 = vadd.f32 %v339, %v1209
    %1211 = vmatmul.f32.gmra.mxu0 %v378
    %v1212 = vpop.f32.mrf.mxu0
    %v1213 = vadd.f32 %v344, %v1212
    %1214 = vmatmul.f32.gmra.mxu0 %v381
    %v1215 = vpop.f32.mrf.mxu0
    %v1216 = vadd.f32 %v349, %v1215
    %1217 = vdwg.mxu0
    %v1218 = vmax.f32 %v1207, 0.0
    %v1219 = vmax.f32 %v1210, 0.0
    %v1220 = vmax.f32 %v1213, 0.0
    %v1221 = vmax.f32 %v1216, 0.0
    %1222 = vmatpush.msra.mxu0 0.0
    %1223 = vmatpush.msra.mxu0 0.0
    %1224 = vmatpush.msra.mxu0 0.0
    %1225 = vmatpush.msra.mxu0 0.0
    %1226 = vmatpush.msra.mxu0 0.0
    %1227 = vmatpush.msra.mxu0 0.0
    %1228 = vmatpush.msra.mxu0 0.0
    %1229 = vmatpush.msra.mxu0 0.0
    %1230 = vmatpush.msra.mxu0 0.0
    %1231 = vmatpush.msra.mxu0 0.0
    %1232 = vmatpush.msra.mxu0 0.0
    %1233 = vmatpush.msra.mxu0 0.0
    %1234 = vmatpush.msra.mxu0 %v1221
    %1235 = vmatpush.msra.mxu0 %v1220
    %1236 = vmatpush.msra.mxu0 %v1219
    %1237 = vmatpush.msra.mxu0 %v1218
    %1238 = vmatmul.f32.gmra.mxu0 %v417
    %v1239 = vpop.f32.mrf.mxu0
    %v1240 = vadd.f32 %v357, %v1239
    %1241 = vdwg.mxu0
    %vm1242 = vcmp.gt.f32.partialorder %v1240, 0.0
    %v1243 = vmul.f32 %v1240, 1.442695
    %v1244 = vpow.pop %v1243
    %v1245 = vsub.f32 %v1244, 1.0
    %v1246 = vsel %vm1242, %v1240, %v1245
    %v1247 = vadd.f32 %v1246, 1.0
    %v1248 = vmul.f32 %v1247, 0.04331932
    %v1249 = vadd.f32 %v1176, %v1248
    %v1250 = vmul.f32 %v323, 0.6913417
    %v1251 = vmul.f32 %v324, 0.6913417
    %v1252 = vmul.f32 %v325, 0.6913417
    %v1253 = vmul.f32 %v326, 0.6913417
    %v1254 = vadd.f32 %v1250, %v186
    %v1255 = vadd.f32 %v1251, %v187
    %v1256 = vadd.f32 %v1252, %v188
    %v1257 = vadd.f32 %v1253, %v189
    %v1258 = vmax.f32 %v1254, 0.0
    %v1259 = vmax.f32 %v1255, 0.0
    %v1260 = vmax.f32 %v1256, 0.0
    %v1261 = vmax.f32 %v1257, 0.0
    %1262 = vmatpush.msra.mxu0 0.0
    %1263 = vmatpush.msra.mxu0 0.0
    %1264 = vmatpush.msra.mxu0 0.0
    %1265 = vmatpush.msra.mxu0 0.0
    %1266 = vmatpush.msra.mxu0 0.0
    %1267 = vmatpush.msra.mxu0 0.0
    %1268 = vmatpush.msra.mxu0 0.0
    %1269 = vmatpush.msra.mxu0 0.0
    %1270 = vmatpush.msra.mxu0 0.0
    %1271 = vmatpush.msra.mxu0 0.0
    %1272 = vmatpush.msra.mxu0 0.0
    %1273 = vmatpush.msra.mxu0 0.0
    %1274 = vmatpush.msra.mxu0 %v1261
    %1275 = vmatpush.msra.mxu0 %v1260
    %1276 = vmatpush.msra.mxu0 %v1259
    %1277 = vmatpush.msra.mxu0 %v1258
    %1278 = vmatmul.f32.gmra.mxu0 %v372
    %v1279 = vpop.f32.mrf.mxu0
    %v1280 = vadd.f32 %v334, %v1279
    %1281 = vmatmul.f32.gmra.mxu0 %v375
    %v1282 = vpop.f32.mrf.mxu0
    %v1283 = vadd.f32 %v339, %v1282
    %1284 = vmatmul.f32.gmra.mxu0 %v378
    %v1285 = vpop.f32.mrf.mxu0
    %v1286 = vadd.f32 %v344, %v1285
    %1287 = vmatmul.f32.gmra.mxu0 %v381
    %v1288 = vpop.f32.mrf.mxu0
    %v1289 = vadd.f32 %v349, %v1288
    %1290 = vdwg.mxu0
    %v1291 = vmax.f32 %v1280, 0.0
    %v1292 = vmax.f32 %v1283, 0.0
    %v1293 = vmax.f32 %v1286, 0.0
    %v1294 = vmax.f32 %v1289, 0.0
    %1295 = vmatpush.msra.mxu0 0.0
    %1296 = vmatpush.msra.mxu0 0.0
    %1297 = vmatpush.msra.mxu0 0.0
    %1298 = vmatpush.msra.mxu0 0.0
    %1299 = vmatpush.msra.mxu0 0.0
    %1300 = vmatpush.msra.mxu0 0.0
    %1301 = vmatpush.msra.mxu0 0.0
    %1302 = vmatpush.msra.mxu0 0.0
    %1303 = vmatpush.msra.mxu0 0.0
    %1304 = vmatpush.msra.mxu0 0.0
    %1305 = vmatpush.msra.mxu0 0.0
    %1306 = vmatpush.msra.mxu0 0.0
    %1307 = vmatpush.msra.mxu0 %v1294
    %1308 = vmatpush.msra.mxu0 %v1293
    %1309 = vmatpush.msra.mxu0 %v1292
    %1310 = vmatpush.msra.mxu0 %v1291
    %1311 = vmatmul.f32.gmra.mxu0 %v417
    %v1312 = vpop.f32.mrf.mxu0
    %v1313 = vadd.f32 %v357, %v1312
    %1314 = vdwg.mxu0
    %vm1315 = vcmp.gt.f32.partialorder %v1313, 0.0
    %v1316 = vmul.f32 %v1313, 1.442695
    %v1317 = vpow.pop %v1316
    %v1318 = vsub.f32 %v1317, 1.0
    %v1319 = vsel %vm1315, %v1313, %v1318
    %v1320 = vadd.f32 %v1319, 1.0
    %v1321 = vmul.f32 %v1320, 0.045322508
    %v1322 = vadd.f32 %v1249, %v1321
    %v1323 = vmul.f32 %v323, 0.6451423
    %v1324 = vmul.f32 %v324, 0.6451423
    %v1325 = vmul.f32 %v325, 0.6451423
    %v1326 = vmul.f32 %v326, 0.6451423
    %v1327 = vadd.f32 %v1323, %v186
    %v1328 = vadd.f32 %v1324, %v187
    %v1329 = vadd.f32 %v1325, %v188
    %v1330 = vadd.f32 %v1326, %v189
    %v1331 = vmax.f32 %v1327, 0.0
    %v1332 = vmax.f32 %v1328, 0.0
    %v1333 = vmax.f32 %v1329, 0.0
    %v1334 = vmax.f32 %v1330, 0.0
    %1335 = vmatpush.msra.mxu0 0.0
    %1336 = vmatpush.msra.mxu0 0.0
    %1337 = vmatpush.msra.mxu0 0.0
    %1338 = vmatpush.msra.mxu0 0.0
    %1339 = vmatpush.msra.mxu0 0.0
    %1340 = vmatpush.msra.mxu0 0.0
    %1341 = vmatpush.msra.mxu0 0.0
    %1342 = vmatpush.msra.mxu0 0.0
    %1343 = vmatpush.msra.mxu0 0.0
    %1344 = vmatpush.msra.mxu0 0.0
    %1345 = vmatpush.msra.mxu0 0.0
    %1346 = vmatpush.msra.mxu0 0.0
    %1347 = vmatpush.msra.mxu0 %v1334
    %1348 = vmatpush.msra.mxu0 %v1333
    %1349 = vmatpush.msra.mxu0 %v1332
    %1350 = vmatpush.msra.mxu0 %v1331
    %1351 = vmatmul.f32.gmra.mxu0 %v372
    %v1352 = vpop.f32.mrf.mxu0
    %v1353 = vadd.f32 %v334, %v1352
    %1354 = vmatmul.f32.gmra.mxu0 %v375
    %v1355 = vpop.f32.mrf.mxu0
    %v1356 = vadd.f32 %v339, %v1355
    %1357 = vmatmul.f32.gmra.mxu0 %v378
    %v1358 = vpop.f32.mrf.mxu0
    %v1359 = vadd.f32 %v344, %v1358
    %1360 = vmatmul.f32.gmra.mxu0 %v381
    %v1361 = vpop.f32.mrf.mxu0
    %v1362 = vadd.f32 %v349, %v1361
    %1363 = vdwg.mxu0
    %v1364 = vmax.f32 %v1353, 0.0
    %v1365 = vmax.f32 %v1356, 0.0
    %v1366 = vmax.f32 %v1359, 0.0
    %v1367 = vmax.f32 %v1362, 0.0
    %1368 = vmatpush.msra.mxu0 0.0
    %1369 = vmatpush.msra.mxu0 0.0
    %1370 = vmatpush.msra.mxu0 0.0
    %1371 = vmatpush.msra.mxu0 0.0
    %1372 = vmatpush.msra.mxu0 0.0
    %1373 = vmatpush.msra.mxu0 0.0
    %1374 = vmatpush.msra.mxu0 0.0
    %1375 = vmatpush.msra.mxu0 0.0
    %1376 = vmatpush.msra.mxu0 0.0
    %1377 = vmatpush.msra.mxu0 0.0
    %1378 = vmatpush.msra.mxu0 0.0
    %1379 = vmatpush.msra.mxu0 0.0
    %1380 = vmatpush.msra.mxu0 %v1367
    %1381 = vmatpush.msra.mxu0 %v1366
    %1382 = vmatpush.msra.mxu0 %v1365
    %1383 = vmatpush.msra.mxu0 %v1364
    %1384 = vmatmul.f32.gmra.mxu0 %v417
    %v1385 = vpop.f32.mrf.mxu0
    %v1386 = vadd.f32 %v357, %v1385
    %1387 = vdwg.mxu0
    %vm1388 = vcmp.gt.f32.partialorder %v1386, 0.0
    %v1389 = vmul.f32 %v1386, 1.442695
    %v1390 = vpow.pop %v1389
    %v1391 = vsub.f32 %v1390, 1.0
    %v1392 = vsel %vm1388, %v1386, %v1391
    %v1393 = vadd.f32 %v1392, 1.0
    %v1394 = vmul.f32 %v1393, 0.04700217
    %v1395 = vadd.f32 %v1322, %v1394
    %v1396 = vmul.f32 %v323, 0.59754515
    %v1397 = vmul.f32 %v324, 0.59754515
    %v1398 = vmul.f32 %v325, 0.59754515
    %v1399 = vmul.f32 %v326, 0.59754515
    %v1400 = vadd.f32 %v1396, %v186
    %v1401 = vadd.f32 %v1397, %v187
    %v1402 = vadd.f32 %v1398, %v188
    %v1403 = vadd.f32 %v1399, %v189
    %v1404 = vmax.f32 %v1400, 0.0
    %v1405 = vmax.f32 %v1401, 0.0
    %v1406 = vmax.f32 %v1402, 0.0
    %v1407 = vmax.f32 %v1403, 0.0
    %1408 = vmatpush.msra.mxu0 0.0
    %1409 = vmatpush.msra.mxu0 0.0
    %1410 = vmatpush.msra.mxu0 0.0
    %1411 = vmatpush.msra.mxu0 0.0
    %1412 = vmatpush.msra.mxu0 0.0
    %1413 = vmatpush.msra.mxu0 0.0
    %1414 = vmatpush.msra.mxu0 0.0
    %1415 = vmatpush.msra.mxu0 0.0
    %1416 = vmatpush.msra.mxu0 0.0
    %1417 = vmatpush.msra.mxu0 0.0
    %1418 = vmatpush.msra.mxu0 0.0
    %1419 = vmatpush.msra.mxu0 0.0
    %1420 = vmatpush.msra.mxu0 %v1407
    %1421 = vmatpush.msra.mxu0 %v1406
    %1422 = vmatpush.msra.mxu0 %v1405
    %1423 = vmatpush.msra.mxu0 %v1404
    %1424 = vmatmul.f32.gmra.mxu0 %v372
    %v1425 = vpop.f32.mrf.mxu0
    %v1426 = vadd.f32 %v334, %v1425
    %1427 = vmatmul.f32.gmra.mxu0 %v375
    %v1428 = vpop.f32.mrf.mxu0
    %v1429 = vadd.f32 %v339, %v1428
    %1430 = vmatmul.f32.gmra.mxu0 %v378
    %v1431 = vpop.f32.mrf.mxu0
    %v1432 = vadd.f32 %v344, %v1431
    %1433 = vmatmul.f32.gmra.mxu0 %v381
    %v1434 = vpop.f32.mrf.mxu0
    %v1435 = vadd.f32 %v349, %v1434
    %1436 = vdwg.mxu0
    %v1437 = vmax.f32 %v1426, 0.0
    %v1438 = vmax.f32 %v1429, 0.0
    %v1439 = vmax.f32 %v1432, 0.0
    %v1440 = vmax.f32 %v1435, 0.0
    %1441 = vmatpush.msra.mxu0 0.0
    %1442 = vmatpush.msra.mxu0 0.0
    %1443 = vmatpush.msra.mxu0 0.0
    %1444 = vmatpush.msra.mxu0 0.0
    %1445 = vmatpush.msra.mxu0 0.0
    %1446 = vmatpush.msra.mxu0 0.0
    %1447 = vmatpush.msra.mxu0 0.0
    %1448 = vmatpush.msra.mxu0 0.0
    %1449 = vmatpush.msra.mxu0 0.0
    %1450 = vmatpush.msra.mxu0 0.0
    %1451 = vmatpush.msra.mxu0 0.0
    %1452 = vmatpush.msra.mxu0 0.0
    %1453 = vmatpush.msra.mxu0 %v1440
    %1454 = vmatpush.msra.mxu0 %v1439
    %1455 = vmatpush.msra.mxu0 %v1438
    %1456 = vmatpush.msra.mxu0 %v1437
    %1457 = vmatmul.f32.gmra.mxu0 %v417
    %v1458 = vpop.f32.mrf.mxu0
    %v1459 = vadd.f32 %v357, %v1458
    %1460 = vdwg.mxu0
    %vm1461 = vcmp.gt.f32.partialorder %v1459, 0.0
    %v1462 = vmul.f32 %v1459, 1.442695
    %v1463 = vpow.pop %v1462
    %v1464 = vsub.f32 %v1463, 1.0
    %v1465 = vsel %vm1461, %v1459, %v1464
    %v1466 = vadd.f32 %v1465, 1.0
    %v1467 = vmul.f32 %v1466, 0.048115615
    %v1468 = vadd.f32 %v1395, %v1467
    %v1469 = vmul.f32 %v323, 0.54900855
    %v1470 = vmul.f32 %v324, 0.54900855
    %v1471 = vmul.f32 %v325, 0.54900855
    %v1472 = vmul.f32 %v326, 0.54900855
    %v1473 = vadd.f32 %v1469, %v186
    %v1474 = vadd.f32 %v1470, %v187
    %v1475 = vadd.f32 %v1471, %v188
    %v1476 = vadd.f32 %v1472, %v189
    %v1477 = vmax.f32 %v1473, 0.0
    %v1478 = vmax.f32 %v1474, 0.0
    %v1479 = vmax.f32 %v1475, 0.0
    %v1480 = vmax.f32 %v1476, 0.0
    %1481 = vmatpush.msra.mxu0 0.0
    %1482 = vmatpush.msra.mxu0 0.0
    %1483 = vmatpush.msra.mxu0 0.0
    %1484 = vmatpush.msra.mxu0 0.0
    %1485 = vmatpush.msra.mxu0 0.0
    %1486 = vmatpush.msra.mxu0 0.0
    %1487 = vmatpush.msra.mxu0 0.0
    %1488 = vmatpush.msra.mxu0 0.0
    %1489 = vmatpush.msra.mxu0 0.0
    %1490 = vmatpush.msra.mxu0 0.0
    %1491 = vmatpush.msra.mxu0 0.0
    %1492 = vmatpush.msra.mxu0 0.0
    %1493 = vmatpush.msra.mxu0 %v1480
    %1494 = vmatpush.msra.mxu0 %v1479
    %1495 = vmatpush.msra.mxu0 %v1478
    %1496 = vmatpush.msra.mxu0 %v1477
    %1497 = vmatmul.f32.gmra.mxu0 %v372
    %v1498 = vpop.f32.mrf.mxu0
    %v1499 = vadd.f32 %v334, %v1498
    %1500 = vmatmul.f32.gmra.mxu0 %v375
    %v1501 = vpop.f32.mrf.mxu0
    %v1502 = vadd.f32 %v339, %v1501
    %1503 = vmatmul.f32.gmra.mxu0 %v378
    %v1504 = vpop.f32.mrf.mxu0
    %v1505 = vadd.f32 %v344, %v1504
    %1506 = vmatmul.f32.gmra.mxu0 %v381
    %v1507 = vpop.f32.mrf.mxu0
    %v1508 = vadd.f32 %v349, %v1507
    %1509 = vdwg.mxu0
    %v1510 = vmax.f32 %v1499, 0.0
    %v1511 = vmax.f32 %v1502, 0.0
    %v1512 = vmax.f32 %v1505, 0.0
    %v1513 = vmax.f32 %v1508, 0.0
    %1514 = vmatpush.msra.mxu0 0.0
    %1515 = vmatpush.msra.mxu0 0.0
    %1516 = vmatpush.msra.mxu0 0.0
    %1517 = vmatpush.msra.mxu0 0.0
    %1518 = vmatpush.msra.mxu0 0.0
    %1519 = vmatpush.msra.mxu0 0.0
    %1520 = vmatpush.msra.mxu0 0.0
    %1521 = vmatpush.msra.mxu0 0.0
    %1522 = vmatpush.msra.mxu0 0.0
    %1523 = vmatpush.msra.mxu0 0.0
    %1524 = vmatpush.msra.mxu0 0.0
    %1525 = vmatpush.msra.mxu0 0.0
    %1526 = vmatpush.msra.mxu0 %v1513
    %1527 = vmatpush.msra.mxu0 %v1512
    %1528 = vmatpush.msra.mxu0 %v1511
    %1529 = vmatpush.msra.mxu0 %v1510
    %1530 = vmatmul.f32.gmra.mxu0 %v417
    %v1531 = vpop.f32.mrf.mxu0
    %v1532 = vadd.f32 %v357, %v1531
    %1533 = vdwg.mxu0
    %vm1534 = vcmp.gt.f32.partialorder %v1532, 0.0
    %v1535 = vmul.f32 %v1532, 1.442695
    %v1536 = vpow.pop %v1535
    %v1537 = vsub.f32 %v1536, 1.0
    %v1538 = vsel %vm1534, %v1532, %v1537
    %v1539 = vadd.f32 %v1538, 1.0
    %v1540 = vmul.f32 %v1539, 0.048879642
    %v1541 = vadd.f32 %v1468, %v1540
    %v1542 = vmul.f32 %v323, 0.5
    %v1543 = vmul.f32 %v324, 0.5
    %v1544 = vmul.f32 %v325, 0.5
    %v1545 = vmul.f32 %v326, 0.5
    %v1546 = vadd.f32 %v1542, %v186
    %v1547 = vadd.f32 %v1543, %v187
    %v1548 = vadd.f32 %v1544, %v188
    %v1549 = vadd.f32 %v1545, %v189
    %v1550 = vmax.f32 %v1546, 0.0
    %v1551 = vmax.f32 %v1547, 0.0
    %v1552 = vmax.f32 %v1548, 0.0
    %v1553 = vmax.f32 %v1549, 0.0
    %1554 = vmatpush.msra.mxu0 0.0
    %1555 = vmatpush.msra.mxu0 0.0
    %1556 = vmatpush.msra.mxu0 0.0
    %1557 = vmatpush.msra.mxu0 0.0
    %1558 = vmatpush.msra.mxu0 0.0
    %1559 = vmatpush.msra.mxu0 0.0
    %1560 = vmatpush.msra.mxu0 0.0
    %1561 = vmatpush.msra.mxu0 0.0
    %1562 = vmatpush.msra.mxu0 0.0
    %1563 = vmatpush.msra.mxu0 0.0
    %1564 = vmatpush.msra.mxu0 0.0
    %1565 = vmatpush.msra.mxu0 0.0
    %1566 = vmatpush.msra.mxu0 %v1553
    %1567 = vmatpush.msra.mxu0 %v1552
    %1568 = vmatpush.msra.mxu0 %v1551
    %1569 = vmatpush.msra.mxu0 %v1550
    %1570 = vmatmul.f32.gmra.mxu0 %v372
    %v1571 = vpop.f32.mrf.mxu0
    %v1572 = vadd.f32 %v334, %v1571
    %1573 = vmatmul.f32.gmra.mxu0 %v375
    %v1574 = vpop.f32.mrf.mxu0
    %v1575 = vadd.f32 %v339, %v1574
    %1576 = vmatmul.f32.gmra.mxu0 %v378
    %v1577 = vpop.f32.mrf.mxu0
    %v1578 = vadd.f32 %v344, %v1577
    %1579 = vmatmul.f32.gmra.mxu0 %v381
    %v1580 = vpop.f32.mrf.mxu0
    %v1581 = vadd.f32 %v349, %v1580
    %1582 = vdwg.mxu0
    %v1583 = vmax.f32 %v1572, 0.0
    %v1584 = vmax.f32 %v1575, 0.0
    %v1585 = vmax.f32 %v1578, 0.0
    %v1586 = vmax.f32 %v1581, 0.0
    %1587 = vmatpush.msra.mxu0 0.0
    %1588 = vmatpush.msra.mxu0 0.0
    %1589 = vmatpush.msra.mxu0 0.0
    %1590 = vmatpush.msra.mxu0 0.0
    %1591 = vmatpush.msra.mxu0 0.0
    %1592 = vmatpush.msra.mxu0 0.0
    %1593 = vmatpush.msra.mxu0 0.0
    %1594 = vmatpush.msra.mxu0 0.0
    %1595 = vmatpush.msra.mxu0 0.0
    %1596 = vmatpush.msra.mxu0 0.0
    %1597 = vmatpush.msra.mxu0 0.0
    %1598 = vmatpush.msra.mxu0 0.0
    %1599 = vmatpush.msra.mxu0 %v1586
    %1600 = vmatpush.msra.mxu0 %v1585
    %1601 = vmatpush.msra.mxu0 %v1584
    %1602 = vmatpush.msra.mxu0 %v1583
    %1603 = vmatmul.f32.gmra.mxu0 %v417
    %v1604 = vpop.f32.mrf.mxu0
    %v1605 = vadd.f32 %v357, %v1604
    %1606 = vdwg.mxu0
    %vm1607 = vcmp.gt.f32.partialorder %v1605, 0.0
    %v1608 = vmul.f32 %v1605, 1.442695
    %v1609 = vpow.pop %v1608
    %v1610 = vsub.f32 %v1609, 1.0
    %v1611 = vsel %vm1607, %v1605, %v1610
    %v1612 = vadd.f32 %v1611, 1.0
    %v1613 = vmul.f32 %v1612, 0.049058743
    %v1614 = vadd.f32 %v1541, %v1613
    %v1615 = vmul.f32 %v323, 0.45099142
    %v1616 = vmul.f32 %v324, 0.45099142
    %v1617 = vmul.f32 %v325, 0.45099142
    %v1618 = vmul.f32 %v326, 0.45099142
    %v1619 = vadd.f32 %v1615, %v186
    %v1620 = vadd.f32 %v1616, %v187
    %v1621 = vadd.f32 %v1617, %v188
    %v1622 = vadd.f32 %v1618, %v189
    %v1623 = vmax.f32 %v1619, 0.0
    %v1624 = vmax.f32 %v1620, 0.0
    %v1625 = vmax.f32 %v1621, 0.0
    %v1626 = vmax.f32 %v1622, 0.0
    %1627 = vmatpush.msra.mxu0 0.0
    %1628 = vmatpush.msra.mxu0 0.0
    %1629 = vmatpush.msra.mxu0 0.0
    %1630 = vmatpush.msra.mxu0 0.0
    %1631 = vmatpush.msra.mxu0 0.0
    %1632 = vmatpush.msra.mxu0 0.0
    %1633 = vmatpush.msra.mxu0 0.0
    %1634 = vmatpush.msra.mxu0 0.0
    %1635 = vmatpush.msra.mxu0 0.0
    %1636 = vmatpush.msra.mxu0 0.0
    %1637 = vmatpush.msra.mxu0 0.0
    %1638 = vmatpush.msra.mxu0 0.0
    %1639 = vmatpush.msra.mxu0 %v1626
    %1640 = vmatpush.msra.mxu0 %v1625
    %1641 = vmatpush.msra.mxu0 %v1624
    %1642 = vmatpush.msra.mxu0 %v1623
    %1643 = vmatmul.f32.gmra.mxu0 %v372
    %v1644 = vpop.f32.mrf.mxu0
    %v1645 = vadd.f32 %v334, %v1644
    %1646 = vmatmul.f32.gmra.mxu0 %v375
    %v1647 = vpop.f32.mrf.mxu0
    %v1648 = vadd.f32 %v339, %v1647
    %1649 = vmatmul.f32.gmra.mxu0 %v378
    %v1650 = vpop.f32.mrf.mxu0
    %v1651 = vadd.f32 %v344, %v1650
    %1652 = vmatmul.f32.gmra.mxu0 %v381
    %v1653 = vpop.f32.mrf.mxu0
    %v1654 = vadd.f32 %v349, %v1653
    %1655 = vdwg.mxu0
    %v1656 = vmax.f32 %v1645, 0.0
    %v1657 = vmax.f32 %v1648, 0.0
    %v1658 = vmax.f32 %v1651, 0.0
    %v1659 = vmax.f32 %v1654, 0.0
    %1660 = vmatpush.msra.mxu0 0.0
    %1661 = vmatpush.msra.mxu0 0.0
    %1662 = vmatpush.msra.mxu0 0.0
    %1663 = vmatpush.msra.mxu0 0.0
    %1664 = vmatpush.msra.mxu0 0.0
    %1665 = vmatpush.msra.mxu0 0.0
    %1666 = vmatpush.msra.mxu0 0.0
    %1667 = vmatpush.msra.mxu0 0.0
    %1668 = vmatpush.msra.mxu0 0.0
    %1669 = vmatpush.msra.mxu0 0.0
    %1670 = vmatpush.msra.mxu0 0.0
    %1671 = vmatpush.msra.mxu0 0.0
    %1672 = vmatpush.msra.mxu0 %v1659
    %1673 = vmatpush.msra.mxu0 %v1658
    %1674 = vmatpush.msra.mxu0 %v1657
    %1675 = vmatpush.msra.mxu0 %v1656
    %1676 = vmatmul.f32.gmra.mxu0 %v417
    %v1677 = vpop.f32.mrf.mxu0
    %v1678 = vadd.f32 %v357, %v1677
    %1679 = vdwg.mxu0
    %vm1680 = vcmp.gt.f32.partialorder %v1678, 0.0
    %v1681 = vmul.f32 %v1678, 1.442695
    %v1682 = vpow.pop %v1681
    %v1683 = vsub.f32 %v1682, 1.0
    %v1684 = vsel %vm1680, %v1678, %v1683
    %v1685 = vadd.f32 %v1684, 1.0
    %v1686 = vmul.f32 %v1685, 0.048879642
    %v1687 = vadd.f32 %v1614, %v1686
    %v1688 = vmul.f32 %v323, 0.40245485
    %v1689 = vmul.f32 %v324, 0.40245485
    %v1690 = vmul.f32 %v325, 0.40245485
    %v1691 = vmul.f32 %v326, 0.40245485
    %v1692 = vadd.f32 %v1688, %v186
    %v1693 = vadd.f32 %v1689, %v187
    %v1694 = vadd.f32 %v1690, %v188
    %v1695 = vadd.f32 %v1691, %v189
    %v1696 = vmax.f32 %v1692, 0.0
    %v1697 = vmax.f32 %v1693, 0.0
    %v1698 = vmax.f32 %v1694, 0.0
    %v1699 = vmax.f32 %v1695, 0.0
    %1700 = vmatpush.msra.mxu0 0.0
    %1701 = vmatpush.msra.mxu0 0.0
    %1702 = vmatpush.msra.mxu0 0.0
    %1703 = vmatpush.msra.mxu0 0.0
    %1704 = vmatpush.msra.mxu0 0.0
    %1705 = vmatpush.msra.mxu0 0.0
    %1706 = vmatpush.msra.mxu0 0.0
    %1707 = vmatpush.msra.mxu0 0.0
    %1708 = vmatpush.msra.mxu0 0.0
    %1709 = vmatpush.msra.mxu0 0.0
    %1710 = vmatpush.msra.mxu0 0.0
    %1711 = vmatpush.msra.mxu0 0.0
    %1712 = vmatpush.msra.mxu0 %v1699
    %1713 = vmatpush.msra.mxu0 %v1698
    %1714 = vmatpush.msra.mxu0 %v1697
    %1715 = vmatpush.msra.mxu0 %v1696
    %1716 = vmatmul.f32.gmra.mxu0 %v372
    %v1717 = vpop.f32.mrf.mxu0
    %v1718 = vadd.f32 %v334, %v1717
    %1719 = vmatmul.f32.gmra.mxu0 %v375
    %v1720 = vpop.f32.mrf.mxu0
    %v1721 = vadd.f32 %v339, %v1720
    %1722 = vmatmul.f32.gmra.mxu0 %v378
    %v1723 = vpop.f32.mrf.mxu0
    %v1724 = vadd.f32 %v344, %v1723
    %1725 = vmatmul.f32.gmra.mxu0 %v381
    %v1726 = vpop.f32.mrf.mxu0
    %v1727 = vadd.f32 %v349, %v1726
    %1728 = vdwg.mxu0
    %v1729 = vmax.f32 %v1718, 0.0
    %v1730 = vmax.f32 %v1721, 0.0
    %v1731 = vmax.f32 %v1724, 0.0
    %v1732 = vmax.f32 %v1727, 0.0
    %1733 = vmatpush.msra.mxu0 0.0
    %1734 = vmatpush.msra.mxu0 0.0
    %1735 = vmatpush.msra.mxu0 0.0
    %1736 = vmatpush.msra.mxu0 0.0
    %1737 = vmatpush.msra.mxu0 0.0
    %1738 = vmatpush.msra.mxu0 0.0
    %1739 = vmatpush.msra.mxu0 0.0
    %1740 = vmatpush.msra.mxu0 0.0
    %1741 = vmatpush.msra.mxu0 0.0
    %1742 = vmatpush.msra.mxu0 0.0
    %1743 = vmatpush.msra.mxu0 0.0
    %1744 = vmatpush.msra.mxu0 0.0
    %1745 = vmatpush.msra.mxu0 %v1732
    %1746 = vmatpush.msra.mxu0 %v1731
    %1747 = vmatpush.msra.mxu0 %v1730
    %1748 = vmatpush.msra.mxu0 %v1729
    %1749 = vmatmul.f32.gmra.mxu0 %v417
    %v1750 = vpop.f32.mrf.mxu0
    %v1751 = vadd.f32 %v357, %v1750
    %1752 = vdwg.mxu0
    %vm1753 = vcmp.gt.f32.partialorder %v1751, 0.0
    %v1754 = vmul.f32 %v1751, 1.442695
    %v1755 = vpow.pop %v1754
    %v1756 = vsub.f32 %v1755, 1.0
    %v1757 = vsel %vm1753, %v1751, %v1756
    %v1758 = vadd.f32 %v1757, 1.0
    %v1759 = vmul.f32 %v1758, 0.048115615
    %v1760 = vadd.f32 %v1687, %v1759
    %v1761 = vmul.f32 %v323, 0.35485768
    %v1762 = vmul.f32 %v324, 0.35485768
    %v1763 = vmul.f32 %v325, 0.35485768
    %v1764 = vmul.f32 %v326, 0.35485768
    %v1765 = vadd.f32 %v1761, %v186
    %v1766 = vadd.f32 %v1762, %v187
    %v1767 = vadd.f32 %v1763, %v188
    %v1768 = vadd.f32 %v1764, %v189
    %v1769 = vmax.f32 %v1765, 0.0
    %v1770 = vmax.f32 %v1766, 0.0
    %v1771 = vmax.f32 %v1767, 0.0
    %v1772 = vmax.f32 %v1768, 0.0
    %1773 = vmatpush.msra.mxu0 0.0
    %1774 = vmatpush.msra.mxu0 0.0
    %1775 = vmatpush.msra.mxu0 0.0
    %1776 = vmatpush.msra.mxu0 0.0
    %1777 = vmatpush.msra.mxu0 0.0
    %1778 = vmatpush.msra.mxu0 0.0
    %1779 = vmatpush.msra.mxu0 0.0
    %1780 = vmatpush.msra.mxu0 0.0
    %1781 = vmatpush.msra.mxu0 0.0
    %1782 = vmatpush.msra.mxu0 0.0
    %1783 = vmatpush.msra.mxu0 0.0
    %1784 = vmatpush.msra.mxu0 0.0
    %1785 = vmatpush.msra.mxu0 %v1772
    %1786 = vmatpush.msra.mxu0 %v1771
    %1787 = vmatpush.msra.mxu0 %v1770
    %1788 = vmatpush.msra.mxu0 %v1769
    %1789 = vmatmul.f32.gmra.mxu0 %v372
    %v1790 = vpop.f32.mrf.mxu0
    %v1791 = vadd.f32 %v334, %v1790
    %1792 = vmatmul.f32.gmra.mxu0 %v375
    %v1793 = vpop.f32.mrf.mxu0
    %v1794 = vadd.f32 %v339, %v1793
    %1795 = vmatmul.f32.gmra.mxu0 %v378
    %v1796 = vpop.f32.mrf.mxu0
    %v1797 = vadd.f32 %v344, %v1796
    %1798 = vmatmul.f32.gmra.mxu0 %v381
    %v1799 = vpop.f32.mrf.mxu0
    %v1800 = vadd.f32 %v349, %v1799
    %1801 = vdwg.mxu0
    %v1802 = vmax.f32 %v1791, 0.0
    %v1803 = vmax.f32 %v1794, 0.0
    %v1804 = vmax.f32 %v1797, 0.0
    %v1805 = vmax.f32 %v1800, 0.0
    %1806 = vmatpush.msra.mxu0 0.0
    %1807 = vmatpush.msra.mxu0 0.0
    %1808 = vmatpush.msra.mxu0 0.0
    %1809 = vmatpush.msra.mxu0 0.0
    %1810 = vmatpush.msra.mxu0 0.0
    %1811 = vmatpush.msra.mxu0 0.0
    %1812 = vmatpush.msra.mxu0 0.0
    %1813 = vmatpush.msra.mxu0 0.0
    %1814 = vmatpush.msra.mxu0 0.0
    %1815 = vmatpush.msra.mxu0 0.0
    %1816 = vmatpush.msra.mxu0 0.0
    %1817 = vmatpush.msra.mxu0 0.0
    %1818 = vmatpush.msra.mxu0 %v1805
    %1819 = vmatpush.msra.mxu0 %v1804
    %1820 = vmatpush.msra.mxu0 %v1803
    %1821 = vmatpush.msra.mxu0 %v1802
    %1822 = vmatmul.f32.gmra.mxu0 %v417
    %v1823 = vpop.f32.mrf.mxu0
    %v1824 = vadd.f32 %v357, %v1823
    %1825 = vdwg.mxu0
    %vm1826 = vcmp.gt.f32.partialorder %v1824, 0.0
    %v1827 = vmul.f32 %v1824, 1.442695
    %v1828 = vpow.pop %v1827
    %v1829 = vsub.f32 %v1828, 1.0
    %v1830 = vsel %vm1826, %v1824, %v1829
    %v1831 = vadd.f32 %v1830, 1.0
    %v1832 = vmul.f32 %v1831, 0.04700217
    %v1833 = vadd.f32 %v1760, %v1832
    %v1834 = vmul.f32 %v323, 0.3086583
    %v1835 = vmul.f32 %v324, 0.3086583
    %v1836 = vmul.f32 %v325, 0.3086583
    %v1837 = vmul.f32 %v326, 0.3086583
    %v1838 = vadd.f32 %v1834, %v186
    %v1839 = vadd.f32 %v1835, %v187
    %v1840 = vadd.f32 %v1836, %v188
    %v1841 = vadd.f32 %v1837, %v189
    %v1842 = vmax.f32 %v1838, 0.0
    %v1843 = vmax.f32 %v1839, 0.0
    %v1844 = vmax.f32 %v1840, 0.0
    %v1845 = vmax.f32 %v1841, 0.0
    %1846 = vmatpush.msra.mxu0 0.0
    %1847 = vmatpush.msra.mxu0 0.0
    %1848 = vmatpush.msra.mxu0 0.0
    %1849 = vmatpush.msra.mxu0 0.0
    %1850 = vmatpush.msra.mxu0 0.0
    %1851 = vmatpush.msra.mxu0 0.0
    %1852 = vmatpush.msra.mxu0 0.0
    %1853 = vmatpush.msra.mxu0 0.0
    %1854 = vmatpush.msra.mxu0 0.0
    %1855 = vmatpush.msra.mxu0 0.0
    %1856 = vmatpush.msra.mxu0 0.0
    %1857 = vmatpush.msra.mxu0 0.0
    %1858 = vmatpush.msra.mxu0 %v1845
    %1859 = vmatpush.msra.mxu0 %v1844
    %1860 = vmatpush.msra.mxu0 %v1843
    %1861 = vmatpush.msra.mxu0 %v1842
    %1862 = vmatmul.f32.gmra.mxu0 %v372
    %v1863 = vpop.f32.mrf.mxu0
    %v1864 = vadd.f32 %v334, %v1863
    %1865 = vmatmul.f32.gmra.mxu0 %v375
    %v1866 = vpop.f32.mrf.mxu0
    %v1867 = vadd.f32 %v339, %v1866
    %1868 = vmatmul.f32.gmra.mxu0 %v378
    %v1869 = vpop.f32.mrf.mxu0
    %v1870 = vadd.f32 %v344, %v1869
    %1871 = vmatmul.f32.gmra.mxu0 %v381
    %v1872 = vpop.f32.mrf.mxu0
    %v1873 = vadd.f32 %v349, %v1872
    %1874 = vdwg.mxu0
    %v1875 = vmax.f32 %v1864, 0.0
    %v1876 = vmax.f32 %v1867, 0.0
    %v1877 = vmax.f32 %v1870, 0.0
    %v1878 = vmax.f32 %v1873, 0.0
    %1879 = vmatpush.msra.mxu0 0.0
    %1880 = vmatpush.msra.mxu0 0.0
    %1881 = vmatpush.msra.mxu0 0.0
    %1882 = vmatpush.msra.mxu0 0.0
    %1883 = vmatpush.msra.mxu0 0.0
    %1884 = vmatpush.msra.mxu0 0.0
    %1885 = vmatpush.msra.mxu0 0.0
    %1886 = vmatpush.msra.mxu0 0.0
    %1887 = vmatpush.msra.mxu0 0.0
    %1888 = vmatpush.msra.mxu0 0.0
    %1889 = vmatpush.msra.mxu0 0.0
    %1890 = vmatpush.msra.mxu0 0.0
    %1891 = vmatpush.msra.mxu0 %v1878
    %1892 = vmatpush.msra.mxu0 %v1877
    %1893 = vmatpush.msra.mxu0 %v1876
    %1894 = vmatpush.msra.mxu0 %v1875
    %1895 = vmatmul.f32.gmra.mxu0 %v417
    %v1896 = vpop.f32.mrf.mxu0
    %v1897 = vadd.f32 %v357, %v1896
    %1898 = vdwg.mxu0
    %vm1899 = vcmp.gt.f32.partialorder %v1897, 0.0
    %v1900 = vmul.f32 %v1897, 1.442695
    %v1901 = vpow.pop %v1900
    %v1902 = vsub.f32 %v1901, 1.0
    %v1903 = vsel %vm1899, %v1897, %v1902
    %v1904 = vadd.f32 %v1903, 1.0
    %v1905 = vmul.f32 %v1904, 0.045322508
    %v1906 = vadd.f32 %v1833, %v1905
    %v1907 = vmul.f32 %v323, 0.26430163
    %v1908 = vmul.f32 %v324, 0.26430163
    %v1909 = vmul.f32 %v325, 0.26430163
    %v1910 = vmul.f32 %v326, 0.26430163
    %v1911 = vadd.f32 %v1907, %v186
    %v1912 = vadd.f32 %v1908, %v187
    %v1913 = vadd.f32 %v1909, %v188
    %v1914 = vadd.f32 %v1910, %v189
    %v1915 = vmax.f32 %v1911, 0.0
    %v1916 = vmax.f32 %v1912, 0.0
    %v1917 = vmax.f32 %v1913, 0.0
    %v1918 = vmax.f32 %v1914, 0.0
    %1919 = vmatpush.msra.mxu0 0.0
    %1920 = vmatpush.msra.mxu0 0.0
    %1921 = vmatpush.msra.mxu0 0.0
    %1922 = vmatpush.msra.mxu0 0.0
    %1923 = vmatpush.msra.mxu0 0.0
    %1924 = vmatpush.msra.mxu0 0.0
    %1925 = vmatpush.msra.mxu0 0.0
    %1926 = vmatpush.msra.mxu0 0.0
    %1927 = vmatpush.msra.mxu0 0.0
    %1928 = vmatpush.msra.mxu0 0.0
    %1929 = vmatpush.msra.mxu0 0.0
    %1930 = vmatpush.msra.mxu0 0.0
    %1931 = vmatpush.msra.mxu0 %v1918
    %1932 = vmatpush.msra.mxu0 %v1917
    %1933 = vmatpush.msra.mxu0 %v1916
    %1934 = vmatpush.msra.mxu0 %v1915
    %1935 = vmatmul.f32.gmra.mxu0 %v372
    %v1936 = vpop.f32.mrf.mxu0
    %v1937 = vadd.f32 %v334, %v1936
    %1938 = vmatmul.f32.gmra.mxu0 %v375
    %v1939 = vpop.f32.mrf.mxu0
    %v1940 = vadd.f32 %v339, %v1939
    %1941 = vmatmul.f32.gmra.mxu0 %v378
    %v1942 = vpop.f32.mrf.mxu0
    %v1943 = vadd.f32 %v344, %v1942
    %1944 = vmatmul.f32.gmra.mxu0 %v381
    %v1945 = vpop.f32.mrf.mxu0
    %v1946 = vadd.f32 %v349, %v1945
    %1947 = vdwg.mxu0
    %v1948 = vmax.f32 %v1937, 0.0
    %v1949 = vmax.f32 %v1940, 0.0
    %v1950 = vmax.f32 %v1943, 0.0
    %v1951 = vmax.f32 %v1946, 0.0
    %1952 = vmatpush.msra.mxu0 0.0
    %1953 = vmatpush.msra.mxu0 0.0
    %1954 = vmatpush.msra.mxu0 0.0
    %1955 = vmatpush.msra.mxu0 0.0
    %1956 = vmatpush.msra.mxu0 0.0
    %1957 = vmatpush.msra.mxu0 0.0
    %1958 = vmatpush.msra.mxu0 0.0
    %1959 = vmatpush.msra.mxu0 0.0
    %1960 = vmatpush.msra.mxu0 0.0
    %1961 = vmatpush.msra.mxu0 0.0
    %1962 = vmatpush.msra.mxu0 0.0
    %1963 = vmatpush.msra.mxu0 0.0
    %1964 = vmatpush.msra.mxu0 %v1951
    %1965 = vmatpush.msra.mxu0 %v1950
    %1966 = vmatpush.msra.mxu0 %v1949
    %1967 = vmatpush.msra.mxu0 %v1948
    %1968 = vmatmul.f32.gmra.mxu0 %v417
    %v1969 = vpop.f32.mrf.mxu0
    %v1970 = vadd.f32 %v357, %v1969
    %1971 = vdwg.mxu0
    %vm1972 = vcmp.gt.f32.partialorder %v1970, 0.0
    %v1973 = vmul.f32 %v1970, 1.442695
    %v1974 = vpow.pop %v1973
    %v1975 = vsub.f32 %v1974, 1.0
    %v1976 = vsel %vm1972, %v1970, %v1975
    %v1977 = vadd.f32 %v1976, 1.0
    %v1978 = vmul.f32 %v1977, 0.04331932
    %v1979 = vadd.f32 %v1906, %v1978
    %v1980 = vmul.f32 %v323, 0.22221488
    %v1981 = vmul.f32 %v324, 0.22221488
    %v1982 = vmul.f32 %v325, 0.22221488
    %v1983 = vmul.f32 %v326, 0.22221488
    %v1984 = vadd.f32 %v1980, %v186
    %v1985 = vadd.f32 %v1981, %v187
    %v1986 = vadd.f32 %v1982, %v188
    %v1987 = vadd.f32 %v1983, %v189
    %v1988 = vmax.f32 %v1984, 0.0
    %v1989 = vmax.f32 %v1985, 0.0
    %v1990 = vmax.f32 %v1986, 0.0
    %v1991 = vmax.f32 %v1987, 0.0
    %1992 = vmatpush.msra.mxu0 0.0
    %1993 = vmatpush.msra.mxu0 0.0
    %1994 = vmatpush.msra.mxu0 0.0
    %1995 = vmatpush.msra.mxu0 0.0
    %1996 = vmatpush.msra.mxu0 0.0
    %1997 = vmatpush.msra.mxu0 0.0
    %1998 = vmatpush.msra.mxu0 0.0
    %1999 = vmatpush.msra.mxu0 0.0
    %2000 = vmatpush.msra.mxu0 0.0
    %2001 = vmatpush.msra.mxu0 0.0
    %2002 = vmatpush.msra.mxu0 0.0
    %2003 = vmatpush.msra.mxu0 0.0
    %2004 = vmatpush.msra.mxu0 %v1991
    %2005 = vmatpush.msra.mxu0 %v1990
    %2006 = vmatpush.msra.mxu0 %v1989
    %2007 = vmatpush.msra.mxu0 %v1988
    %2008 = vmatmul.f32.gmra.mxu0 %v372
    %v2009 = vpop.f32.mrf.mxu0
    %v2010 = vadd.f32 %v334, %v2009
    %2011 = vmatmul.f32.gmra.mxu0 %v375
    %v2012 = vpop.f32.mrf.mxu0
    %v2013 = vadd.f32 %v339, %v2012
    %2014 = vmatmul.f32.gmra.mxu0 %v378
    %v2015 = vpop.f32.mrf.mxu0
    %v2016 = vadd.f32 %v344, %v2015
    %2017 = vmatmul.f32.gmra.mxu0 %v381
    %v2018 = vpop.f32.mrf.mxu0
    %v2019 = vadd.f32 %v349, %v2018
    %2020 = vdwg.mxu0
    %v2021 = vmax.f32 %v2010, 0.0
    %v2022 = vmax.f32 %v2013, 0.0
    %v2023 = vmax.f32 %v2016, 0.0
    %v2024 = vmax.f32 %v2019, 0.0
    %2025 = vmatpush.msra.mxu0 0.0
    %2026 = vmatpush.msra.mxu0 0.0
    %2027 = vmatpush.msra.mxu0 0.0
    %2028 = vmatpush.msra.mxu0 0.0
    %2029 = vmatpush.msra.mxu0 0.0
    %2030 = vmatpush.msra.mxu0 0.0
    %2031 = vmatpush.msra.mxu0 0.0
    %2032 = vmatpush.msra.mxu0 0.0
    %2033 = vmatpush.msra.mxu0 0.0
    %2034 = vmatpush.msra.mxu0 0.0
    %2035 = vmatpush.msra.mxu0 0.0
    %2036 = vmatpush.msra.mxu0 0.0
    %2037 = vmatpush.msra.mxu0 %v2024
    %2038 = vmatpush.msra.mxu0 %v2023
    %2039 = vmatpush.msra.mxu0 %v2022
    %2040 = vmatpush.msra.mxu0 %v2021
    %2041 = vmatmul.f32.gmra.mxu0 %v417
    %v2042 = vpop.f32.mrf.mxu0
    %v2043 = vadd.f32 %v357, %v2042
    %2044 = vdwg.mxu0
    %vm2045 = vcmp.gt.f32.partialorder %v2043, 0.0
    %v2046 = vmul.f32 %v2043, 1.442695
    %v2047 = vpow.pop %v2046
    %v2048 = vsub.f32 %v2047, 1.0
    %v2049 = vsel %vm2045, %v2043, %v2048
    %v2050 = vadd.f32 %v2049, 1.0
    %v2051 = vmul.f32 %v2050, 0.040786862
    %v2052 = vadd.f32 %v1979, %v2051
    %v2053 = vmul.f32 %v323, 0.18280336
    %v2054 = vmul.f32 %v324, 0.18280336
    %v2055 = vmul.f32 %v325, 0.18280336
    %v2056 = vmul.f32 %v326, 0.18280336
    %v2057 = vadd.f32 %v2053, %v186
    %v2058 = vadd.f32 %v2054, %v187
    %v2059 = vadd.f32 %v2055, %v188
    %v2060 = vadd.f32 %v2056, %v189
    %v2061 = vmax.f32 %v2057, 0.0
    %v2062 = vmax.f32 %v2058, 0.0
    %v2063 = vmax.f32 %v2059, 0.0
    %v2064 = vmax.f32 %v2060, 0.0
    %2065 = vmatpush.msra.mxu0 0.0
    %2066 = vmatpush.msra.mxu0 0.0
    %2067 = vmatpush.msra.mxu0 0.0
    %2068 = vmatpush.msra.mxu0 0.0
    %2069 = vmatpush.msra.mxu0 0.0
    %2070 = vmatpush.msra.mxu0 0.0
    %2071 = vmatpush.msra.mxu0 0.0
    %2072 = vmatpush.msra.mxu0 0.0
    %2073 = vmatpush.msra.mxu0 0.0
    %2074 = vmatpush.msra.mxu0 0.0
    %2075 = vmatpush.msra.mxu0 0.0
    %2076 = vmatpush.msra.mxu0 0.0
    %2077 = vmatpush.msra.mxu0 %v2064
    %2078 = vmatpush.msra.mxu0 %v2063
    %2079 = vmatpush.msra.mxu0 %v2062
    %2080 = vmatpush.msra.mxu0 %v2061
    %2081 = vmatmul.f32.gmra.mxu0 %v372
    %v2082 = vpop.f32.mrf.mxu0
    %v2083 = vadd.f32 %v334, %v2082
    %2084 = vmatmul.f32.gmra.mxu0 %v375
    %v2085 = vpop.f32.mrf.mxu0
    %v2086 = vadd.f32 %v339, %v2085
    %2087 = vmatmul.f32.gmra.mxu0 %v378
    %v2088 = vpop.f32.mrf.mxu0
    %v2089 = vadd.f32 %v344, %v2088
    %2090 = vmatmul.f32.gmra.mxu0 %v381
    %v2091 = vpop.f32.mrf.mxu0
    %v2092 = vadd.f32 %v349, %v2091
    %2093 = vdwg.mxu0
    %v2094 = vmax.f32 %v2083, 0.0
    %v2095 = vmax.f32 %v2086, 0.0
    %v2096 = vmax.f32 %v2089, 0.0
    %v2097 = vmax.f32 %v2092, 0.0
    %2098 = vmatpush.msra.mxu0 0.0
    %2099 = vmatpush.msra.mxu0 0.0
    %2100 = vmatpush.msra.mxu0 0.0
    %2101 = vmatpush.msra.mxu0 0.0
    %2102 = vmatpush.msra.mxu0 0.0
    %2103 = vmatpush.msra.mxu0 0.0
    %2104 = vmatpush.msra.mxu0 0.0
    %2105 = vmatpush.msra.mxu0 0.0
    %2106 = vmatpush.msra.mxu0 0.0
    %2107 = vmatpush.msra.mxu0 0.0
    %2108 = vmatpush.msra.mxu0 0.0
    %2109 = vmatpush.msra.mxu0 0.0
    %2110 = vmatpush.msra.mxu0 %v2097
    %2111 = vmatpush.msra.mxu0 %v2096
    %2112 = vmatpush.msra.mxu0 %v2095
    %2113 = vmatpush.msra.mxu0 %v2094
    %2114 = vmatmul.f32.gmra.mxu0 %v417
    %v2115 = vpop.f32.mrf.mxu0
    %v2116 = vadd.f32 %v357, %v2115
    %2117 = vdwg.mxu0
    %vm2118 = vcmp.gt.f32.partialorder %v2116, 0.0
    %v2119 = vmul.f32 %v2116, 1.442695
    %v2120 = vpow.pop %v2119
    %v2121 = vsub.f32 %v2120, 1.0
    %v2122 = vsel %vm2118, %v2116, %v2121
    %v2123 = vadd.f32 %v2122, 1.0
    %v2124 = vmul.f32 %v2123, 0.037972447
    %v2125 = vadd.f32 %v2052, %v2124
    %v2126 = vmul.f32 %v323, 0.14644662
    %v2127 = vmul.f32 %v324, 0.14644662
    %v2128 = vmul.f32 %v325, 0.14644662
    %v2129 = vmul.f32 %v326, 0.14644662
    %v2130 = vadd.f32 %v2126, %v186
    %v2131 = vadd.f32 %v2127, %v187
    %v2132 = vadd.f32 %v2128, %v188
    %v2133 = vadd.f32 %v2129, %v189
    %v2134 = vmax.f32 %v2130, 0.0
    %v2135 = vmax.f32 %v2131, 0.0
    %v2136 = vmax.f32 %v2132, 0.0
    %v2137 = vmax.f32 %v2133, 0.0
    %2138 = vmatpush.msra.mxu0 0.0
    %2139 = vmatpush.msra.mxu0 0.0
    %2140 = vmatpush.msra.mxu0 0.0
    %2141 = vmatpush.msra.mxu0 0.0
    %2142 = vmatpush.msra.mxu0 0.0
    %2143 = vmatpush.msra.mxu0 0.0
    %2144 = vmatpush.msra.mxu0 0.0
    %2145 = vmatpush.msra.mxu0 0.0
    %2146 = vmatpush.msra.mxu0 0.0
    %2147 = vmatpush.msra.mxu0 0.0
    %2148 = vmatpush.msra.mxu0 0.0
    %2149 = vmatpush.msra.mxu0 0.0
    %2150 = vmatpush.msra.mxu0 %v2137
    %2151 = vmatpush.msra.mxu0 %v2136
    %2152 = vmatpush.msra.mxu0 %v2135
    %2153 = vmatpush.msra.mxu0 %v2134
    %2154 = vmatmul.f32.gmra.mxu0 %v372
    %v2155 = vpop.f32.mrf.mxu0
    %v2156 = vadd.f32 %v334, %v2155
    %2157 = vmatmul.f32.gmra.mxu0 %v375
    %v2158 = vpop.f32.mrf.mxu0
    %v2159 = vadd.f32 %v339, %v2158
    %2160 = vmatmul.f32.gmra.mxu0 %v378
    %v2161 = vpop.f32.mrf.mxu0
    %v2162 = vadd.f32 %v344, %v2161
    %2163 = vmatmul.f32.gmra.mxu0 %v381
    %v2164 = vpop.f32.mrf.mxu0
    %v2165 = vadd.f32 %v349, %v2164
    %2166 = vdwg.mxu0
    %v2167 = vmax.f32 %v2156, 0.0
    %v2168 = vmax.f32 %v2159, 0.0
    %v2169 = vmax.f32 %v2162, 0.0
    %v2170 = vmax.f32 %v2165, 0.0
    %2171 = vmatpush.msra.mxu0 0.0
    %2172 = vmatpush.msra.mxu0 0.0
    %2173 = vmatpush.msra.mxu0 0.0
    %2174 = vmatpush.msra.mxu0 0.0
    %2175 = vmatpush.msra.mxu0 0.0
    %2176 = vmatpush.msra.mxu0 0.0
    %2177 = vmatpush.msra.mxu0 0.0
    %2178 = vmatpush.msra.mxu0 0.0
    %2179 = vmatpush.msra.mxu0 0.0
    %2180 = vmatpush.msra.mxu0 0.0
    %2181 = vmatpush.msra.mxu0 0.0
    %2182 = vmatpush.msra.mxu0 0.0
    %2183 = vmatpush.msra.mxu0 %v2170
    %2184 = vmatpush.msra.mxu0 %v2169
    %2185 = vmatpush.msra.mxu0 %v2168
    %2186 = vmatpush.msra.mxu0 %v2167
    %2187 = vmatmul.f32.gmra.mxu0 %v417
    %v2188 = vpop.f32.mrf.mxu0
    %v2189 = vadd.f32 %v357, %v2188
    %2190 = vdwg.mxu0
    %vm2191 = vcmp.gt.f32.partialorder %v2189, 0.0
    %v2192 = vmul.f32 %v2189, 1.442695
    %v2193 = vpow.pop %v2192
    %v2194 = vsub.f32 %v2193, 1.0
    %v2195 = vsel %vm2191, %v2189, %v2194
    %v2196 = vadd.f32 %v2195, 1.0
    %v2197 = vmul.f32 %v2196, 0.03468324
    %v2198 = vadd.f32 %v2125, %v2197
    %v2199 = vmul.f32 %v323, 0.11349478
    %v2200 = vmul.f32 %v324, 0.11349478
    %v2201 = vmul.f32 %v325, 0.11349478
    %v2202 = vmul.f32 %v326, 0.11349478
    %v2203 = vadd.f32 %v2199, %v186
    %v2204 = vadd.f32 %v2200, %v187
    %v2205 = vadd.f32 %v2201, %v188
    %v2206 = vadd.f32 %v2202, %v189
    %v2207 = vmax.f32 %v2203, 0.0
    %v2208 = vmax.f32 %v2204, 0.0
    %v2209 = vmax.f32 %v2205, 0.0
    %v2210 = vmax.f32 %v2206, 0.0
    %2211 = vmatpush.msra.mxu0 0.0
    %2212 = vmatpush.msra.mxu0 0.0
    %2213 = vmatpush.msra.mxu0 0.0
    %2214 = vmatpush.msra.mxu0 0.0
    %2215 = vmatpush.msra.mxu0 0.0
    %2216 = vmatpush.msra.mxu0 0.0
    %2217 = vmatpush.msra.mxu0 0.0
    %2218 = vmatpush.msra.mxu0 0.0
    %2219 = vmatpush.msra.mxu0 0.0
    %2220 = vmatpush.msra.mxu0 0.0
    %2221 = vmatpush.msra.mxu0 0.0
    %2222 = vmatpush.msra.mxu0 0.0
    %2223 = vmatpush.msra.mxu0 %v2210
    %2224 = vmatpush.msra.mxu0 %v2209
    %2225 = vmatpush.msra.mxu0 %v2208
    %2226 = vmatpush.msra.mxu0 %v2207
    %2227 = vmatmul.f32.gmra.mxu0 %v372
    %v2228 = vpop.f32.mrf.mxu0
    %v2229 = vadd.f32 %v334, %v2228
    %2230 = vmatmul.f32.gmra.mxu0 %v375
    %v2231 = vpop.f32.mrf.mxu0
    %v2232 = vadd.f32 %v339, %v2231
    %2233 = vmatmul.f32.gmra.mxu0 %v378
    %v2234 = vpop.f32.mrf.mxu0
    %v2235 = vadd.f32 %v344, %v2234
    %2236 = vmatmul.f32.gmra.mxu0 %v381
    %v2237 = vpop.f32.mrf.mxu0
    %v2238 = vadd.f32 %v349, %v2237
    %2239 = vdwg.mxu0
    %v2240 = vmax.f32 %v2229, 0.0
    %v2241 = vmax.f32 %v2232, 0.0
    %v2242 = vmax.f32 %v2235, 0.0
    %v2243 = vmax.f32 %v2238, 0.0
    %2244 = vmatpush.msra.mxu0 0.0
    %2245 = vmatpush.msra.mxu0 0.0
    %2246 = vmatpush.msra.mxu0 0.0
    %2247 = vmatpush.msra.mxu0 0.0
    %2248 = vmatpush.msra.mxu0 0.0
    %2249 = vmatpush.msra.mxu0 0.0
    %2250 = vmatpush.msra.mxu0 0.0
    %2251 = vmatpush.msra.mxu0 0.0
    %2252 = vmatpush.msra.mxu0 0.0
    %2253 = vmatpush.msra.mxu0 0.0
    %2254 = vmatpush.msra.mxu0 0.0
    %2255 = vmatpush.msra.mxu0 0.0
    %2256 = vmatpush.msra.mxu0 %v2243
    %2257 = vmatpush.msra.mxu0 %v2242
    %2258 = vmatpush.msra.mxu0 %v2241
    %2259 = vmatpush.msra.mxu0 %v2240
    %2260 = vmatmul.f32.gmra.mxu0 %v417
    %v2261 = vpop.f32.mrf.mxu0
    %v2262 = vadd.f32 %v357, %v2261
    %2263 = vdwg.mxu0
    %vm2264 = vcmp.gt.f32.partialorder %v2262, 0.0
    %v2265 = vmul.f32 %v2262, 1.442695
    %v2266 = vpow.pop %v2265
    %v2267 = vsub.f32 %v2266, 1.0
    %v2268 = vsel %vm2264, %v2262, %v2267
    %v2269 = vadd.f32 %v2268, 1.0
    %v2270 = vmul.f32 %v2269, 0.031166602
    %v2271 = vadd.f32 %v2198, %v2270
    %v2272 = vmul.f32 %v323, 0.0842652
    %v2273 = vmul.f32 %v324, 0.0842652
    %v2274 = vmul.f32 %v325, 0.0842652
    %v2275 = vmul.f32 %v326, 0.0842652
    %v2276 = vadd.f32 %v2272, %v186
    %v2277 = vadd.f32 %v2273, %v187
    %v2278 = vadd.f32 %v2274, %v188
    %v2279 = vadd.f32 %v2275, %v189
    %v2280 = vmax.f32 %v2276, 0.0
    %v2281 = vmax.f32 %v2277, 0.0
    %v2282 = vmax.f32 %v2278, 0.0
    %v2283 = vmax.f32 %v2279, 0.0
    %2284 = vmatpush.msra.mxu0 0.0
    %2285 = vmatpush.msra.mxu0 0.0
    %2286 = vmatpush.msra.mxu0 0.0
    %2287 = vmatpush.msra.mxu0 0.0
    %2288 = vmatpush.msra.mxu0 0.0
    %2289 = vmatpush.msra.mxu0 0.0
    %2290 = vmatpush.msra.mxu0 0.0
    %2291 = vmatpush.msra.mxu0 0.0
    %2292 = vmatpush.msra.mxu0 0.0
    %2293 = vmatpush.msra.mxu0 0.0
    %2294 = vmatpush.msra.mxu0 0.0
    %2295 = vmatpush.msra.mxu0 0.0
    %2296 = vmatpush.msra.mxu0 %v2283
    %2297 = vmatpush.msra.mxu0 %v2282
    %2298 = vmatpush.msra.mxu0 %v2281
    %2299 = vmatpush.msra.mxu0 %v2280
    %2300 = vmatmul.f32.gmra.mxu0 %v372
    %v2301 = vpop.f32.mrf.mxu0
    %v2302 = vadd.f32 %v334, %v2301
    %2303 = vmatmul.f32.gmra.mxu0 %v375
    %v2304 = vpop.f32.mrf.mxu0
    %v2305 = vadd.f32 %v339, %v2304
    %2306 = vmatmul.f32.gmra.mxu0 %v378
    %v2307 = vpop.f32.mrf.mxu0
    %v2308 = vadd.f32 %v344, %v2307
    %2309 = vmatmul.f32.gmra.mxu0 %v381
    %v2310 = vpop.f32.mrf.mxu0
    %v2311 = vadd.f32 %v349, %v2310
    %2312 = vdwg.mxu0
    %v2313 = vmax.f32 %v2302, 0.0
    %v2314 = vmax.f32 %v2305, 0.0
    %v2315 = vmax.f32 %v2308, 0.0
    %v2316 = vmax.f32 %v2311, 0.0
    %2317 = vmatpush.msra.mxu0 0.0
    %2318 = vmatpush.msra.mxu0 0.0
    %2319 = vmatpush.msra.mxu0 0.0
    %2320 = vmatpush.msra.mxu0 0.0
    %2321 = vmatpush.msra.mxu0 0.0
    %2322 = vmatpush.msra.mxu0 0.0
    %2323 = vmatpush.msra.mxu0 0.0
    %2324 = vmatpush.msra.mxu0 0.0
    %2325 = vmatpush.msra.mxu0 0.0
    %2326 = vmatpush.msra.mxu0 0.0
    %2327 = vmatpush.msra.mxu0 0.0
    %2328 = vmatpush.msra.mxu0 0.0
    %2329 = vmatpush.msra.mxu0 %v2316
    %2330 = vmatpush.msra.mxu0 %v2315
    %2331 = vmatpush.msra.mxu0 %v2314
    %2332 = vmatpush.msra.mxu0 %v2313
    %2333 = vmatmul.f32.gmra.mxu0 %v417
    %v2334 = vpop.f32.mrf.mxu0
    %v2335 = vadd.f32 %v357, %v2334
    %2336 = vdwg.mxu0
    %vm2337 = vcmp.gt.f32.partialorder %v2335, 0.0
    %v2338 = vmul.f32 %v2335, 1.442695
    %v2339 = vpow.pop %v2338
    %v2340 = vsub.f32 %v2339, 1.0
    %v2341 = vsel %vm2337, %v2335, %v2340
    %v2342 = vadd.f32 %v2341, 1.0
    %v2343 = vmul.f32 %v2342, 0.027246961
    %v2344 = vadd.f32 %v2271, %v2343
    %v2345 = vmul.f32 %v323, 0.059039354
    %v2346 = vmul.f32 %v324, 0.059039354
    %v2347 = vmul.f32 %v325, 0.059039354
    %v2348 = vmul.f32 %v326, 0.059039354
    %v2349 = vadd.f32 %v2345, %v186
    %v2350 = vadd.f32 %v2346, %v187
    %v2351 = vadd.f32 %v2347, %v188
    %v2352 = vadd.f32 %v2348, %v189
    %v2353 = vmax.f32 %v2349, 0.0
    %v2354 = vmax.f32 %v2350, 0.0
    %v2355 = vmax.f32 %v2351, 0.0
    %v2356 = vmax.f32 %v2352, 0.0
    %2357 = vmatpush.msra.mxu0 0.0
    %2358 = vmatpush.msra.mxu0 0.0
    %2359 = vmatpush.msra.mxu0 0.0
    %2360 = vmatpush.msra.mxu0 0.0
    %2361 = vmatpush.msra.mxu0 0.0
    %2362 = vmatpush.msra.mxu0 0.0
    %2363 = vmatpush.msra.mxu0 0.0
    %2364 = vmatpush.msra.mxu0 0.0
    %2365 = vmatpush.msra.mxu0 0.0
    %2366 = vmatpush.msra.mxu0 0.0
    %2367 = vmatpush.msra.mxu0 0.0
    %2368 = vmatpush.msra.mxu0 0.0
    %2369 = vmatpush.msra.mxu0 %v2356
    %2370 = vmatpush.msra.mxu0 %v2355
    %2371 = vmatpush.msra.mxu0 %v2354
    %2372 = vmatpush.msra.mxu0 %v2353
    %2373 = vmatmul.f32.gmra.mxu0 %v372
    %v2374 = vpop.f32.mrf.mxu0
    %v2375 = vadd.f32 %v334, %v2374
    %2376 = vmatmul.f32.gmra.mxu0 %v375
    %v2377 = vpop.f32.mrf.mxu0
    %v2378 = vadd.f32 %v339, %v2377
    %2379 = vmatmul.f32.gmra.mxu0 %v378
    %v2380 = vpop.f32.mrf.mxu0
    %v2381 = vadd.f32 %v344, %v2380
    %2382 = vmatmul.f32.gmra.mxu0 %v381
    %v2383 = vpop.f32.mrf.mxu0
    %v2384 = vadd.f32 %v349, %v2383
    %2385 = vdwg.mxu0
    %v2386 = vmax.f32 %v2375, 0.0
    %v2387 = vmax.f32 %v2378, 0.0
    %v2388 = vmax.f32 %v2381, 0.0
    %v2389 = vmax.f32 %v2384, 0.0
    %2390 = vmatpush.msra.mxu0 0.0
    %2391 = vmatpush.msra.mxu0 0.0
    %2392 = vmatpush.msra.mxu0 0.0
    %2393 = vmatpush.msra.mxu0 0.0
    %2394 = vmatpush.msra.mxu0 0.0
    %2395 = vmatpush.msra.mxu0 0.0
    %2396 = vmatpush.msra.mxu0 0.0
    %2397 = vmatpush.msra.mxu0 0.0
    %2398 = vmatpush.msra.mxu0 0.0
    %2399 = vmatpush.msra.mxu0 0.0
    %2400 = vmatpush.msra.mxu0 0.0
    %2401 = vmatpush.msra.mxu0 0.0
    %2402 = vmatpush.msra.mxu0 %v2389
    %2403 = vmatpush.msra.mxu0 %v2388
    %2404 = vmatpush.msra.mxu0 %v2387
    %2405 = vmatpush.msra.mxu0 %v2386
    %2406 = vmatmul.f32.gmra.mxu0 %v417
    %v2407 = vpop.f32.mrf.mxu0
    %v2408 = vadd.f32 %v357, %v2407
    %2409 = vdwg.mxu0
    %vm2410 = vcmp.gt.f32.partialorder %v2408, 0.0
    %v2411 = vmul.f32 %v2408, 1.442695
    %v2412 = vpow.pop %v2411
    %v2413 = vsub.f32 %v2412, 1.0
    %v2414 = vsel %vm2410, %v2408, %v2413
    %v2415 = vadd.f32 %v2414, 1.0
    %v2416 = vmul.f32 %v2415, 0.02316193
    %v2417 = vadd.f32 %v2344, %v2416
    %v2418 = vmul.f32 %v323, 0.038060248
    %v2419 = vmul.f32 %v324, 0.038060248
    %v2420 = vmul.f32 %v325, 0.038060248
    %v2421 = vmul.f32 %v326, 0.038060248
    %v2422 = vadd.f32 %v2418, %v186
    %v2423 = vadd.f32 %v2419, %v187
    %v2424 = vadd.f32 %v2420, %v188
    %v2425 = vadd.f32 %v2421, %v189
    %v2426 = vmax.f32 %v2422, 0.0
    %v2427 = vmax.f32 %v2423, 0.0
    %v2428 = vmax.f32 %v2424, 0.0
    %v2429 = vmax.f32 %v2425, 0.0
    %2430 = vmatpush.msra.mxu0 0.0
    %2431 = vmatpush.msra.mxu0 0.0
    %2432 = vmatpush.msra.mxu0 0.0
    %2433 = vmatpush.msra.mxu0 0.0
    %2434 = vmatpush.msra.mxu0 0.0
    %2435 = vmatpush.msra.mxu0 0.0
    %2436 = vmatpush.msra.mxu0 0.0
    %2437 = vmatpush.msra.mxu0 0.0
    %2438 = vmatpush.msra.mxu0 0.0
    %2439 = vmatpush.msra.mxu0 0.0
    %2440 = vmatpush.msra.mxu0 0.0
    %2441 = vmatpush.msra.mxu0 0.0
    %2442 = vmatpush.msra.mxu0 %v2429
    %2443 = vmatpush.msra.mxu0 %v2428
    %2444 = vmatpush.msra.mxu0 %v2427
    %2445 = vmatpush.msra.mxu0 %v2426
    %2446 = vmatmul.f32.gmra.mxu0 %v372
    %v2447 = vpop.f32.mrf.mxu0
    %v2448 = vadd.f32 %v334, %v2447
    %2449 = vmatmul.f32.gmra.mxu0 %v375
    %v2450 = vpop.f32.mrf.mxu0
    %v2451 = vadd.f32 %v339, %v2450
    %2452 = vmatmul.f32.gmra.mxu0 %v378
    %v2453 = vpop.f32.mrf.mxu0
    %v2454 = vadd.f32 %v344, %v2453
    %2455 = vmatmul.f32.gmra.mxu0 %v381
    %v2456 = vpop.f32.mrf.mxu0
    %v2457 = vadd.f32 %v349, %v2456
    %2458 = vdwg.mxu0
    %v2459 = vmax.f32 %v2448, 0.0
    %v2460 = vmax.f32 %v2451, 0.0
    %v2461 = vmax.f32 %v2454, 0.0
    %v2462 = vmax.f32 %v2457, 0.0
    %2463 = vmatpush.msra.mxu0 0.0
    %2464 = vmatpush.msra.mxu0 0.0
    %2465 = vmatpush.msra.mxu0 0.0
    %2466 = vmatpush.msra.mxu0 0.0
    %2467 = vmatpush.msra.mxu0 0.0
    %2468 = vmatpush.msra.mxu0 0.0
    %2469 = vmatpush.msra.mxu0 0.0
    %2470 = vmatpush.msra.mxu0 0.0
    %2471 = vmatpush.msra.mxu0 0.0
    %2472 = vmatpush.msra.mxu0 0.0
    %2473 = vmatpush.msra.mxu0 0.0
    %2474 = vmatpush.msra.mxu0 0.0
    %2475 = vmatpush.msra.mxu0 %v2462
    %2476 = vmatpush.msra.mxu0 %v2461
    %2477 = vmatpush.msra.mxu0 %v2460
    %2478 = vmatpush.msra.mxu0 %v2459
    %2479 = vmatmul.f32.gmra.mxu0 %v417
    %v2480 = vpop.f32.mrf.mxu0
    %v2481 = vadd.f32 %v357, %v2480
    %2482 = vdwg.mxu0
    %vm2483 = vcmp.gt.f32.partialorder %v2481, 0.0
    %v2484 = vmul.f32 %v2481, 1.442695
    %v2485 = vpow.pop %v2484
    %v2486 = vsub.f32 %v2485, 1.0
    %v2487 = vsel %vm2483, %v2481, %v2486
    %v2488 = vadd.f32 %v2487, 1.0
    %v2489 = vmul.f32 %v2488, 0.018766623
    %v2490 = vadd.f32 %v2417, %v2489
    %v2491 = vmul.f32 %v323, 0.021529824
    %v2492 = vmul.f32 %v324, 0.021529824
    %v2493 = vmul.f32 %v325, 0.021529824
    %v2494 = vmul.f32 %v326, 0.021529824
    %v2495 = vadd.f32 %v2491, %v186
    %v2496 = vadd.f32 %v2492, %v187
    %v2497 = vadd.f32 %v2493, %v188
    %v2498 = vadd.f32 %v2494, %v189
    %v2499 = vmax.f32 %v2495, 0.0
    %v2500 = vmax.f32 %v2496, 0.0
    %v2501 = vmax.f32 %v2497, 0.0
    %v2502 = vmax.f32 %v2498, 0.0
    %2503 = vmatpush.msra.mxu0 0.0
    %2504 = vmatpush.msra.mxu0 0.0
    %2505 = vmatpush.msra.mxu0 0.0
    %2506 = vmatpush.msra.mxu0 0.0
    %2507 = vmatpush.msra.mxu0 0.0
    %2508 = vmatpush.msra.mxu0 0.0
    %2509 = vmatpush.msra.mxu0 0.0
    %2510 = vmatpush.msra.mxu0 0.0
    %2511 = vmatpush.msra.mxu0 0.0
    %2512 = vmatpush.msra.mxu0 0.0
    %2513 = vmatpush.msra.mxu0 0.0
    %2514 = vmatpush.msra.mxu0 0.0
    %2515 = vmatpush.msra.mxu0 %v2502
    %2516 = vmatpush.msra.mxu0 %v2501
    %2517 = vmatpush.msra.mxu0 %v2500
    %2518 = vmatpush.msra.mxu0 %v2499
    %2519 = vmatmul.f32.gmra.mxu0 %v372
    %v2520 = vpop.f32.mrf.mxu0
    %v2521 = vadd.f32 %v334, %v2520
    %2522 = vmatmul.f32.gmra.mxu0 %v375
    %v2523 = vpop.f32.mrf.mxu0
    %v2524 = vadd.f32 %v339, %v2523
    %2525 = vmatmul.f32.gmra.mxu0 %v378
    %v2526 = vpop.f32.mrf.mxu0
    %v2527 = vadd.f32 %v344, %v2526
    %2528 = vmatmul.f32.gmra.mxu0 %v381
    %v2529 = vpop.f32.mrf.mxu0
    %v2530 = vadd.f32 %v349, %v2529
    %2531 = vdwg.mxu0
    %v2532 = vmax.f32 %v2521, 0.0
    %v2533 = vmax.f32 %v2524, 0.0
    %v2534 = vmax.f32 %v2527, 0.0
    %v2535 = vmax.f32 %v2530, 0.0
    %2536 = vmatpush.msra.mxu0 0.0
    %2537 = vmatpush.msra.mxu0 0.0
    %2538 = vmatpush.msra.mxu0 0.0
    %2539 = vmatpush.msra.mxu0 0.0
    %2540 = vmatpush.msra.mxu0 0.0
    %2541 = vmatpush.msra.mxu0 0.0
    %2542 = vmatpush.msra.mxu0 0.0
    %2543 = vmatpush.msra.mxu0 0.0
    %2544 = vmatpush.msra.mxu0 0.0
    %2545 = vmatpush.msra.mxu0 0.0
    %2546 = vmatpush.msra.mxu0 0.0
    %2547 = vmatpush.msra.mxu0 0.0
    %2548 = vmatpush.msra.mxu0 %v2535
    %2549 = vmatpush.msra.mxu0 %v2534
    %2550 = vmatpush.msra.mxu0 %v2533
    %2551 = vmatpush.msra.mxu0 %v2532
    %2552 = vmatmul.f32.gmra.mxu0 %v417
    %v2553 = vpop.f32.mrf.mxu0
    %v2554 = vadd.f32 %v357, %v2553
    %2555 = vdwg.mxu0
    %vm2556 = vcmp.gt.f32.partialorder %v2554, 0.0
    %v2557 = vmul.f32 %v2554, 1.442695
    %v2558 = vpow.pop %v2557
    %v2559 = vsub.f32 %v2558, 1.0
    %v2560 = vsel %vm2556, %v2554, %v2559
    %v2561 = vadd.f32 %v2560, 1.0
    %v2562 = vmul.f32 %v2561, 0.014259506
    %v2563 = vadd.f32 %v2490, %v2562
    %v2564 = vmul.f32 %v323, 0.009607375
    %v2565 = vmul.f32 %v324, 0.009607375
    %v2566 = vmul.f32 %v325, 0.009607375
    %v2567 = vmul.f32 %v326, 0.009607375
    %v2568 = vadd.f32 %v2564, %v186
    %v2569 = vadd.f32 %v2565, %v187
    %v2570 = vadd.f32 %v2566, %v188
    %v2571 = vadd.f32 %v2567, %v189
    %v2572 = vmax.f32 %v2568, 0.0
    %v2573 = vmax.f32 %v2569, 0.0
    %v2574 = vmax.f32 %v2570, 0.0
    %v2575 = vmax.f32 %v2571, 0.0
    %2576 = vmatpush.msra.mxu0 0.0
    %2577 = vmatpush.msra.mxu0 0.0
    %2578 = vmatpush.msra.mxu0 0.0
    %2579 = vmatpush.msra.mxu0 0.0
    %2580 = vmatpush.msra.mxu0 0.0
    %2581 = vmatpush.msra.mxu0 0.0
    %2582 = vmatpush.msra.mxu0 0.0
    %2583 = vmatpush.msra.mxu0 0.0
    %2584 = vmatpush.msra.mxu0 0.0
    %2585 = vmatpush.msra.mxu0 0.0
    %2586 = vmatpush.msra.mxu0 0.0
    %2587 = vmatpush.msra.mxu0 0.0
    %2588 = vmatpush.msra.mxu0 %v2575
    %2589 = vmatpush.msra.mxu0 %v2574
    %2590 = vmatpush.msra.mxu0 %v2573
    %2591 = vmatpush.msra.mxu0 %v2572
    %2592 = vmatmul.f32.gmra.mxu0 %v372
    %v2593 = vpop.f32.mrf.mxu0
    %v2594 = vadd.f32 %v334, %v2593
    %2595 = vmatmul.f32.gmra.mxu0 %v375
    %v2596 = vpop.f32.mrf.mxu0
    %v2597 = vadd.f32 %v339, %v2596
    %2598 = vmatmul.f32.gmra.mxu0 %v378
    %v2599 = vpop.f32.mrf.mxu0
    %v2600 = vadd.f32 %v344, %v2599
    %2601 = vmatmul.f32.gmra.mxu0 %v381
    %v2602 = vpop.f32.mrf.mxu0
    %v2603 = vadd.f32 %v349, %v2602
    %2604 = vdwg.mxu0
    %v2605 = vmax.f32 %v2594, 0.0
    %v2606 = vmax.f32 %v2597, 0.0
    %v2607 = vmax.f32 %v2600, 0.0
    %v2608 = vmax.f32 %v2603, 0.0
    %2609 = vmatpush.msra.mxu0 0.0
    %2610 = vmatpush.msra.mxu0 0.0
    %2611 = vmatpush.msra.mxu0 0.0
    %2612 = vmatpush.msra.mxu0 0.0
    %2613 = vmatpush.msra.mxu0 0.0
    %2614 = vmatpush.msra.mxu0 0.0
    %2615 = vmatpush.msra.mxu0 0.0
    %2616 = vmatpush.msra.mxu0 0.0
    %2617 = vmatpush.msra.mxu0 0.0
    %2618 = vmatpush.msra.mxu0 0.0
    %2619 = vmatpush.msra.mxu0 0.0
    %2620 = vmatpush.msra.mxu0 0.0
    %2621 = vmatpush.msra.mxu0 %v2608
    %2622 = vmatpush.msra.mxu0 %v2607
    %2623 = vmatpush.msra.mxu0 %v2606
    %2624 = vmatpush.msra.mxu0 %v2605
    %2625 = vmatmul.f32.gmra.mxu0 %v417
    %v2626 = vpop.f32.mrf.mxu0
    %v2627 = vadd.f32 %v357, %v2626
    %2628 = vdwg.mxu0
    %vm2629 = vcmp.gt.f32.partialorder %v2627, 0.0
    %v2630 = vmul.f32 %v2627, 1.442695
    %v2631 = vpow.pop %v2630
    %v2632 = vsub.f32 %v2631, 1.0
    %v2633 = vsel %vm2629, %v2627, %v2632
    %v2634 = vadd.f32 %v2633, 1.0
    %v2635 = vmul.f32 %v2634, 0.009586575
    %v2636 = vadd.f32 %v2563, %v2635
    %v2637 = vmul.f32 %v323, 0.0024076402
    %v2638 = vmul.f32 %v324, 0.0024076402
    %v2639 = vmul.f32 %v325, 0.0024076402
    %v2640 = vmul.f32 %v326, 0.0024076402
    %v2641 = vadd.f32 %v2637, %v186
    %v2642 = vadd.f32 %v2638, %v187
    %v2643 = vadd.f32 %v2639, %v188
    %v2644 = vadd.f32 %v2640, %v189
    %v2645 = vmax.f32 %v2641, 0.0
    %v2646 = vmax.f32 %v2642, 0.0
    %v2647 = vmax.f32 %v2643, 0.0
    %v2648 = vmax.f32 %v2644, 0.0
    %2649 = vmatpush.msra.mxu0 0.0
    %2650 = vmatpush.msra.mxu0 0.0
    %2651 = vmatpush.msra.mxu0 0.0
    %2652 = vmatpush.msra.mxu0 0.0
    %2653 = vmatpush.msra.mxu0 0.0
    %2654 = vmatpush.msra.mxu0 0.0
    %2655 = vmatpush.msra.mxu0 0.0
    %2656 = vmatpush.msra.mxu0 0.0
    %2657 = vmatpush.msra.mxu0 0.0
    %2658 = vmatpush.msra.mxu0 0.0
    %2659 = vmatpush.msra.mxu0 0.0
    %2660 = vmatpush.msra.mxu0 0.0
    %2661 = vmatpush.msra.mxu0 %v2648
    %2662 = vmatpush.msra.mxu0 %v2647
    %2663 = vmatpush.msra.mxu0 %v2646
    %2664 = vmatpush.msra.mxu0 %v2645
    %2665 = vmatmul.f32.gmra.mxu0 %v372
    %v2666 = vpop.f32.mrf.mxu0
    %v2667 = vadd.f32 %v334, %v2666
    %2668 = vmatmul.f32.gmra.mxu0 %v375
    %v2669 = vpop.f32.mrf.mxu0
    %v2670 = vadd.f32 %v339, %v2669
    %2671 = vmatmul.f32.gmra.mxu0 %v378
    %v2672 = vpop.f32.mrf.mxu0
    %v2673 = vadd.f32 %v344, %v2672
    %2674 = vmatmul.f32.gmra.mxu0 %v381
    %v2675 = vpop.f32.mrf.mxu0
    %v2676 = vadd.f32 %v349, %v2675
    %2677 = vdwg.mxu0
    %v2678 = vmax.f32 %v2667, 0.0
    %v2679 = vmax.f32 %v2670, 0.0
    %v2680 = vmax.f32 %v2673, 0.0
    %v2681 = vmax.f32 %v2676, 0.0
    %2682 = vmatpush.msra.mxu0 0.0
    %2683 = vmatpush.msra.mxu0 0.0
    %2684 = vmatpush.msra.mxu0 0.0
    %2685 = vmatpush.msra.mxu0 0.0
    %2686 = vmatpush.msra.mxu0 0.0
    %2687 = vmatpush.msra.mxu0 0.0
    %2688 = vmatpush.msra.mxu0 0.0
    %2689 = vmatpush.msra.mxu0 0.0
    %2690 = vmatpush.msra.mxu0 0.0
    %2691 = vmatpush.msra.mxu0 0.0
    %2692 = vmatpush.msra.mxu0 0.0
    %2693 = vmatpush.msra.mxu0 0.0
    %2694 = vmatpush.msra.mxu0 %v2681
    %2695 = vmatpush.msra.mxu0 %v2680
    %2696 = vmatpush.msra.mxu0 %v2679
    %2697 = vmatpush.msra.mxu0 %v2678
    %2698 = vmatmul.f32.gmra.mxu0 %v417
    %v2699 = vpop.f32.mrf.mxu0
    %v2700 = vadd.f32 %v357, %v2699
    %2701 = vdwg.mxu0
    %vm2702 = vcmp.gt.f32.partialorder %v2700, 0.0
    %v2703 = vmul.f32 %v2700, 1.442695
    %v2704 = vpow.pop %v2703
    %v2705 = vsub.f32 %v2704, 1.0
    %v2706 = vsel %vm2702, %v2700, %v2705
    %v2707 = vadd.f32 %v2706, 1.0
    %v2708 = vmul.f32 %v2707, 0.0047271466
    %v2709 = vadd.f32 %v2636, %v2708
    %v2710 = vmul.f32 %v323, 0.0
    %v2711 = vmul.f32 %v324, 0.0
    %v2712 = vmul.f32 %v325, 0.0
    %v2713 = vmul.f32 %v326, 0.0
    %v2714 = vadd.f32 %v2710, %v186
    %v2715 = vadd.f32 %v2711, %v187
    %v2716 = vadd.f32 %v2712, %v188
    %v2717 = vadd.f32 %v2713, %v189
    %v2718 = vmax.f32 %v2714, 0.0
    %v2719 = vmax.f32 %v2715, 0.0
    %v2720 = vmax.f32 %v2716, 0.0
    %v2721 = vmax.f32 %v2717, 0.0
    %2722 = vmatpush.msra.mxu0 0.0
    %2723 = vmatpush.msra.mxu0 0.0
    %2724 = vmatpush.msra.mxu0 0.0
    %2725 = vmatpush.msra.mxu0 0.0
    %2726 = vmatpush.msra.mxu0 0.0
    %2727 = vmatpush.msra.mxu0 0.0
    %2728 = vmatpush.msra.mxu0 0.0
    %2729 = vmatpush.msra.mxu0 0.0
    %2730 = vmatpush.msra.mxu0 0.0
    %2731 = vmatpush.msra.mxu0 0.0
    %2732 = vmatpush.msra.mxu0 0.0
    %2733 = vmatpush.msra.mxu0 0.0
    %2734 = vmatpush.msra.mxu0 %v2721
    %2735 = vmatpush.msra.mxu0 %v2720
    %2736 = vmatpush.msra.mxu0 %v2719
    %2737 = vmatpush.msra.mxu0 %v2718
    %2738 = vmatmul.f32.gmra.mxu0 %v372
    %v2739 = vpop.f32.mrf.mxu0
    %v2740 = vadd.f32 %v334, %v2739
    %2741 = vmatmul.f32.gmra.mxu0 %v375
    %v2742 = vpop.f32.mrf.mxu0
    %v2743 = vadd.f32 %v339, %v2742
    %2744 = vmatmul.f32.gmra.mxu0 %v378
    %v2745 = vpop.f32.mrf.mxu0
    %v2746 = vadd.f32 %v344, %v2745
    %2747 = vmatmul.f32.gmra.mxu0 %v381
    %v2748 = vpop.f32.mrf.mxu0
    %v2749 = vadd.f32 %v349, %v2748
    %2750 = vdwg.mxu0
    %v2751 = vmax.f32 %v2740, 0.0
    %v2752 = vmax.f32 %v2743, 0.0
    %v2753 = vmax.f32 %v2746, 0.0
    %v2754 = vmax.f32 %v2749, 0.0
    %2755 = vmatpush.msra.mxu0 0.0
    %2756 = vmatpush.msra.mxu0 0.0
    %2757 = vmatpush.msra.mxu0 0.0
    %2758 = vmatpush.msra.mxu0 0.0
    %2759 = vmatpush.msra.mxu0 0.0
    %2760 = vmatpush.msra.mxu0 0.0
    %2761 = vmatpush.msra.mxu0 0.0
    %2762 = vmatpush.msra.mxu0 0.0
    %2763 = vmatpush.msra.mxu0 0.0
    %2764 = vmatpush.msra.mxu0 0.0
    %2765 = vmatpush.msra.mxu0 0.0
    %2766 = vmatpush.msra.mxu0 0.0
    %2767 = vmatpush.msra.mxu0 %v2754
    %2768 = vmatpush.msra.mxu0 %v2753
    %2769 = vmatpush.msra.mxu0 %v2752
    %2770 = vmatpush.msra.mxu0 %v2751
    %2771 = vmatmul.f32.gmra.mxu0 %v417
    %v2772 = vpop.f32.mrf.mxu0
    %v2773 = vadd.f32 %v357, %v2772
    %2774 = vdwg.mxu0
    %vm2775 = vcmp.gt.f32.partialorder %v2773, 0.0
    %v2776 = vmul.f32 %v2773, 1.442695
    %v2777 = vpow.pop %v2776
    %v2778 = vsub.f32 %v2777, 1.0
    %v2779 = vsel %vm2775, %v2773, %v2778
    %v2780 = vadd.f32 %v2779, 1.0
    %v2781 = vmul.f32 %v2780, 0.00047348486
    %v2782 = vadd.f32 %v2709, %v2781
    %v2783 = vmul.f32 %v2782, %v50
    %v2785 = vrot.slane %v2783, 7
    %v2787 = vmul.f32 %v295, %v2785
    %v2789 = vrot.slane %v292, 7
    %v2791 = vadd.f32 %v2787, %v2789
    %2792 = vst [vmem:[#allocation3 - $0x1] sm:$0x2] %v2791
    // Predicated region
    $region58: #{tpu_custom_call.1} parent=1 // pred_check
      _
    $region59: #{tpu_custom_call.1} parent=1 // pred_check_branch
      %2794 = sbr.rel (0) target = $region61
    $region60: #{tpu_custom_call.1} parent=1 // pred_region
      %2796 = vsyncadd [#allocation4], 0
      %s2798 = sshll.u32 [#allocation3], 4
      %s2799 = int_to_ptr.vmem [resolvable:$true] %s2798
      %s2800 = sshll.u32 %s14, 4
      %s2801 = int_to_ptr.hbm [resolvable:$true] %s2800
      %2803 = dma.vmem_to_hbm [thread:$0]  %s2799, 16, %s2801, [#allocation4]
    $region61: #{tpu_custom_call.1} parent=1 // pred_fallthru
      _
    // Predicated region
    $region62: #{tpu_custom_call.1} parent=1 // pred_check
      _
    $region63: #{tpu_custom_call.1} parent=1 // pred_check_branch
      %2805 = sbr.rel (0) target = $region65
    $region64: #{tpu_custom_call.1} parent=1 // pred_region
      %2807 = dma.done [#allocation4], 16
    $region65: #{tpu_custom_call.1} parent=1 // pred_fallthru
      _
    %2808 = vsyncpa [#allocation4], 1

</llo_original>
